<compile_context>
chip_gen: v7x
topology: tpu7x:2x2x1
jax: 0.10.0
libtpu: 0.0.40
codegen_flags: <defaults>
</compile_context>

<pallas_src>
import math
import functools

import jax
import jax.numpy as jnp
from jax.experimental import pallas as pl
from jax.experimental.pallas import tpu as pltpu

EPS = 1.1920929e-07            # torch.finfo(torch.float32).eps (RMSNorm eps=None)
COMPUTE_DTYPE = jnp.bfloat16   # MXU operand dtype (accumulation stays f32)
NEG_BIG = -1e30                # additive causal-mask bias (robust vs. -inf)


def _rmsnorm(x, g):
    ms = jnp.mean(x * x, axis=-1, keepdims=True)
    return x * jax.lax.rsqrt(ms + EPS) * g


def block_kernel(x_ref, g1_ref, wqkv_ref, wproj_ref, cos_ref, sin_ref,
                 g2_ref, w1_ref, w3_ref, w2_ref, o_ref,
                 *, n_head, head_dim):
    cdt = COMPUTE_DTYPE
    x = x_ref[0]                       # (T, C) for the current batch element, f32
    T, C = x.shape
    hd = head_dim
    d2 = hd // 2
    scale = 1.0 / math.sqrt(hd)

    # ---------------- ln_1 + causal self-attention ----------------
    h = _rmsnorm(x, g1_ref[...]).astype(cdt)                              # (T, C)
    qkv = jnp.dot(h, wqkv_ref[...], preferred_element_type=jnp.float32)   # (T, 3C)

    # Head-batched views (n_head, T, hd); fold 1/sqrt(hd) into q (linear op,
    # commutes with the rotary rotation).
    q3 = jnp.transpose((qkv[:, :C] * scale).reshape(T, n_head, hd), (1, 0, 2))
    k3 = jnp.transpose(qkv[:, C:2 * C].reshape(T, n_head, hd), (1, 0, 2))
    v3 = jnp.transpose(qkv[:, 2 * C:].reshape(T, n_head, hd), (1, 0, 2))

    # Rotary — cos/sin indexed by head (reference quirk), one vectorized pass
    # over all heads (no per-head slicing).
    cos3 = cos_ref[...][:, None, :]     # (n_head, 1, hd//2), broadcast over T
    sin3 = sin_ref[...][:, None, :]

    def rot(z):                         # z: (n_head, T, hd), f32
        z1 = z[..., :d2]
        z2 = z[..., d2:]
        return jnp.concatenate([z1 * cos3 + z2 * sin3,
                                z2 * cos3 - z1 * sin3], axis=-1)

    qh = rot(q3).astype(cdt)
    kh = rot(k3).astype(cdt)
    vh = v3.astype(cdt)

    # Scores for all heads in one batched MXU call; contraction on the last
    # (hd) dim of both operands — no transposed K is materialized.
    s = jnp.einsum('hqd,hkd->hqk', qh, kh,
                   preferred_element_type=jnp.float32)                   # (nh, T, T)

    row = jax.lax.broadcasted_iota(jnp.int32, (T, T), 0)
    col = jax.lax.broadcasted_iota(jnp.int32, (T, T), 1)
    bias = jnp.where(col <= row, 0.0, NEG_BIG).astype(jnp.float32)       # (T, T)
    s = s + bias[None]

    s = s - jnp.max(s, axis=-1, keepdims=True)
    e = jnp.exp(s)
    p = e * pl.reciprocal(jnp.sum(e, axis=-1, keepdims=True), approx=True)

    yh = jnp.einsum('hqk,hkd->hqd', p.astype(cdt), vh,
                    preferred_element_type=jnp.float32)                  # (nh, T, hd)
    y = jnp.transpose(yh, (1, 0, 2)).reshape(T, C).astype(cdt)           # (T, C)

    attn_out = jnp.dot(y, wproj_ref[...], preferred_element_type=jnp.float32)
    x1 = x + attn_out

    # ---------------- ln_2 + SwiGLU feed-forward ----------------
    h2 = _rmsnorm(x1, g2_ref[...]).astype(cdt)
    a = jnp.dot(h2, w1_ref[...], preferred_element_type=jnp.float32)     # (T, H)
    b = jnp.dot(h2, w3_ref[...], preferred_element_type=jnp.float32)     # (T, H)
    sact = (jax.nn.silu(a) * b).astype(cdt)
    ffd = jnp.dot(sact, w2_ref[...], preferred_element_type=jnp.float32) # (T, C)

    o_ref[0] = (x1 + ffd).astype(o_ref.dtype)


def block_forward(x, params, n_head):
    B, T, C = x.shape
    hd = C // n_head
    H = params["w1"].shape[1]

    kernel = functools.partial(block_kernel, n_head=n_head, head_dim=hd)

    def resident(shape):
        # full-array block, resident in VMEM across the batch grid
        return pl.BlockSpec(shape, lambda b: (0,) * len(shape))

    # TODO(synk): for long sequences / large models, tile T with a flash-style
    # online softmax (q-tile grid axis + KV loop) and tile the FFN hidden dim;
    # at these sizes the full (nh, T, T) scores and bf16 weights fit VMEM.
    return pl.pallas_call(
        kernel,
        out_shape=jax.ShapeDtypeStruct((B, T, C), jnp.float32),
        grid=(B,),
        in_specs=[
            pl.BlockSpec((1, T, C), lambda b: (b, 0, 0)),   # x (per-batch tile)
            resident((1, C)),                               # g1 (ln_1 weight)
            resident((C, 3 * C)),                           # Wqkv^T  (bf16)
            resident((C, C)),                               # Wproj^T (bf16)
            resident((n_head, hd // 2)),                    # cos (indexed by head)
            resident((n_head, hd // 2)),                    # sin
            resident((1, C)),                               # g2 (ln_2 weight)
            resident((C, H)),                               # W1^T (bf16)
            resident((C, H)),                               # W3^T (bf16)
            resident((H, C)),                               # W2^T (bf16)
        ],
        out_specs=pl.BlockSpec((1, T, C), lambda b: (b, 0, 0)),
        compiler_params=pltpu.CompilerParams(
            dimension_semantics=("parallel",),
            vmem_limit_bytes=32 * 1024 * 1024),
    )(x, params["g1"], params["wqkv"], params["wproj"], params["cos"],
      params["sin"], params["g2"], params["w1"], params["w3"], params["w2"])


# ---------------- pure-JAX reference (mirrors the kernel's bf16 matmul path) ----------------
def block_ref(x, params, n_head):
    cdt = COMPUTE_DTYPE
    B, T, C = x.shape
    hd = C // n_head
    d2 = hd // 2
    scale = 1.0 / math.sqrt(hd)

    def rms(z, g):
        return z * jax.lax.rsqrt(jnp.mean(z * z, -1, keepdims=True) + EPS) * g

    def mm(a, b):
        return jnp.dot(a.astype(cdt), b.astype(cdt),
                       preferred_element_type=jnp.float32)

    h = rms(x, params["g1"])
    qkv = mm(h, params["wqkv"])
    q, k, v = jnp.split(qkv, 3, axis=-1)
    q = (q * scale).reshape(B, T, n_head, hd).transpose(0, 2, 1, 3)
    k = k.reshape(B, T, n_head, hd).transpose(0, 2, 1, 3)
    v = v.reshape(B, T, n_head, hd).transpose(0, 2, 1, 3)

    cos = params["cos"][None, :, None, :]
    sin = params["sin"][None, :, None, :]

    def rot(z):
        z1, z2 = z[..., :d2], z[..., d2:]
        return jnp.concatenate([z1 * cos + z2 * sin, z2 * cos - z1 * sin], -1)

    q, k = rot(q), rot(k)
    s = jnp.einsum('bhqd,bhkd->bhqk', q.astype(cdt), k.astype(cdt),
                   preferred_element_type=jnp.float32)
    mask = jnp.tril(jnp.ones((T, T), dtype=bool))
    s = s + jnp.where(mask, 0.0, NEG_BIG).astype(jnp.float32)
    p = jax.nn.softmax(s, axis=-1)
    y = jnp.einsum('bhqk,bhkd->bhqd', p.astype(cdt), v.astype(cdt),
                   preferred_element_type=jnp.float32)
    y = y.transpose(0, 2, 1, 3).reshape(B, T, C)
    x1 = x + mm(y, params["wproj"])

    h2 = rms(x1, params["g2"])
    ffd = mm(jax.nn.silu(mm(h2, params["w1"])) * mm(h2, params["w3"]), params["w2"])
    return x1 + ffd


def make_params(key, n_embed, n_head, base=10000):
    hd = n_embed // n_head
    hidden = int(2 * (4 * n_embed) / 3)
    ks = jax.random.split(key, 5)

    def init(k, shape):
        # weights stored bf16 (MXU operand dtype); accumulation stays f32
        return (0.02 * jax.random.normal(k, shape)).astype(COMPUTE_DTYPE)

    # Rotary tables; `seq_len` in the reference ends up being n_head (quirk).
    # TODO(synk): the PyTorch code computes base ** int64-arange (which overflows
    # for large exponents); we compute inv_freq with a float32 power instead.
    inv_freq = 1.0 / jnp.power(
        jnp.float32(base), jnp.arange(0, hd, 2, dtype=jnp.float32))
    t = jnp.arange(n_head, dtype=jnp.float32)
    freqs = jnp.outer(t, inv_freq)                      # (n_head, hd//2)

    return {
        "g1": jnp.ones((1, n_embed), jnp.float32),       # nn.RMSNorm init = ones
        "g2": jnp.ones((1, n_embed), jnp.float32),
        "wqkv": init(ks[0], (n_embed, 3 * n_embed)),     # c_attn.weight^T
        "wproj": init(ks[1], (n_embed, n_embed)),        # c_proj.weight^T
        "w1": init(ks[2], (n_embed, hidden)),            # ffd.w1.weight^T
        "w3": init(ks[3], (n_embed, hidden)),            # ffd.w3.weight^T
        "w2": init(ks[4], (hidden, n_embed)),            # ffd.w2.weight^T
        "cos": jnp.cos(freqs).astype(jnp.float32),
        "sin": jnp.sin(freqs).astype(jnp.float32),
    }


if __name__ == "__main__":
    # head_dim = 32, ffn hidden = 341; C = 128 keeps output stores lane-dense.
    B, T, n_embed, n_head = 2, 16, 128, 4

    key = jax.random.PRNGKey(0)
    k_x, k_p = jax.random.split(key)
    x = jax.random.normal(k_x, (B, T, n_embed), dtype=jnp.float32)
    params = make_params(k_p, n_embed, n_head)

    out = jax.jit(functools.partial(block_forward, n_head=n_head))(x, params)
    out = jax.block_until_ready(out)

    ref = block_ref(x, params, n_head)
    assert out.shape == (B, T, n_embed)
    max_err = float(jnp.max(jnp.abs(out - ref)))
    assert jnp.allclose(out, ref, atol=2e-3, rtol=2e-3), max_err

    print("KERNEL_OK")
</pallas_src>

<mosaic_0001>
module attributes {stable_mosaic.version = 11 : i64} {
  func.func @block_kernel(%arg0: i32, %arg1: memref<1x16x128xf32, #tpu.memory_space<vmem>>, %arg2: memref<1x128xf32, #tpu.memory_space<vmem>>, %arg3: memref<128x384xbf16, #tpu.memory_space<vmem>>, %arg4: memref<128x128xbf16, #tpu.memory_space<vmem>>, %arg5: memref<4x16xf32, #tpu.memory_space<vmem>>, %arg6: memref<4x16xf32, #tpu.memory_space<vmem>>, %arg7: memref<1x128xf32, #tpu.memory_space<vmem>>, %arg8: memref<128x341xbf16, #tpu.memory_space<vmem>>, %arg9: memref<128x341xbf16, #tpu.memory_space<vmem>>, %arg10: memref<341x128xbf16, #tpu.memory_space<vmem>>, %arg11: memref<1x16x128xf32, #tpu.memory_space<vmem>>) attributes {dimension_semantics = [#tpu.dimension_semantics<parallel>], iteration_bounds = array<i64: 2>, scalar_prefetch = 0 : i64, scratch_operands = 0 : i64, tpu.core_type = #tpu.core_type<tc>, window_params = [{transform_indices = @transform_0, window_bounds = array<i64: 1, 16, 128>}, {pipeline_mode = #tpu.pipeline_mode<synchronous>, transform_indices = @transform_1, window_bounds = array<i64: 1, 128>}, {pipeline_mode = #tpu.pipeline_mode<synchronous>, transform_indices = @transform_2, window_bounds = array<i64: 128, 384>}, {pipeline_mode = #tpu.pipeline_mode<synchronous>, transform_indices = @transform_3, window_bounds = array<i64: 128, 128>}, {pipeline_mode = #tpu.pipeline_mode<synchronous>, transform_indices = @transform_4, window_bounds = array<i64: 4, 16>}, {pipeline_mode = #tpu.pipeline_mode<synchronous>, transform_indices = @transform_5, window_bounds = array<i64: 4, 16>}, {pipeline_mode = #tpu.pipeline_mode<synchronous>, transform_indices = @transform_6, window_bounds = array<i64: 1, 128>}, {pipeline_mode = #tpu.pipeline_mode<synchronous>, transform_indices = @transform_7, window_bounds = array<i64: 128, 341>}, {pipeline_mode = #tpu.pipeline_mode<synchronous>, transform_indices = @transform_8, window_bounds = array<i64: 128, 341>}, {pipeline_mode = #tpu.pipeline_mode<synchronous>, transform_indices = @transform_9, window_bounds = array<i64: 341, 128>}, {transform_indices = @transform_10, window_bounds = array<i64: 1, 16, 128>}]} {
    %c0 = arith.constant 0 : index
    %c0_0 = arith.constant 0 : index
    %c0_1 = arith.constant 0 : index
    %0 = vector.load %arg1[%c0, %c0_0, %c0_1] : memref<1x16x128xf32, #tpu.memory_space<vmem>>, vector<1x16x128xf32>
    %1 = vector.shape_cast %0 : vector<1x16x128xf32> to vector<16x128xf32>
    %c0_2 = arith.constant 0 : index
    %c0_3 = arith.constant 0 : index
    %2 = vector.load %arg2[%c0_2, %c0_3] : memref<1x128xf32, #tpu.memory_space<vmem>>, vector<1x128xf32>
    %3 = arith.mulf %1, %1 : vector<16x128xf32>
    %cst = arith.constant dense<0.000000e+00> : vector<16xf32>
    %4 = vector.multi_reduction <add>, %3, %cst [1] : vector<16x128xf32> to vector<16xf32>
    %5 = vector.shape_cast %4 : vector<16xf32> to vector<16x1xf32>
    %cst_4 = arith.constant 1.280000e+02 : f32
    %6 = vector.broadcast %cst_4 : f32 to vector<16x1xf32>
    %7 = arith.divf %5, %6 : vector<16x1xf32>
    %cst_5 = arith.constant 1.1920929E-7 : f32
    %8 = vector.broadcast %cst_5 : f32 to vector<16x1xf32>
    %9 = arith.addf %7, %8 : vector<16x1xf32>
    %10 = math.rsqrt %9 : vector<16x1xf32>
    %11 = vector.broadcast %10 : vector<16x1xf32> to vector<16x128xf32>
    %12 = arith.mulf %1, %11 : vector<16x128xf32>
    %13 = vector.broadcast %2 : vector<1x128xf32> to vector<16x128xf32>
    %14 = arith.mulf %12, %13 : vector<16x128xf32>
    %15 = arith.truncf %14 : vector<16x128xf32> to vector<16x128xbf16>
    %c0_6 = arith.constant 0 : index
    %c0_7 = arith.constant 0 : index
    %16 = vector.load %arg3[%c0_6, %c0_7] : memref<128x384xbf16, #tpu.memory_space<vmem>>, vector<128x384xbf16>
    %cst_8 = arith.constant dense<0.000000e+00> : vector<16x384xf32>
    %17 = tpu.matmul %15, %16, %cst_8 {dimension_numbers = #tpu.dot_dimension_numbers<[1], [0], [0], [1], [0, 0, 1, 1], [], []>} : vector<16x128xbf16>, vector<128x384xbf16>, vector<16x384xf32> -> vector<16x384xf32>
    %18 = vector.extract_strided_slice %17 {offsets = [0, 0], sizes = [16, 128], strides = [1, 1]} : vector<16x384xf32> to vector<16x128xf32>
    %cst_9 = arith.constant 0.176776692 : f32
    %19 = vector.broadcast %cst_9 : f32 to vector<16x128xf32>
    %20 = arith.mulf %18, %19 : vector<16x128xf32>
    %21 = vector.shape_cast %20 : vector<16x128xf32> to vector<16x4x32xf32>
    %22 = tpu.transpose %21, [1, 0, 2] : vector<16x4x32xf32> -> vector<4x16x32xf32>
    %23 = vector.extract_strided_slice %17 {offsets = [0, 128], sizes = [16, 128], strides = [1, 1]} : vector<16x384xf32> to vector<16x128xf32>
    %24 = vector.shape_cast %23 : vector<16x128xf32> to vector<16x4x32xf32>
    %25 = tpu.transpose %24, [1, 0, 2] : vector<16x4x32xf32> -> vector<4x16x32xf32>
    %26 = vector.extract_strided_slice %17 {offsets = [0, 256], sizes = [16, 128], strides = [1, 1]} : vector<16x384xf32> to vector<16x128xf32>
    %27 = vector.shape_cast %26 : vector<16x128xf32> to vector<16x4x32xf32>
    %28 = tpu.transpose %27, [1, 0, 2] : vector<16x4x32xf32> -> vector<4x16x32xf32>
    %c0_10 = arith.constant 0 : index
    %c0_11 = arith.constant 0 : index
    %29 = vector.load %arg5[%c0_10, %c0_11] : memref<4x16xf32, #tpu.memory_space<vmem>>, vector<4x16xf32>
    %30 = vector.shape_cast %29 : vector<4x16xf32> to vector<4x1x16xf32>
    %c0_12 = arith.constant 0 : index
    %c0_13 = arith.constant 0 : index
    %31 = vector.load %arg6[%c0_12, %c0_13] : memref<4x16xf32, #tpu.memory_space<vmem>>, vector<4x16xf32>
    %32 = vector.shape_cast %31 : vector<4x16xf32> to vector<4x1x16xf32>
    %33 = vector.extract_strided_slice %22 {offsets = [0, 0, 0], sizes = [4, 16, 16], strides = [1, 1, 1]} : vector<4x16x32xf32> to vector<4x16x16xf32>
    %34 = vector.extract_strided_slice %22 {offsets = [0, 0, 16], sizes = [4, 16, 16], strides = [1, 1, 1]} : vector<4x16x32xf32> to vector<4x16x16xf32>
    %35 = vector.broadcast %30 : vector<4x1x16xf32> to vector<4x16x16xf32>
    %36 = arith.mulf %33, %35 : vector<4x16x16xf32>
    %37 = vector.broadcast %32 : vector<4x1x16xf32> to vector<4x16x16xf32>
    %38 = arith.mulf %34, %37 : vector<4x16x16xf32>
    %39 = arith.addf %36, %38 : vector<4x16x16xf32>
    %40 = vector.broadcast %30 : vector<4x1x16xf32> to vector<4x16x16xf32>
    %41 = arith.mulf %34, %40 : vector<4x16x16xf32>
    %42 = vector.broadcast %32 : vector<4x1x16xf32> to vector<4x16x16xf32>
    %43 = arith.mulf %33, %42 : vector<4x16x16xf32>
    %44 = arith.subf %41, %43 : vector<4x16x16xf32>
    %45 = tpu.concatenate %39, %44 in 2 : vector<4x16x16xf32>, vector<4x16x16xf32> -> vector<4x16x32xf32>
    %46 = arith.truncf %45 : vector<4x16x32xf32> to vector<4x16x32xbf16>
    %47 = vector.extract_strided_slice %25 {offsets = [0, 0, 0], sizes = [4, 16, 16], strides = [1, 1, 1]} : vector<4x16x32xf32> to vector<4x16x16xf32>
    %48 = vector.extract_strided_slice %25 {offsets = [0, 0, 16], sizes = [4, 16, 16], strides = [1, 1, 1]} : vector<4x16x32xf32> to vector<4x16x16xf32>
    %49 = vector.broadcast %30 : vector<4x1x16xf32> to vector<4x16x16xf32>
    %50 = arith.mulf %47, %49 : vector<4x16x16xf32>
    %51 = vector.broadcast %32 : vector<4x1x16xf32> to vector<4x16x16xf32>
    %52 = arith.mulf %48, %51 : vector<4x16x16xf32>
    %53 = arith.addf %50, %52 : vector<4x16x16xf32>
    %54 = vector.broadcast %30 : vector<4x1x16xf32> to vector<4x16x16xf32>
    %55 = arith.mulf %48, %54 : vector<4x16x16xf32>
    %56 = vector.broadcast %32 : vector<4x1x16xf32> to vector<4x16x16xf32>
    %57 = arith.mulf %47, %56 : vector<4x16x16xf32>
    %58 = arith.subf %55, %57 : vector<4x16x16xf32>
    %59 = tpu.concatenate %53, %58 in 2 : vector<4x16x16xf32>, vector<4x16x16xf32> -> vector<4x16x32xf32>
    %60 = arith.truncf %59 : vector<4x16x32xf32> to vector<4x16x32xbf16>
    %61 = arith.truncf %28 : vector<4x16x32xf32> to vector<4x16x32xbf16>
    "tpu.trace_start"() <{level = 10 : i32, message = "hqd,hkd->hqk"}> : () -> ()
    %cst_14 = arith.constant dense<0.000000e+00> : vector<4x16x16xf32>
    %62 = tpu.matmul %46, %60, %cst_14 {dimension_numbers = #tpu.dot_dimension_numbers<[2], [2], [1], [1], [0, 0, 0, 1, 1, 1], [0], [0]>} : vector<4x16x32xbf16>, vector<4x16x32xbf16>, vector<4x16x16xf32> -> vector<4x16x16xf32>
    "tpu.trace_stop"() : () -> ()
    %63 = tpu.iota {dimensions = array<i32: 0>} : vector<16x16xi32>
    %64 = tpu.iota {dimensions = array<i32: 1>} : vector<16x16xi32>
    %65 = arith.cmpi sle, %64, %63 : vector<16x16xi32>
    %cst_15 = arith.constant 0.000000e+00 : f32
    %cst_16 = arith.constant -1.000000e+30 : f32
    %66 = vector.broadcast %cst_15 : f32 to vector<16x16xf32>
    %67 = vector.broadcast %cst_16 : f32 to vector<16x16xf32>
    %68 = arith.select %65, %66, %67 : vector<16x16xi1>, vector<16x16xf32>
    %69 = vector.shape_cast %68 : vector<16x16xf32> to vector<1x16x16xf32>
    %70 = vector.broadcast %69 : vector<1x16x16xf32> to vector<4x16x16xf32>
    %71 = arith.addf %62, %70 : vector<4x16x16xf32>
    %cst_17 = arith.constant dense<0xFF800000> : vector<4x16xf32>
    %72 = vector.multi_reduction <maximumf>, %71, %cst_17 [2] : vector<4x16x16xf32> to vector<4x16xf32>
    %73 = vector.shape_cast %72 : vector<4x16xf32> to vector<4x16x1xf32>
    %74 = vector.broadcast %73 : vector<4x16x1xf32> to vector<4x16x16xf32>
    %75 = arith.subf %71, %74 : vector<4x16x16xf32>
    %76 = math.exp %75 : vector<4x16x16xf32>
    %cst_18 = arith.constant dense<0.000000e+00> : vector<4x16xf32>
    %77 = vector.multi_reduction <add>, %76, %cst_18 [2] : vector<4x16x16xf32> to vector<4x16xf32>
    %78 = vector.shape_cast %77 : vector<4x16xf32> to vector<4x16x1xf32>
    %79 = tpu.reciprocal %78 {approx = true} : vector<4x16x1xf32> -> vector<4x16x1xf32>
    %80 = vector.broadcast %79 : vector<4x16x1xf32> to vector<4x16x16xf32>
    %81 = arith.mulf %76, %80 : vector<4x16x16xf32>
    %82 = arith.truncf %81 : vector<4x16x16xf32> to vector<4x16x16xbf16>
    "tpu.trace_start"() <{level = 10 : i32, message = "hqk,hkd->hqd"}> : () -> ()
    %cst_19 = arith.constant dense<0.000000e+00> : vector<4x16x32xf32>
    %83 = tpu.matmul %82, %61, %cst_19 {dimension_numbers = #tpu.dot_dimension_numbers<[2], [1], [1], [2], [0, 0, 0, 1, 1, 2], [0], [0]>} : vector<4x16x16xbf16>, vector<4x16x32xbf16>, vector<4x16x32xf32> -> vector<4x16x32xf32>
    "tpu.trace_stop"() : () -> ()
    %84 = tpu.transpose %83, [1, 0, 2] : vector<4x16x32xf32> -> vector<16x4x32xf32>
    %85 = vector.shape_cast %84 : vector<16x4x32xf32> to vector<16x128xf32>
    %86 = arith.truncf %85 : vector<16x128xf32> to vector<16x128xbf16>
    %c0_20 = arith.constant 0 : index
    %c0_21 = arith.constant 0 : index
    %87 = vector.load %arg4[%c0_20, %c0_21] : memref<128x128xbf16, #tpu.memory_space<vmem>>, vector<128x128xbf16>
    %cst_22 = arith.constant dense<0.000000e+00> : vector<16x128xf32>
    %88 = tpu.matmul %86, %87, %cst_22 {dimension_numbers = #tpu.dot_dimension_numbers<[1], [0], [0], [1], [0, 0, 1, 1], [], []>} : vector<16x128xbf16>, vector<128x128xbf16>, vector<16x128xf32> -> vector<16x128xf32>
    %89 = arith.addf %1, %88 : vector<16x128xf32>
    %c0_23 = arith.constant 0 : index
    %c0_24 = arith.constant 0 : index
    %90 = vector.load %arg7[%c0_23, %c0_24] : memref<1x128xf32, #tpu.memory_space<vmem>>, vector<1x128xf32>
    %91 = arith.mulf %89, %89 : vector<16x128xf32>
    %cst_25 = arith.constant dense<0.000000e+00> : vector<16xf32>
    %92 = vector.multi_reduction <add>, %91, %cst_25 [1] : vector<16x128xf32> to vector<16xf32>
    %93 = vector.shape_cast %92 : vector<16xf32> to vector<16x1xf32>
    %cst_26 = arith.constant 1.280000e+02 : f32
    %94 = vector.broadcast %cst_26 : f32 to vector<16x1xf32>
    %95 = arith.divf %93, %94 : vector<16x1xf32>
    %cst_27 = arith.constant 1.1920929E-7 : f32
    %96 = vector.broadcast %cst_27 : f32 to vector<16x1xf32>
    %97 = arith.addf %95, %96 : vector<16x1xf32>
    %98 = math.rsqrt %97 : vector<16x1xf32>
    %99 = vector.broadcast %98 : vector<16x1xf32> to vector<16x128xf32>
    %100 = arith.mulf %89, %99 : vector<16x128xf32>
    %101 = vector.broadcast %90 : vector<1x128xf32> to vector<16x128xf32>
    %102 = arith.mulf %100, %101 : vector<16x128xf32>
    %103 = arith.truncf %102 : vector<16x128xf32> to vector<16x128xbf16>
    %c0_28 = arith.constant 0 : index
    %c0_29 = arith.constant 0 : index
    %104 = vector.load %arg8[%c0_28, %c0_29] : memref<128x341xbf16, #tpu.memory_space<vmem>>, vector<128x341xbf16>
    %cst_30 = arith.constant dense<0.000000e+00> : vector<16x341xf32>
    %105 = tpu.matmul %103, %104, %cst_30 {dimension_numbers = #tpu.dot_dimension_numbers<[1], [0], [0], [1], [0, 0, 1, 1], [], []>} : vector<16x128xbf16>, vector<128x341xbf16>, vector<16x341xf32> -> vector<16x341xf32>
    %c0_31 = arith.constant 0 : index
    %c0_32 = arith.constant 0 : index
    %106 = vector.load %arg9[%c0_31, %c0_32] : memref<128x341xbf16, #tpu.memory_space<vmem>>, vector<128x341xbf16>
    %cst_33 = arith.constant dense<0.000000e+00> : vector<16x341xf32>
    %107 = tpu.matmul %103, %106, %cst_33 {dimension_numbers = #tpu.dot_dimension_numbers<[1], [0], [0], [1], [0, 0, 1, 1], [], []>} : vector<16x128xbf16>, vector<128x341xbf16>, vector<16x341xf32> -> vector<16x341xf32>
    %108 = arith.negf %105 : vector<16x341xf32>
    %109 = math.exp %108 : vector<16x341xf32>
    %cst_34 = arith.constant 1.000000e+00 : f32
    %110 = vector.broadcast %cst_34 : f32 to vector<16x341xf32>
    %111 = arith.addf %110, %109 : vector<16x341xf32>
    %112 = arith.divf %110, %111 : vector<16x341xf32>
    %113 = arith.mulf %105, %112 : vector<16x341xf32>
    %114 = arith.mulf %113, %107 : vector<16x341xf32>
    %115 = arith.truncf %114 : vector<16x341xf32> to vector<16x341xbf16>
    %c0_35 = arith.constant 0 : index
    %c0_36 = arith.constant 0 : index
    %116 = vector.load %arg10[%c0_35, %c0_36] : memref<341x128xbf16, #tpu.memory_space<vmem>>, vector<341x128xbf16>
    %cst_37 = arith.constant dense<0.000000e+00> : vector<16x128xf32>
    %117 = tpu.matmul %115, %116, %cst_37 {dimension_numbers = #tpu.dot_dimension_numbers<[1], [0], [0], [1], [0, 0, 1, 1], [], []>} : vector<16x341xbf16>, vector<341x128xbf16>, vector<16x128xf32> -> vector<16x128xf32>
    %118 = arith.addf %89, %117 : vector<16x128xf32>
    %c0_38 = arith.constant 0 : index
    %c0_39 = arith.constant 0 : index
    %c0_40 = arith.constant 0 : index
    %119 = vector.load %arg11[%c0_38, %c0_39, %c0_40] : memref<1x16x128xf32, #tpu.memory_space<vmem>>, vector<1x16x128xf32>
    %120 = vector.shape_cast %119 : vector<1x16x128xf32> to vector<16x128xf32>
    %121 = vector.shape_cast %118 : vector<16x128xf32> to vector<1x16x128xf32>
    tpu.vector_store %arg11[%c0_38, %c0_39, %c0_40], %121 {strides = array<i32>} : memref<1x16x128xf32, #tpu.memory_space<vmem>>, vector<1x16x128xf32>,
    return
  }
  func.func @transform_0(%arg0: i32) -> (i32, i32, i32) {
    %c0_i32 = arith.constant 0 : i32
    %c0_i32_0 = arith.constant 0 : i32
    %c0_i32_1 = arith.constant 0 : i32
    return %arg0, %c0_i32, %c0_i32_0 : i32, i32, i32
  }
  func.func @transform_1(%arg0: i32) -> (i32, i32) {
    %c0_i32 = arith.constant 0 : i32
    %c0_i32_0 = arith.constant 0 : i32
    %c0_i32_1 = arith.constant 0 : i32
    return %c0_i32, %c0_i32_0 : i32, i32
  }
  func.func @transform_2(%arg0: i32) -> (i32, i32) {
    %c0_i32 = arith.constant 0 : i32
    %c0_i32_0 = arith.constant 0 : i32
    %c0_i32_1 = arith.constant 0 : i32
    return %c0_i32, %c0_i32_0 : i32, i32
  }
  func.func @transform_3(%arg0: i32) -> (i32, i32) {
    %c0_i32 = arith.constant 0 : i32
    %c0_i32_0 = arith.constant 0 : i32
    %c0_i32_1 = arith.constant 0 : i32
    return %c0_i32, %c0_i32_0 : i32, i32
  }
  func.func @transform_4(%arg0: i32) -> (i32, i32) {
    %c0_i32 = arith.constant 0 : i32
    %c0_i32_0 = arith.constant 0 : i32
    %c0_i32_1 = arith.constant 0 : i32
    return %c0_i32, %c0_i32_0 : i32, i32
  }
  func.func @transform_5(%arg0: i32) -> (i32, i32) {
    %c0_i32 = arith.constant 0 : i32
    %c0_i32_0 = arith.constant 0 : i32
    %c0_i32_1 = arith.constant 0 : i32
    return %c0_i32, %c0_i32_0 : i32, i32
  }
  func.func @transform_6(%arg0: i32) -> (i32, i32) {
    %c0_i32 = arith.constant 0 : i32
    %c0_i32_0 = arith.constant 0 : i32
    %c0_i32_1 = arith.constant 0 : i32
    return %c0_i32, %c0_i32_0 : i32, i32
  }
  func.func @transform_7(%arg0: i32) -> (i32, i32) {
    %c0_i32 = arith.constant 0 : i32
    %c0_i32_0 = arith.constant 0 : i32
    %c0_i32_1 = arith.constant 0 : i32
    return %c0_i32, %c0_i32_0 : i32, i32
  }
  func.func @transform_8(%arg0: i32) -> (i32, i32) {
    %c0_i32 = arith.constant 0 : i32
    %c0_i32_0 = arith.constant 0 : i32
    %c0_i32_1 = arith.constant 0 : i32
    return %c0_i32, %c0_i32_0 : i32, i32
  }
  func.func @transform_9(%arg0: i32) -> (i32, i32) {
    %c0_i32 = arith.constant 0 : i32
    %c0_i32_0 = arith.constant 0 : i32
    %c0_i32_1 = arith.constant 0 : i32
    return %c0_i32, %c0_i32_0 : i32, i32
  }
  func.func @transform_10(%arg0: i32) -> (i32, i32, i32) {
    %c0_i32 = arith.constant 0 : i32
    %c0_i32_0 = arith.constant 0 : i32
    %c0_i32_1 = arith.constant 0 : i32
    return %arg0, %c0_i32, %c0_i32_0 : i32, i32, i32
  }
}

</mosaic_0001>

<llo_original>
// kernel: block_forward.1
$region0: #{block_forward.1}
  #allocation0 [shape = 'u32[]', space=smem, size = 0x4, offset = 0x4, fixed_abs, tag = 'smem constant byte address 0x4 - core index']
  #allocation1 [shape = 'u32[144,128]{1,0:T(1,128)}', space=vmem, size = 0x12000, scoped, tag = 'internal scratch']
  %s0 = inlined_call_operand.vmem [shape: f32[2,16,128], index: 0, kind: input, shape index: {}]
  %s1 = inlined_call_operand.vmem [shape: f32[1,128], index: 1, kind: input, shape index: {}]
  %s2 = inlined_call_operand.vmem [shape: bf16[128,384], index: 2, kind: input, shape index: {}]
  %s3 = inlined_call_operand.vmem [shape: bf16[128,128], index: 3, kind: input, shape index: {}]
  %s4 = inlined_call_operand.vmem [shape: f32[4,16], index: 4, kind: input, shape index: {}]
  %s5 = inlined_call_operand.vmem [shape: f32[4,16], index: 5, kind: input, shape index: {}]
  %s6 = inlined_call_operand.vmem [shape: f32[1,128], index: 6, kind: input, shape index: {}]
  %s7 = inlined_call_operand.vmem [shape: bf16[128,341], index: 7, kind: input, shape index: {}]
  %s8 = inlined_call_operand.vmem [shape: bf16[128,341], index: 8, kind: input, shape index: {}]
  %s9 = inlined_call_operand.vmem [shape: bf16[341,128], index: 9, kind: input, shape index: {}]
  %s10 = inlined_call_operand.hbm [shape: f32[2,16,128], index: 10, kind: output, shape index: {}]
  %s11 = sld [smem:[#allocation0]]
  $region73: #{block_forward.1} parent=0
    _
  %s13 = ssub.s32 1, %s11
  %s14 = scalar_select 0, %s13, %s11
  $region1: #{block_forward.1} parent=0
    #allocation2 [shape = 'u8[16384]{0}', space=vmem, size = 0x4000, scoped, tag = 'output window, operand 0']
    #allocation3 [shape = 's32[2]{0}', space=sflag, size = 0x8, scoped, tag = 'scoped memory for block_forward.1']
    %15 = vsyncpa [#allocation3], 0
    %s16 = scalar_lea.sflag [#allocation3], 1
    %17 = vsyncpa %s16, 0
    loop: start=0, step=1, limit=4
    $region2: #{block_forward.1} parent=1 // loop_pre_header
      _
    $region3: #{block_forward.1} parent=1 // loop_header
      %s19 = sphi 0, %s23
      %p20 = scmp.ge.s32.totalorder %s19, 4
      %s29 = sphi 0, %s31
      %s32 = sphi 0, %s29
      %s33 = sphi 0, %s32
      %s49 = sphi 0, %s33
      %s53 = sphi 0, %s53
      %s55 = sphi 0, %s53
      %s56 = sphi 0, %s55
      %s70 = sphi 0, %s56
      %s74 = sphi 0, %s74
      %s76 = sphi 0, %s74
      %s77 = sphi 0, %s76
      %s91 = sphi 0, %s77
      %s95 = sphi 0, %s95
      %s97 = sphi 0, %s95
      %s98 = sphi 0, %s97
      %s112 = sphi 0, %s98
      %s116 = sphi 0, %s116
      %s118 = sphi 0, %s116
      %s119 = sphi 0, %s118
      %s133 = sphi 0, %s119
      %s137 = sphi 0, %s137
      %s139 = sphi 0, %s137
      %s140 = sphi 0, %s139
      %s154 = sphi 0, %s140
      %s158 = sphi 0, %s158
      %s160 = sphi 0, %s158
      %s161 = sphi 0, %s160
      %s175 = sphi 0, %s161
      %s179 = sphi 0, %s179
      %s181 = sphi 0, %s179
      %s182 = sphi 0, %s181
      %s196 = sphi 0, %s182
      %s200 = sphi 0, %s200
      %s202 = sphi 0, %s200
      %s203 = sphi 0, %s202
      %s217 = sphi 0, %s203
      %s221 = sphi 0, %s221
      %s223 = sphi 0, %s221
      %s224 = sphi 0, %s223
      %s238 = sphi 0, %s224
      %s244 = sphi 0, %s246
      %s247 = sphi 0, %s244
      %s248 = sphi 0, %s247
      %s264 = sphi 0, %s248
    $region4: #{block_forward.1} parent=1 // loop_header_branch
      %22 = sbr.rel (%p20) target = $region8
    $region5: #{block_forward.1} parent=1 // loop_body
      %s24 = ssub.s32 %s19, 1
      %s25 = ssub.s32 %s19, 2
      %s26 = sadd.s32 %s19, 1
      %s27 = ssub.s32 %s19, %s26
      %p28 = scmp.eq.s32.totalorder %s27, 0
      %s30 = sadd.s32 %s29, 1
      %s31 = scalar_select %p28, %s29, %s30
      %p34 = pneg %p28
      %p35 = scmp.eq.s32.totalorder %s19, 1
      %p36 = por %p34, %p35
      %p37 = scmp.ne.s32.totalorder %s29, %s32
      %p38 = scmp.eq.s32.totalorder %s19, 0
      %p39 = por %p37, %p38
      %p40 = scmp.ne.s32.totalorder %s29, %s32
      %p41 = scmp.eq.s32.totalorder %s24, 1
      %p42 = por %p40, %p41
      %p43 = scmp.ne.s32.totalorder %s32, %s33
      %p44 = scmp.eq.s32.totalorder %s24, 0
      %p45 = por %p43, %p44
      %p46 = scmp.ne.s32.totalorder %s32, %s33
      %p47 = scmp.eq.s32.totalorder %s25, 1
      %p48 = por %p46, %p47
      %p50 = scmp.ne.s32.totalorder %s33, %s49
      %p51 = scmp.eq.s32.totalorder %s25, 0
      %p52 = por %p50, %p51
      %s54 = sadd.s32 %s53, 1
      %p57 = scmp.eq.s32.totalorder %s19, 1
      %p58 = scmp.ne.s32.totalorder %s53, %s55
      %p59 = scmp.eq.s32.totalorder %s19, 0
      %p60 = por %p58, %p59
      %p61 = scmp.ne.s32.totalorder %s53, %s55
      %p62 = scmp.eq.s32.totalorder %s24, 1
      %p63 = por %p61, %p62
      %p64 = scmp.ne.s32.totalorder %s55, %s56
      %p65 = scmp.eq.s32.totalorder %s24, 0
      %p66 = por %p64, %p65
      %p67 = scmp.ne.s32.totalorder %s55, %s56
      %p68 = scmp.eq.s32.totalorder %s25, 1
      %p69 = por %p67, %p68
      %p71 = scmp.ne.s32.totalorder %s56, %s70
      %p72 = scmp.eq.s32.totalorder %s25, 0
      %p73 = por %p71, %p72
      %s75 = sadd.s32 %s74, 1
      %p78 = scmp.eq.s32.totalorder %s19, 1
      %p79 = scmp.ne.s32.totalorder %s74, %s76
      %p80 = scmp.eq.s32.totalorder %s19, 0
      %p81 = por %p79, %p80
      %p82 = scmp.ne.s32.totalorder %s74, %s76
      %p83 = scmp.eq.s32.totalorder %s24, 1
      %p84 = por %p82, %p83
      %p85 = scmp.ne.s32.totalorder %s76, %s77
      %p86 = scmp.eq.s32.totalorder %s24, 0
      %p87 = por %p85, %p86
      %p88 = scmp.ne.s32.totalorder %s76, %s77
      %p89 = scmp.eq.s32.totalorder %s25, 1
      %p90 = por %p88, %p89
      %p92 = scmp.ne.s32.totalorder %s77, %s91
      %p93 = scmp.eq.s32.totalorder %s25, 0
      %p94 = por %p92, %p93
      %s96 = sadd.s32 %s95, 1
      %p99 = scmp.eq.s32.totalorder %s19, 1
      %p100 = scmp.ne.s32.totalorder %s95, %s97
      %p101 = scmp.eq.s32.totalorder %s19, 0
      %p102 = por %p100, %p101
      %p103 = scmp.ne.s32.totalorder %s95, %s97
      %p104 = scmp.eq.s32.totalorder %s24, 1
      %p105 = por %p103, %p104
      %p106 = scmp.ne.s32.totalorder %s97, %s98
      %p107 = scmp.eq.s32.totalorder %s24, 0
      %p108 = por %p106, %p107
      %p109 = scmp.ne.s32.totalorder %s97, %s98
      %p110 = scmp.eq.s32.totalorder %s25, 1
      %p111 = por %p109, %p110
      %p113 = scmp.ne.s32.totalorder %s98, %s112
      %p114 = scmp.eq.s32.totalorder %s25, 0
      %p115 = por %p113, %p114
      %s117 = sadd.s32 %s116, 1
      %p120 = scmp.eq.s32.totalorder %s19, 1
      %p121 = scmp.ne.s32.totalorder %s116, %s118
      %p122 = scmp.eq.s32.totalorder %s19, 0
      %p123 = por %p121, %p122
      %p124 = scmp.ne.s32.totalorder %s116, %s118
      %p125 = scmp.eq.s32.totalorder %s24, 1
      %p126 = por %p124, %p125
      %p127 = scmp.ne.s32.totalorder %s118, %s119
      %p128 = scmp.eq.s32.totalorder %s24, 0
      %p129 = por %p127, %p128
      %p130 = scmp.ne.s32.totalorder %s118, %s119
      %p131 = scmp.eq.s32.totalorder %s25, 1
      %p132 = por %p130, %p131
      %p134 = scmp.ne.s32.totalorder %s119, %s133
      %p135 = scmp.eq.s32.totalorder %s25, 0
      %p136 = por %p134, %p135
      %s138 = sadd.s32 %s137, 1
      %p141 = scmp.eq.s32.totalorder %s19, 1
      %p142 = scmp.ne.s32.totalorder %s137, %s139
      %p143 = scmp.eq.s32.totalorder %s19, 0
      %p144 = por %p142, %p143
      %p145 = scmp.ne.s32.totalorder %s137, %s139
      %p146 = scmp.eq.s32.totalorder %s24, 1
      %p147 = por %p145, %p146
      %p148 = scmp.ne.s32.totalorder %s139, %s140
      %p149 = scmp.eq.s32.totalorder %s24, 0
      %p150 = por %p148, %p149
      %p151 = scmp.ne.s32.totalorder %s139, %s140
      %p152 = scmp.eq.s32.totalorder %s25, 1
      %p153 = por %p151, %p152
      %p155 = scmp.ne.s32.totalorder %s140, %s154
      %p156 = scmp.eq.s32.totalorder %s25, 0
      %p157 = por %p155, %p156
      %s159 = sadd.s32 %s158, 1
      %p162 = scmp.eq.s32.totalorder %s19, 1
      %p163 = scmp.ne.s32.totalorder %s158, %s160
      %p164 = scmp.eq.s32.totalorder %s19, 0
      %p165 = por %p163, %p164
      %p166 = scmp.ne.s32.totalorder %s158, %s160
      %p167 = scmp.eq.s32.totalorder %s24, 1
      %p168 = por %p166, %p167
      %p169 = scmp.ne.s32.totalorder %s160, %s161
      %p170 = scmp.eq.s32.totalorder %s24, 0
      %p171 = por %p169, %p170
      %p172 = scmp.ne.s32.totalorder %s160, %s161
      %p173 = scmp.eq.s32.totalorder %s25, 1
      %p174 = por %p172, %p173
      %p176 = scmp.ne.s32.totalorder %s161, %s175
      %p177 = scmp.eq.s32.totalorder %s25, 0
      %p178 = por %p176, %p177
      %s180 = sadd.s32 %s179, 1
      %p183 = scmp.eq.s32.totalorder %s19, 1
      %p184 = scmp.ne.s32.totalorder %s179, %s181
      %p185 = scmp.eq.s32.totalorder %s19, 0
      %p186 = por %p184, %p185
      %p187 = scmp.ne.s32.totalorder %s179, %s181
      %p188 = scmp.eq.s32.totalorder %s24, 1
      %p189 = por %p187, %p188
      %p190 = scmp.ne.s32.totalorder %s181, %s182
      %p191 = scmp.eq.s32.totalorder %s24, 0
      %p192 = por %p190, %p191
      %p193 = scmp.ne.s32.totalorder %s181, %s182
      %p194 = scmp.eq.s32.totalorder %s25, 1
      %p195 = por %p193, %p194
      %p197 = scmp.ne.s32.totalorder %s182, %s196
      %p198 = scmp.eq.s32.totalorder %s25, 0
      %p199 = por %p197, %p198
      %s201 = sadd.s32 %s200, 1
      %p204 = scmp.eq.s32.totalorder %s19, 1
      %p205 = scmp.ne.s32.totalorder %s200, %s202
      %p206 = scmp.eq.s32.totalorder %s19, 0
      %p207 = por %p205, %p206
      %p208 = scmp.ne.s32.totalorder %s200, %s202
      %p209 = scmp.eq.s32.totalorder %s24, 1
      %p210 = por %p208, %p209
      %p211 = scmp.ne.s32.totalorder %s202, %s203
      %p212 = scmp.eq.s32.totalorder %s24, 0
      %p213 = por %p211, %p212
      %p214 = scmp.ne.s32.totalorder %s202, %s203
      %p215 = scmp.eq.s32.totalorder %s25, 1
      %p216 = por %p214, %p215
      %p218 = scmp.ne.s32.totalorder %s203, %s217
      %p219 = scmp.eq.s32.totalorder %s25, 0
      %p220 = por %p218, %p219
      %s222 = sadd.s32 %s221, 1
      %p225 = scmp.eq.s32.totalorder %s19, 1
      %p226 = scmp.ne.s32.totalorder %s221, %s223
      %p227 = scmp.eq.s32.totalorder %s19, 0
      %p228 = por %p226, %p227
      %p229 = scmp.ne.s32.totalorder %s221, %s223
      %p230 = scmp.eq.s32.totalorder %s24, 1
      %p231 = por %p229, %p230
      %p232 = scmp.ne.s32.totalorder %s223, %s224
      %p233 = scmp.eq.s32.totalorder %s24, 0
      %p234 = por %p232, %p233
      %p235 = scmp.ne.s32.totalorder %s223, %s224
      %p236 = scmp.eq.s32.totalorder %s25, 1
      %p237 = por %p235, %p236
      %p239 = scmp.ne.s32.totalorder %s224, %s238
      %p240 = scmp.eq.s32.totalorder %s25, 0
      %p241 = por %p239, %p240
      %s242 = ssub.s32 %s19, %s26
      %p243 = scmp.eq.s32.totalorder %s242, 0
      %s245 = sadd.s32 %s244, 1
      %s246 = scalar_select %p243, %s244, %s245
      %p249 = pneg %p243
      %p250 = scmp.eq.s32.totalorder %s19, 1
      %p251 = por %p249, %p250
      %p252 = scmp.ne.s32.totalorder %s244, %s247
      %p253 = scmp.eq.s32.totalorder %s19, 0
      %p254 = por %p252, %p253
      %p255 = scmp.ne.s32.totalorder %s244, %s247
      %p256 = scmp.eq.s32.totalorder %s24, 1
      %p257 = por %p255, %p256
      %p258 = scmp.ne.s32.totalorder %s247, %s248
      %p259 = scmp.eq.s32.totalorder %s24, 0
      %p260 = por %p258, %p259
      %p261 = scmp.ne.s32.totalorder %s247, %s248
      %p262 = scmp.eq.s32.totalorder %s25, 1
      %p263 = por %p261, %p262
      %p265 = scmp.ne.s32.totalorder %s248, %s264
      %p266 = scmp.eq.s32.totalorder %s25, 0
      %p267 = por %p265, %p266
      %p268 = scmp.le.s32.totalorder 1, %s19
      %p269 = scmp.lt.s32.totalorder %s19, 3
      %p270 = pnand %p268, %p269
      %p271 = pneg %p270
      // Predicated region
      $region9: #{block_forward.1} parent=5 // pred_check
        _
      $region10: #{block_forward.1} parent=5 // pred_check_branch
        %273 = sbr.rel (%p270) target = $region12
      $region11: #{block_forward.1} parent=5 // pred_region
        %s274 = ssub.s32 %s19, 1
        // Predicated region
        $region13: #{block_forward.1} parent=11 // pred_check
          %p275 = pneg %p66
        $region14: #{block_forward.1} parent=11 // pred_check_branch
          %277 = sbr.rel (%p275) target = $region16
        $region15: #{block_forward.1} parent=11 // pred_region
          _
        $region16: #{block_forward.1} parent=11 // pred_fallthru
          _
        // Predicated region
        $region17: #{block_forward.1} parent=11 // pred_check
          %p278 = pneg %p87
        $region18: #{block_forward.1} parent=11 // pred_check_branch
          %280 = sbr.rel (%p278) target = $region20
        $region19: #{block_forward.1} parent=11 // pred_region
          _
        $region20: #{block_forward.1} parent=11 // pred_fallthru
          _
        // Predicated region
        $region21: #{block_forward.1} parent=11 // pred_check
          %p281 = pneg %p108
        $region22: #{block_forward.1} parent=11 // pred_check_branch
          %283 = sbr.rel (%p281) target = $region24
        $region23: #{block_forward.1} parent=11 // pred_region
          _
        $region24: #{block_forward.1} parent=11 // pred_fallthru
          _
        // Predicated region
        $region25: #{block_forward.1} parent=11 // pred_check
          %p284 = pneg %p129
        $region26: #{block_forward.1} parent=11 // pred_check_branch
          %286 = sbr.rel (%p284) target = $region28
        $region27: #{block_forward.1} parent=11 // pred_region
          _
        $region28: #{block_forward.1} parent=11 // pred_fallthru
          _
        // Predicated region
        $region29: #{block_forward.1} parent=11 // pred_check
          %p287 = pneg %p150
        $region30: #{block_forward.1} parent=11 // pred_check_branch
          %289 = sbr.rel (%p287) target = $region32
        $region31: #{block_forward.1} parent=11 // pred_region
          _
        $region32: #{block_forward.1} parent=11 // pred_fallthru
          _
        // Predicated region
        $region33: #{block_forward.1} parent=11 // pred_check
          %p290 = pneg %p171
        $region34: #{block_forward.1} parent=11 // pred_check_branch
          %292 = sbr.rel (%p290) target = $region36
        $region35: #{block_forward.1} parent=11 // pred_region
          _
        $region36: #{block_forward.1} parent=11 // pred_fallthru
          _
        // Predicated region
        $region37: #{block_forward.1} parent=11 // pred_check
          %p293 = pneg %p192
        $region38: #{block_forward.1} parent=11 // pred_check_branch
          %295 = sbr.rel (%p293) target = $region40
        $region39: #{block_forward.1} parent=11 // pred_region
          _
        $region40: #{block_forward.1} parent=11 // pred_fallthru
          _
        // Predicated region
        $region41: #{block_forward.1} parent=11 // pred_check
          %p296 = pneg %p213
        $region42: #{block_forward.1} parent=11 // pred_check_branch
          %298 = sbr.rel (%p296) target = $region44
        $region43: #{block_forward.1} parent=11 // pred_region
          _
        $region44: #{block_forward.1} parent=11 // pred_fallthru
          _
        // Predicated region
        $region45: #{block_forward.1} parent=11 // pred_check
          %p299 = pneg %p234
        $region46: #{block_forward.1} parent=11 // pred_check_branch
          %301 = sbr.rel (%p299) target = $region48
        $region47: #{block_forward.1} parent=11 // pred_region
          _
        $region48: #{block_forward.1} parent=11 // pred_fallthru
          _
      $region12: #{block_forward.1} parent=5 // pred_fallthru
        _
      %p302 = scmp.lt.s32.totalorder %s19, 2
      // Predicated region
      $region49: #{block_forward.1} parent=5 // pred_check
        %p303 = pneg %p302
      $region50: #{block_forward.1} parent=5 // pred_check_branch
        %305 = sbr.rel (%p303) target = $region52
      $region51: #{block_forward.1} parent=5 // pred_region
        // Predicated region
        $region53: #{block_forward.1} parent=51 // pred_check
          %p306 = pneg %p39
        $region54: #{block_forward.1} parent=51 // pred_check_branch
          %308 = sbr.rel (%p306) target = $region56
        $region55: #{block_forward.1} parent=51 // pred_region
          %p309 = scmp.lt.s32.totalorder %s19, 1
          %s310 = scalar_select %p309, %s19, 1
          %s311 = smul.addr %s310, 2
          %s312 = smul.addr %s311, 8
          %s313 = scalar_lea.vmem %s0, %s312
        $region56: #{block_forward.1} parent=51 // pred_fallthru
          _
      $region52: #{block_forward.1} parent=5 // pred_fallthru
        _
      %p314 = scmp.le.s32.totalorder 1, %s19
      %p315 = scmp.lt.s32.totalorder %s19, 3
      %p316 = pnand %p314, %p315
      %p317 = pneg %p316
      // Predicated region
      $region57: #{block_forward.1} parent=5 // pred_check
        _
      $region58: #{block_forward.1} parent=5 // pred_check_branch
        %319 = sbr.rel (%p316) target = $region60
      $region59: #{block_forward.1} parent=5 // pred_region
        %s320 = ssub.s32 %s19, 1
        %p321 = scmp.lt.s32.totalorder %s24, 1
        %s322 = scalar_select %p321, %s24, 1
        %s323 = smul.addr %s322, 2
        %s324 = smul.addr %s323, 8
        %s325 = scalar_lea.vmem %s0, %s324
        %p326 = pneg %p45
        %p327 = pneg %p42
        %p328 = pneg %p66
        %p329 = pneg %p63
        %p330 = pneg %p87
        %p331 = pneg %p84
        %p332 = pneg %p108
        %p333 = pneg %p105
        %p334 = pneg %p129
        %p335 = pneg %p126
        %p336 = pneg %p150
        %p337 = pneg %p147
        %p338 = pneg %p171
        %p339 = pneg %p168
        %p340 = pneg %p192
        %p341 = pneg %p189
        %p342 = pneg %p213
        %p343 = pneg %p210
        %p344 = pneg %p234
        %p345 = pneg %p231
        %p346 = pneg %p260
        %p347 = pneg %p257
        %s348 = sand.u32 %s247, 1
        %s349 = scalar_lea.sflag [#allocation3], %s348
        %s350 = sand.u32 %s247, 1
        %s351 = smul.addr %s350, 16
        %s352 = scalar_lea.vmem [#allocation2], %s351
        %p353 = scmp.lt.s32.totalorder %s24, 1
        %s354 = scalar_select %p353, %s24, 1
        %s355 = smul.addr %s354, 2
        %s356 = smul.addr %s355, 8
        %s357 = scalar_lea.vmem %s0, %s356
        %v359 = vld [vmem:[%s357] sm:$0xff]
        %v360 = vld [vmem:[%s357 + $0x8] sm:$0xff]
        %v361 = vld [vmem:[%s1] sm:$0x1]
        %v362 = vmul.f32 %v359, %v359
        %v363 = vmul.f32 %v360, %v360
        %364 = vadd.xlane.f32.xlu0 %v362
        %v365 = vpop.xlane.xlu0 %364
        %366 = vadd.xlane.f32.xlu0 %v363
        %v367 = vpop.xlane.xlu0 %366
        %v368 = vrcp.pop 128.0
        %v369 = vmul.f32 %v365, %v368
        %v370 = vmul.f32 %v367, %v368
        %v371 = vadd.f32 %v369, 1.1920929e-07
        %v372 = vadd.f32 %v370, 1.1920929e-07
        %v373 = vrsqrt.pop %v371
        %v374 = vrsqrt.pop %v372
        %v375 = vmul.f32 %v359, %v373
        %v376 = vmul.f32 %v360, %v374
        %v378 = vlaneseq
        %v379 = vshrl.u32 %v378, 7
        %v380 = vsub.s32 0, %v379
        %v381 = vrot.slane %v361, %v380
        %v383 = vmul.f32 %v375, %v381
        %v384 = vmul.f32 %v376, %v381
        %v385 = vpack.c.bf16 %v384, %v383
        %v386 = vld [vmem:[%s2] sm:$0xff]
        %v387 = vld [vmem:[%s2 + $0x8] sm:$0xf]
        %v388 = vld [vmem:[%s2 + $0xc] sm:$0xff]
        %v389 = vld [vmem:[%s2 + $0x14] sm:$0xf]
        %v390 = vld [vmem:[%s2 + $0x18] sm:$0xff]
        %v391 = vld [vmem:[%s2 + $0x20] sm:$0xf]
        %v392 = vld [vmem:[%s2 + $0x24] sm:$0xff]
        %v393 = vld [vmem:[%s2 + $0x2c] sm:$0xf]
        %v394 = vld [vmem:[%s2 + $0x30] sm:$0xff]
        %v395 = vld [vmem:[%s2 + $0x38] sm:$0xf]
        %v396 = vld [vmem:[%s2 + $0x3c] sm:$0xff]
        %v397 = vld [vmem:[%s2 + $0x44] sm:$0xf]
        %v398 = vld [vmem:[%s2 + $0x48] sm:$0xff]
        %v399 = vld [vmem:[%s2 + $0x50] sm:$0xf]
        %v400 = vld [vmem:[%s2 + $0x54] sm:$0xff]
        %v401 = vld [vmem:[%s2 + $0x5c] sm:$0xf]
        %v402 = vld [vmem:[%s2 + $0x60] sm:$0xff]
        %v403 = vld [vmem:[%s2 + $0x68] sm:$0xf]
        %v404 = vld [vmem:[%s2 + $0x6c] sm:$0xff]
        %v405 = vld [vmem:[%s2 + $0x74] sm:$0xf]
        %v406 = vld [vmem:[%s2 + $0x78] sm:$0xff]
        %v407 = vld [vmem:[%s2 + $0x80] sm:$0xf]
        %v408 = vld [vmem:[%s2 + $0x84] sm:$0xff]
        %v409 = vld [vmem:[%s2 + $0x8c] sm:$0xf]
        %v410 = vld [vmem:[%s2 + $0x90] sm:$0xff]
        %v411 = vld [vmem:[%s2 + $0x98] sm:$0xf]
        %v412 = vld [vmem:[%s2 + $0x9c] sm:$0xff]
        %v413 = vld [vmem:[%s2 + $0xa4] sm:$0xf]
        %v414 = vld [vmem:[%s2 + $0xa8] sm:$0xff]
        %v415 = vld [vmem:[%s2 + $0xb0] sm:$0xf]
        %v416 = vld [vmem:[%s2 + $0xb4] sm:$0xff]
        %v417 = vld [vmem:[%s2 + $0xbc] sm:$0xf]
        %v450 = vunpack.c.l.b16 %v386
        %v451 = vunpack.c.h.b16 %v386
        %v452 = vunpack.c.l.b16 %v387
        %v453 = vunpack.c.l.b16 %v388
        %v454 = vunpack.c.h.b16 %v388
        %v455 = vunpack.c.l.b16 %v389
        %v456 = vunpack.c.l.b16 %v390
        %v457 = vunpack.c.h.b16 %v390
        %v458 = vunpack.c.l.b16 %v391
        %v459 = vunpack.c.l.b16 %v392
        %v460 = vunpack.c.h.b16 %v392
        %v461 = vunpack.c.l.b16 %v393
        %v462 = vunpack.c.l.b16 %v394
        %v463 = vunpack.c.h.b16 %v394
        %v464 = vunpack.c.l.b16 %v395
        %v465 = vunpack.c.l.b16 %v396
        %v466 = vunpack.c.h.b16 %v396
        %v467 = vunpack.c.l.b16 %v397
        %v468 = vunpack.c.l.b16 %v398
        %v469 = vunpack.c.h.b16 %v398
        %v470 = vunpack.c.l.b16 %v399
        %v471 = vunpack.c.l.b16 %v400
        %v472 = vunpack.c.h.b16 %v400
        %v473 = vunpack.c.l.b16 %v401
        %v474 = vunpack.c.l.b16 %v402
        %v475 = vunpack.c.h.b16 %v402
        %v476 = vunpack.c.l.b16 %v403
        %v477 = vunpack.c.l.b16 %v404
        %v478 = vunpack.c.h.b16 %v404
        %v479 = vunpack.c.l.b16 %v405
        %v480 = vunpack.c.l.b16 %v406
        %v481 = vunpack.c.h.b16 %v406
        %v482 = vunpack.c.l.b16 %v407
        %v483 = vunpack.c.l.b16 %v408
        %v484 = vunpack.c.h.b16 %v408
        %v485 = vunpack.c.l.b16 %v409
        %v486 = vunpack.c.l.b16 %v410
        %v487 = vunpack.c.h.b16 %v410
        %v488 = vunpack.c.l.b16 %v411
        %v489 = vunpack.c.l.b16 %v412
        %v490 = vunpack.c.h.b16 %v412
        %v491 = vunpack.c.l.b16 %v413
        %v492 = vunpack.c.l.b16 %v414
        %v493 = vunpack.c.h.b16 %v414
        %v494 = vunpack.c.l.b16 %v415
        %v495 = vunpack.c.l.b16 %v416
        %v496 = vunpack.c.h.b16 %v416
        %v497 = vunpack.c.l.b16 %v417
        %v498 = vpack.c.b16 %v453, %v450
        %v499 = vpack.c.b16 %v454, %v451
        %v500 = vpack.c.b16 %v455, %v452
        %v501 = vpack.c.b16 %v459, %v456
        %v502 = vpack.c.b16 %v460, %v457
        %v503 = vpack.c.b16 %v461, %v458
        %v504 = vpack.c.b16 %v465, %v462
        %v505 = vpack.c.b16 %v466, %v463
        %v506 = vpack.c.b16 %v467, %v464
        %v507 = vpack.c.b16 %v471, %v468
        %v508 = vpack.c.b16 %v472, %v469
        %v509 = vpack.c.b16 %v473, %v470
        %v510 = vpack.c.b16 %v477, %v474
        %v511 = vpack.c.b16 %v478, %v475
        %v512 = vpack.c.b16 %v479, %v476
        %v513 = vpack.c.b16 %v483, %v480
        %v514 = vpack.c.b16 %v484, %v481
        %v515 = vpack.c.b16 %v485, %v482
        %v516 = vpack.c.b16 %v489, %v486
        %v517 = vpack.c.b16 %v490, %v487
        %v518 = vpack.c.b16 %v491, %v488
        %v519 = vpack.c.b16 %v495, %v492
        %v520 = vpack.c.b16 %v496, %v493
        %v521 = vpack.c.b16 %v497, %v494
        %546 = vmatprep.subr.bf16.mxu0 %v499
        %547 = vmatpush1.bf16.msra.mxu0 %v498
        %548 = vmatprep.subr.bf16.mxu0 %v502
        %549 = vmatpush1.bf16.msra.mxu0 %v501
        %550 = vmatprep.subr.bf16.mxu0 %v505
        %551 = vmatpush1.bf16.msra.mxu0 %v504
        %552 = vmatprep.subr.bf16.mxu0 %v508
        %553 = vmatpush1.bf16.msra.mxu0 %v507
        %554 = vmatprep.subr.bf16.mxu0 %v511
        %555 = vmatpush1.bf16.msra.mxu0 %v510
        %556 = vmatprep.subr.bf16.mxu0 %v514
        %557 = vmatpush1.bf16.msra.mxu0 %v513
        %558 = vmatprep.subr.bf16.mxu0 %v517
        %559 = vmatpush1.bf16.msra.mxu0 %v516
        %560 = vmatprep.subr.bf16.mxu0 %v520
        %561 = vmatpush1.bf16.msra.mxu0 %v519
        %562 = vmatprep.subr.bf16.mxu0 0
        %563 = vmatpush1.bf16.msra.mxu0 0
        %564 = vmatprep.subr.bf16.mxu0 0
        %565 = vmatpush1.bf16.msra.mxu0 0
        %566 = vmatprep.subr.bf16.mxu0 0
        %567 = vmatpush1.bf16.msra.mxu0 0
        %568 = vmatprep.subr.bf16.mxu0 0
        %569 = vmatpush1.bf16.msra.mxu0 0
        %570 = vmatprep.subr.bf16.mxu0 0
        %571 = vmatpush1.bf16.msra.mxu0 0
        %572 = vmatprep.subr.bf16.mxu0 0
        %573 = vmatpush1.bf16.msra.mxu0 0
        %574 = vmatprep.subr.bf16.mxu0 0
        %575 = vmatpush1.bf16.msra.mxu0 0
        %576 = vmatprep.subr.bf16.mxu0 0
        %577 = vmatpush1.bf16.msra.mxu0 0
        %578 = vmatprep.mubr.bf16.mxu0 0
        %579 = vmatmul.mubr.bf16.gmra.mrb[0].mxu0 %v385
        %v580 = vpop.f32.mrb[0].mxu0
        %v581 = vadd.f32 0.0, %v580
        %v582 = vpop.f32.mrb[0].mxu0
        %v583 = vadd.f32 0.0, %v582
        %v584 = vpop.f32.mrb[0].mxu0
        %v585 = vadd.f32 0.0, %v584
        %v586 = vpop.f32.mrb[0].mxu0
        %v587 = vadd.f32 0.0, %v586
        %588 = vdwg.mxu0
        %589 = vmatprep.subr.bf16.mxu0 0
        %590 = vmatpush1.bf16.msra.mxu0 %v500
        %591 = vmatprep.subr.bf16.mxu0 0
        %592 = vmatpush1.bf16.msra.mxu0 %v503
        %593 = vmatprep.subr.bf16.mxu0 0
        %594 = vmatpush1.bf16.msra.mxu0 %v506
        %595 = vmatprep.subr.bf16.mxu0 0
        %596 = vmatpush1.bf16.msra.mxu0 %v509
        %597 = vmatprep.subr.bf16.mxu0 0
        %598 = vmatpush1.bf16.msra.mxu0 %v512
        %599 = vmatprep.subr.bf16.mxu0 0
        %600 = vmatpush1.bf16.msra.mxu0 %v515
        %601 = vmatprep.subr.bf16.mxu0 0
        %602 = vmatpush1.bf16.msra.mxu0 %v518
        %603 = vmatprep.subr.bf16.mxu0 0
        %604 = vmatpush1.bf16.msra.mxu0 %v521
        %605 = vmatprep.subr.bf16.mxu0 0
        %606 = vmatpush1.bf16.msra.mxu0 0
        %607 = vmatprep.subr.bf16.mxu0 0
        %608 = vmatpush1.bf16.msra.mxu0 0
        %609 = vmatprep.subr.bf16.mxu0 0
        %610 = vmatpush1.bf16.msra.mxu0 0
        %611 = vmatprep.subr.bf16.mxu0 0
        %612 = vmatpush1.bf16.msra.mxu0 0
        %613 = vmatprep.subr.bf16.mxu0 0
        %614 = vmatpush1.bf16.msra.mxu0 0
        %615 = vmatprep.subr.bf16.mxu0 0
        %616 = vmatpush1.bf16.msra.mxu0 0
        %617 = vmatprep.subr.bf16.mxu0 0
        %618 = vmatpush1.bf16.msra.mxu0 0
        %619 = vmatprep.subr.bf16.mxu0 0
        %620 = vmatpush1.bf16.msra.mxu0 0
        %621 = vmatprep.mubr.bf16.mxu0 0
        %622 = vmatmul.mubr.bf16.gmra.mrb[0].mxu0 %v385
        %v623 = vpop.f32.mrb[0].mxu0
        %v624 = vadd.f32 0.0, %v623
        %v625 = vpop.f32.mrb[0].mxu0
        %v626 = vpop.f32.mrb[0].mxu0
        %v627 = vadd.f32 0.0, %v626
        %v628 = vpop.f32.mrb[0].mxu0
        %629 = vdwg.mxu0
        %v630 = vmul.f32 %v581, 0.17677669
        %v631 = vmul.f32 %v585, 0.17677669
        %634 = vrot.lane.b32.xlu0 %v630, 96
        %v635 = vpop.permute.xlu0 %634
        %636 = vrot.lane.b32.xlu0 %v631, 96
        %v637 = vpop.permute.xlu0 %636
        %640 = vrot.lane.b32.xlu0 %v630, 64
        %v641 = vpop.permute.xlu0 %640
        %642 = vrot.lane.b32.xlu0 %v631, 64
        %v643 = vpop.permute.xlu0 %642
        %646 = vrot.lane.b32.xlu0 %v630, 32
        %v647 = vpop.permute.xlu0 %646
        %648 = vrot.lane.b32.xlu0 %v631, 32
        %v649 = vpop.permute.xlu0 %648
        %v652 = vcombine.low %v630, %v641
        %v653 = vcombine.high %v630, %v641
        %v655 = vunpack.c.l.s4 1983009808
        %v656 = vunpack.c.0.s8 %v655
        %v657 = vlaneseq
        %v658 = vshrl.u32 %v657, 7
        %v659 = vsub.s32 %v656, %v658
        %v660 = vrot.slane %v652, %v659
        %v662 = vunpack.c.l.s4 1983009808
        %v663 = vunpack.c.0.s8 %v662
        %v664 = vlaneseq
        %v665 = vshrl.u32 %v664, 7
        %v666 = vsub.s32 %v663, %v665
        %v667 = vrot.slane %v653, %v666
        %v668 = vcombine.low %v635, %v647
        %v669 = vcombine.high %v635, %v647
        %v671 = vunpack.c.l.s4 1983009808
        %v672 = vunpack.c.0.s8 %v671
        %v673 = vlaneseq
        %v674 = vshrl.u32 %v673, 7
        %v675 = vsub.s32 %v672, %v674
        %v676 = vrot.slane %v668, %v675
        %v678 = vunpack.c.l.s4 1983009808
        %v679 = vunpack.c.0.s8 %v678
        %v680 = vlaneseq
        %v681 = vshrl.u32 %v680, 7
        %v682 = vsub.s32 %v679, %v681
        %v683 = vrot.slane %v669, %v682
        %v684 = vcombine.low %v660, %v676
        %v685 = vcombine.high %v660, %v676
        %v687 = vunpack.c.l.s4 1934713408
        %v688 = vunpack.c.0.s8 %v687
        %v689 = vlaneseq
        %v690 = vshrl.u32 %v689, 7
        %v691 = vsub.s32 %v688, %v690
        %v692 = vrot.slane %v684, %v691
        %v694 = vunpack.c.l.s4 1934713408
        %v695 = vunpack.c.0.s8 %v694
        %v696 = vlaneseq
        %v697 = vshrl.u32 %v696, 7
        %v698 = vsub.s32 %v695, %v697
        %v699 = vrot.slane %v685, %v698
        %v700 = vcombine.low %v667, %v683
        %v701 = vcombine.high %v667, %v683
        %v703 = vunpack.c.l.s4 1934713408
        %v704 = vunpack.c.0.s8 %v703
        %v705 = vlaneseq
        %v706 = vshrl.u32 %v705, 7
        %v707 = vsub.s32 %v704, %v706
        %v708 = vrot.slane %v700, %v707
        %v710 = vunpack.c.l.s4 1934713408
        %v711 = vunpack.c.0.s8 %v710
        %v712 = vlaneseq
        %v713 = vshrl.u32 %v712, 7
        %v714 = vsub.s32 %v711, %v713
        %v715 = vrot.slane %v701, %v714
        %v716 = vcombine.high %v692, 0.0
        %v717 = vcombine.high %v699, 0.0
        %v718 = vcombine.high %v708, 0.0
        %v719 = vcombine.high %v715, 0.0
        %v720 = vcombine.low %v631, %v643
        %v721 = vcombine.high %v631, %v643
        %v723 = vunpack.c.l.s4 1983009808
        %v724 = vunpack.c.0.s8 %v723
        %v725 = vlaneseq
        %v726 = vshrl.u32 %v725, 7
        %v727 = vsub.s32 %v724, %v726
        %v728 = vrot.slane %v720, %v727
        %v730 = vunpack.c.l.s4 1983009808
        %v731 = vunpack.c.0.s8 %v730
        %v732 = vlaneseq
        %v733 = vshrl.u32 %v732, 7
        %v734 = vsub.s32 %v731, %v733
        %v735 = vrot.slane %v721, %v734
        %v736 = vcombine.low %v637, %v649
        %v737 = vcombine.high %v637, %v649
        %v739 = vunpack.c.l.s4 1983009808
        %v740 = vunpack.c.0.s8 %v739
        %v741 = vlaneseq
        %v742 = vshrl.u32 %v741, 7
        %v743 = vsub.s32 %v740, %v742
        %v744 = vrot.slane %v736, %v743
        %v746 = vunpack.c.l.s4 1983009808
        %v747 = vunpack.c.0.s8 %v746
        %v748 = vlaneseq
        %v749 = vshrl.u32 %v748, 7
        %v750 = vsub.s32 %v747, %v749
        %v751 = vrot.slane %v737, %v750
        %v752 = vcombine.low %v728, %v744
        %v753 = vcombine.high %v728, %v744
        %v755 = vunpack.c.l.s4 1934713408
        %v756 = vunpack.c.0.s8 %v755
        %v757 = vlaneseq
        %v758 = vshrl.u32 %v757, 7
        %v759 = vsub.s32 %v756, %v758
        %v760 = vrot.slane %v752, %v759
        %v762 = vunpack.c.l.s4 1934713408
        %v763 = vunpack.c.0.s8 %v762
        %v764 = vlaneseq
        %v765 = vshrl.u32 %v764, 7
        %v766 = vsub.s32 %v763, %v765
        %v767 = vrot.slane %v753, %v766
        %v768 = vcombine.low %v735, %v751
        %v769 = vcombine.high %v735, %v751
        %v771 = vunpack.c.l.s4 1934713408
        %v772 = vunpack.c.0.s8 %v771
        %v773 = vlaneseq
        %v774 = vshrl.u32 %v773, 7
        %v775 = vsub.s32 %v772, %v774
        %v776 = vrot.slane %v768, %v775
        %v778 = vunpack.c.l.s4 1934713408
        %v779 = vunpack.c.0.s8 %v778
        %v780 = vlaneseq
        %v781 = vshrl.u32 %v780, 7
        %v782 = vsub.s32 %v779, %v781
        %v783 = vrot.slane %v769, %v782
        %v784 = vcombine.high %v760, 0.0
        %v785 = vcombine.high %v767, 0.0
        %v786 = vcombine.high %v776, 0.0
        %v787 = vcombine.high %v783, 0.0
        %v788 = vcombine.low %v692, %v699
        %v790 = vunpack.c.l.s4 1983009808
        %v791 = vunpack.c.0.s8 %v790
        %v792 = vlaneseq
        %v793 = vshrl.u32 %v792, 7
        %v794 = vsub.s32 %v791, %v793
        %v795 = vrot.slane %v788, %v794
        %v796 = vcombine.low %v716, %v717
        %v798 = vunpack.c.l.s4 1983009808
        %v799 = vunpack.c.0.s8 %v798
        %v800 = vlaneseq
        %v801 = vshrl.u32 %v800, 7
        %v802 = vsub.s32 %v799, %v801
        %v803 = vrot.slane %v796, %v802
        %v804 = vcombine.low %v708, %v715
        %v806 = vunpack.c.l.s4 1983009808
        %v807 = vunpack.c.0.s8 %v806
        %v808 = vlaneseq
        %v809 = vshrl.u32 %v808, 7
        %v810 = vsub.s32 %v807, %v809
        %v811 = vrot.slane %v804, %v810
        %v812 = vcombine.low %v718, %v719
        %v814 = vunpack.c.l.s4 1983009808
        %v815 = vunpack.c.0.s8 %v814
        %v816 = vlaneseq
        %v817 = vshrl.u32 %v816, 7
        %v818 = vsub.s32 %v815, %v817
        %v819 = vrot.slane %v812, %v818
        %v820 = vcombine.low %v795, %v803
        %v821 = vcombine.high %v795, %v803
        %v823 = vunpack.c.l.s4 1934713408
        %v824 = vunpack.c.0.s8 %v823
        %v825 = vlaneseq
        %v826 = vshrl.u32 %v825, 7
        %v827 = vsub.s32 %v824, %v826
        %v828 = vrot.slane %v820, %v827
        %v830 = vunpack.c.l.s4 1934713408
        %v831 = vunpack.c.0.s8 %v830
        %v832 = vlaneseq
        %v833 = vshrl.u32 %v832, 7
        %v834 = vsub.s32 %v831, %v833
        %v835 = vrot.slane %v821, %v834
        %v836 = vcombine.low %v811, %v819
        %v837 = vcombine.high %v811, %v819
        %v839 = vunpack.c.l.s4 1934713408
        %v840 = vunpack.c.0.s8 %v839
        %v841 = vlaneseq
        %v842 = vshrl.u32 %v841, 7
        %v843 = vsub.s32 %v840, %v842
        %v844 = vrot.slane %v836, %v843
        %v846 = vunpack.c.l.s4 1934713408
        %v847 = vunpack.c.0.s8 %v846
        %v848 = vlaneseq
        %v849 = vshrl.u32 %v848, 7
        %v850 = vsub.s32 %v847, %v849
        %v851 = vrot.slane %v837, %v850
        %v852 = vcombine.low %v828, %v844
        %v853 = vcombine.high %v828, %v844
        %v854 = vcombine.low %v835, %v851
        %v855 = vcombine.high %v835, %v851
        %v856 = vcombine.low %v760, %v767
        %v858 = vunpack.c.l.s4 1983009808
        %v859 = vunpack.c.0.s8 %v858
        %v860 = vlaneseq
        %v861 = vshrl.u32 %v860, 7
        %v862 = vsub.s32 %v859, %v861
        %v863 = vrot.slane %v856, %v862
        %v864 = vcombine.low %v784, %v785
        %v866 = vunpack.c.l.s4 1983009808
        %v867 = vunpack.c.0.s8 %v866
        %v868 = vlaneseq
        %v869 = vshrl.u32 %v868, 7
        %v870 = vsub.s32 %v867, %v869
        %v871 = vrot.slane %v864, %v870
        %v872 = vcombine.low %v776, %v783
        %v874 = vunpack.c.l.s4 1983009808
        %v875 = vunpack.c.0.s8 %v874
        %v876 = vlaneseq
        %v877 = vshrl.u32 %v876, 7
        %v878 = vsub.s32 %v875, %v877
        %v879 = vrot.slane %v872, %v878
        %v880 = vcombine.low %v786, %v787
        %v882 = vunpack.c.l.s4 1983009808
        %v883 = vunpack.c.0.s8 %v882
        %v884 = vlaneseq
        %v885 = vshrl.u32 %v884, 7
        %v886 = vsub.s32 %v883, %v885
        %v887 = vrot.slane %v880, %v886
        %v888 = vcombine.low %v863, %v871
        %v889 = vcombine.high %v863, %v871
        %v891 = vunpack.c.l.s4 1934713408
        %v892 = vunpack.c.0.s8 %v891
        %v893 = vlaneseq
        %v894 = vshrl.u32 %v893, 7
        %v895 = vsub.s32 %v892, %v894
        %v896 = vrot.slane %v888, %v895
        %v898 = vunpack.c.l.s4 1934713408
        %v899 = vunpack.c.0.s8 %v898
        %v900 = vlaneseq
        %v901 = vshrl.u32 %v900, 7
        %v902 = vsub.s32 %v899, %v901
        %v903 = vrot.slane %v889, %v902
        %v904 = vcombine.low %v879, %v887
        %v905 = vcombine.high %v879, %v887
        %v907 = vunpack.c.l.s4 1934713408
        %v908 = vunpack.c.0.s8 %v907
        %v909 = vlaneseq
        %v910 = vshrl.u32 %v909, 7
        %v911 = vsub.s32 %v908, %v910
        %v912 = vrot.slane %v904, %v911
        %v914 = vunpack.c.l.s4 1934713408
        %v915 = vunpack.c.0.s8 %v914
        %v916 = vlaneseq
        %v917 = vshrl.u32 %v916, 7
        %v918 = vsub.s32 %v915, %v917
        %v919 = vrot.slane %v905, %v918
        %v920 = vcombine.low %v896, %v912
        %v921 = vcombine.high %v896, %v912
        %v922 = vcombine.low %v903, %v919
        %v923 = vcombine.high %v903, %v919
        %926 = vrot.lane.b32.xlu0 %v583, 96
        %v927 = vpop.permute.xlu0 %926
        %928 = vrot.lane.b32.xlu0 %v587, 96
        %v929 = vpop.permute.xlu0 %928
        %932 = vrot.lane.b32.xlu0 %v583, 64
        %v933 = vpop.permute.xlu0 %932
        %934 = vrot.lane.b32.xlu0 %v587, 64
        %v935 = vpop.permute.xlu0 %934
        %938 = vrot.lane.b32.xlu0 %v583, 32
        %v939 = vpop.permute.xlu0 %938
        %940 = vrot.lane.b32.xlu0 %v587, 32
        %v941 = vpop.permute.xlu0 %940
        %v944 = vcombine.low %v583, %v933
        %v945 = vcombine.high %v583, %v933
        %v947 = vunpack.c.l.s4 1983009808
        %v948 = vunpack.c.0.s8 %v947
        %v949 = vlaneseq
        %v950 = vshrl.u32 %v949, 7
        %v951 = vsub.s32 %v948, %v950
        %v952 = vrot.slane %v944, %v951
        %v954 = vunpack.c.l.s4 1983009808
        %v955 = vunpack.c.0.s8 %v954
        %v956 = vlaneseq
        %v957 = vshrl.u32 %v956, 7
        %v958 = vsub.s32 %v955, %v957
        %v959 = vrot.slane %v945, %v958
        %v960 = vcombine.low %v927, %v939
        %v961 = vcombine.high %v927, %v939
        %v963 = vunpack.c.l.s4 1983009808
        %v964 = vunpack.c.0.s8 %v963
        %v965 = vlaneseq
        %v966 = vshrl.u32 %v965, 7
        %v967 = vsub.s32 %v964, %v966
        %v968 = vrot.slane %v960, %v967
        %v970 = vunpack.c.l.s4 1983009808
        %v971 = vunpack.c.0.s8 %v970
        %v972 = vlaneseq
        %v973 = vshrl.u32 %v972, 7
        %v974 = vsub.s32 %v971, %v973
        %v975 = vrot.slane %v961, %v974
        %v976 = vcombine.low %v952, %v968
        %v977 = vcombine.high %v952, %v968
        %v979 = vunpack.c.l.s4 1934713408
        %v980 = vunpack.c.0.s8 %v979
        %v981 = vlaneseq
        %v982 = vshrl.u32 %v981, 7
        %v983 = vsub.s32 %v980, %v982
        %v984 = vrot.slane %v976, %v983
        %v986 = vunpack.c.l.s4 1934713408
        %v987 = vunpack.c.0.s8 %v986
        %v988 = vlaneseq
        %v989 = vshrl.u32 %v988, 7
        %v990 = vsub.s32 %v987, %v989
        %v991 = vrot.slane %v977, %v990
        %v992 = vcombine.low %v959, %v975
        %v993 = vcombine.high %v959, %v975
        %v995 = vunpack.c.l.s4 1934713408
        %v996 = vunpack.c.0.s8 %v995
        %v997 = vlaneseq
        %v998 = vshrl.u32 %v997, 7
        %v999 = vsub.s32 %v996, %v998
        %v1000 = vrot.slane %v992, %v999
        %v1002 = vunpack.c.l.s4 1934713408
        %v1003 = vunpack.c.0.s8 %v1002
        %v1004 = vlaneseq
        %v1005 = vshrl.u32 %v1004, 7
        %v1006 = vsub.s32 %v1003, %v1005
        %v1007 = vrot.slane %v993, %v1006
        %v1008 = vcombine.high %v984, 0.0
        %v1009 = vcombine.high %v991, 0.0
        %v1010 = vcombine.high %v1000, 0.0
        %v1011 = vcombine.high %v1007, 0.0
        %v1012 = vcombine.low %v587, %v935
        %v1013 = vcombine.high %v587, %v935
        %v1015 = vunpack.c.l.s4 1983009808
        %v1016 = vunpack.c.0.s8 %v1015
        %v1017 = vlaneseq
        %v1018 = vshrl.u32 %v1017, 7
        %v1019 = vsub.s32 %v1016, %v1018
        %v1020 = vrot.slane %v1012, %v1019
        %v1022 = vunpack.c.l.s4 1983009808
        %v1023 = vunpack.c.0.s8 %v1022
        %v1024 = vlaneseq
        %v1025 = vshrl.u32 %v1024, 7
        %v1026 = vsub.s32 %v1023, %v1025
        %v1027 = vrot.slane %v1013, %v1026
        %v1028 = vcombine.low %v929, %v941
        %v1029 = vcombine.high %v929, %v941
        %v1031 = vunpack.c.l.s4 1983009808
        %v1032 = vunpack.c.0.s8 %v1031
        %v1033 = vlaneseq
        %v1034 = vshrl.u32 %v1033, 7
        %v1035 = vsub.s32 %v1032, %v1034
        %v1036 = vrot.slane %v1028, %v1035
        %v1038 = vunpack.c.l.s4 1983009808
        %v1039 = vunpack.c.0.s8 %v1038
        %v1040 = vlaneseq
        %v1041 = vshrl.u32 %v1040, 7
        %v1042 = vsub.s32 %v1039, %v1041
        %v1043 = vrot.slane %v1029, %v1042
        %v1044 = vcombine.low %v1020, %v1036
        %v1045 = vcombine.high %v1020, %v1036
        %v1047 = vunpack.c.l.s4 1934713408
        %v1048 = vunpack.c.0.s8 %v1047
        %v1049 = vlaneseq
        %v1050 = vshrl.u32 %v1049, 7
        %v1051 = vsub.s32 %v1048, %v1050
        %v1052 = vrot.slane %v1044, %v1051
        %v1054 = vunpack.c.l.s4 1934713408
        %v1055 = vunpack.c.0.s8 %v1054
        %v1056 = vlaneseq
        %v1057 = vshrl.u32 %v1056, 7
        %v1058 = vsub.s32 %v1055, %v1057
        %v1059 = vrot.slane %v1045, %v1058
        %v1060 = vcombine.low %v1027, %v1043
        %v1061 = vcombine.high %v1027, %v1043
        %v1063 = vunpack.c.l.s4 1934713408
        %v1064 = vunpack.c.0.s8 %v1063
        %v1065 = vlaneseq
        %v1066 = vshrl.u32 %v1065, 7
        %v1067 = vsub.s32 %v1064, %v1066
        %v1068 = vrot.slane %v1060, %v1067
        %v1070 = vunpack.c.l.s4 1934713408
        %v1071 = vunpack.c.0.s8 %v1070
        %v1072 = vlaneseq
        %v1073 = vshrl.u32 %v1072, 7
        %v1074 = vsub.s32 %v1071, %v1073
        %v1075 = vrot.slane %v1061, %v1074
        %v1076 = vcombine.high %v1052, 0.0
        %v1077 = vcombine.high %v1059, 0.0
        %v1078 = vcombine.high %v1068, 0.0
        %v1079 = vcombine.high %v1075, 0.0
        %v1080 = vcombine.low %v984, %v991
        %v1082 = vunpack.c.l.s4 1983009808
        %v1083 = vunpack.c.0.s8 %v1082
        %v1084 = vlaneseq
        %v1085 = vshrl.u32 %v1084, 7
        %v1086 = vsub.s32 %v1083, %v1085
        %v1087 = vrot.slane %v1080, %v1086
        %v1088 = vcombine.low %v1008, %v1009
        %v1090 = vunpack.c.l.s4 1983009808
        %v1091 = vunpack.c.0.s8 %v1090
        %v1092 = vlaneseq
        %v1093 = vshrl.u32 %v1092, 7
        %v1094 = vsub.s32 %v1091, %v1093
        %v1095 = vrot.slane %v1088, %v1094
        %v1096 = vcombine.low %v1000, %v1007
        %v1098 = vunpack.c.l.s4 1983009808
        %v1099 = vunpack.c.0.s8 %v1098
        %v1100 = vlaneseq
        %v1101 = vshrl.u32 %v1100, 7
        %v1102 = vsub.s32 %v1099, %v1101
        %v1103 = vrot.slane %v1096, %v1102
        %v1104 = vcombine.low %v1010, %v1011
        %v1106 = vunpack.c.l.s4 1983009808
        %v1107 = vunpack.c.0.s8 %v1106
        %v1108 = vlaneseq
        %v1109 = vshrl.u32 %v1108, 7
        %v1110 = vsub.s32 %v1107, %v1109
        %v1111 = vrot.slane %v1104, %v1110
        %v1112 = vcombine.low %v1087, %v1095
        %v1113 = vcombine.high %v1087, %v1095
        %v1115 = vunpack.c.l.s4 1934713408
        %v1116 = vunpack.c.0.s8 %v1115
        %v1117 = vlaneseq
        %v1118 = vshrl.u32 %v1117, 7
        %v1119 = vsub.s32 %v1116, %v1118
        %v1120 = vrot.slane %v1112, %v1119
        %v1122 = vunpack.c.l.s4 1934713408
        %v1123 = vunpack.c.0.s8 %v1122
        %v1124 = vlaneseq
        %v1125 = vshrl.u32 %v1124, 7
        %v1126 = vsub.s32 %v1123, %v1125
        %v1127 = vrot.slane %v1113, %v1126
        %v1128 = vcombine.low %v1103, %v1111
        %v1129 = vcombine.high %v1103, %v1111
        %v1131 = vunpack.c.l.s4 1934713408
        %v1132 = vunpack.c.0.s8 %v1131
        %v1133 = vlaneseq
        %v1134 = vshrl.u32 %v1133, 7
        %v1135 = vsub.s32 %v1132, %v1134
        %v1136 = vrot.slane %v1128, %v1135
        %v1138 = vunpack.c.l.s4 1934713408
        %v1139 = vunpack.c.0.s8 %v1138
        %v1140 = vlaneseq
        %v1141 = vshrl.u32 %v1140, 7
        %v1142 = vsub.s32 %v1139, %v1141
        %v1143 = vrot.slane %v1129, %v1142
        %v1144 = vcombine.low %v1120, %v1136
        %v1145 = vcombine.high %v1120, %v1136
        %v1146 = vcombine.low %v1127, %v1143
        %v1147 = vcombine.high %v1127, %v1143
        %v1148 = vcombine.low %v1052, %v1059
        %v1150 = vunpack.c.l.s4 1983009808
        %v1151 = vunpack.c.0.s8 %v1150
        %v1152 = vlaneseq
        %v1153 = vshrl.u32 %v1152, 7
        %v1154 = vsub.s32 %v1151, %v1153
        %v1155 = vrot.slane %v1148, %v1154
        %v1156 = vcombine.low %v1076, %v1077
        %v1158 = vunpack.c.l.s4 1983009808
        %v1159 = vunpack.c.0.s8 %v1158
        %v1160 = vlaneseq
        %v1161 = vshrl.u32 %v1160, 7
        %v1162 = vsub.s32 %v1159, %v1161
        %v1163 = vrot.slane %v1156, %v1162
        %v1164 = vcombine.low %v1068, %v1075
        %v1166 = vunpack.c.l.s4 1983009808
        %v1167 = vunpack.c.0.s8 %v1166
        %v1168 = vlaneseq
        %v1169 = vshrl.u32 %v1168, 7
        %v1170 = vsub.s32 %v1167, %v1169
        %v1171 = vrot.slane %v1164, %v1170
        %v1172 = vcombine.low %v1078, %v1079
        %v1174 = vunpack.c.l.s4 1983009808
        %v1175 = vunpack.c.0.s8 %v1174
        %v1176 = vlaneseq
        %v1177 = vshrl.u32 %v1176, 7
        %v1178 = vsub.s32 %v1175, %v1177
        %v1179 = vrot.slane %v1172, %v1178
        %v1180 = vcombine.low %v1155, %v1163
        %v1181 = vcombine.high %v1155, %v1163
        %v1183 = vunpack.c.l.s4 1934713408
        %v1184 = vunpack.c.0.s8 %v1183
        %v1185 = vlaneseq
        %v1186 = vshrl.u32 %v1185, 7
        %v1187 = vsub.s32 %v1184, %v1186
        %v1188 = vrot.slane %v1180, %v1187
        %v1190 = vunpack.c.l.s4 1934713408
        %v1191 = vunpack.c.0.s8 %v1190
        %v1192 = vlaneseq
        %v1193 = vshrl.u32 %v1192, 7
        %v1194 = vsub.s32 %v1191, %v1193
        %v1195 = vrot.slane %v1181, %v1194
        %v1196 = vcombine.low %v1171, %v1179
        %v1197 = vcombine.high %v1171, %v1179
        %v1199 = vunpack.c.l.s4 1934713408
        %v1200 = vunpack.c.0.s8 %v1199
        %v1201 = vlaneseq
        %v1202 = vshrl.u32 %v1201, 7
        %v1203 = vsub.s32 %v1200, %v1202
        %v1204 = vrot.slane %v1196, %v1203
        %v1206 = vunpack.c.l.s4 1934713408
        %v1207 = vunpack.c.0.s8 %v1206
        %v1208 = vlaneseq
        %v1209 = vshrl.u32 %v1208, 7
        %v1210 = vsub.s32 %v1207, %v1209
        %v1211 = vrot.slane %v1197, %v1210
        %v1212 = vcombine.low %v1188, %v1204
        %v1213 = vcombine.high %v1188, %v1204
        %v1214 = vcombine.low %v1195, %v1211
        %v1215 = vcombine.high %v1195, %v1211
        %1218 = vrot.lane.b32.xlu0 %v624, 96
        %v1219 = vpop.permute.xlu0 %1218
        %1220 = vrot.lane.b32.xlu0 %v627, 96
        %v1221 = vpop.permute.xlu0 %1220
        %1224 = vrot.lane.b32.xlu0 %v624, 64
        %v1225 = vpop.permute.xlu0 %1224
        %1226 = vrot.lane.b32.xlu0 %v627, 64
        %v1227 = vpop.permute.xlu0 %1226
        %1230 = vrot.lane.b32.xlu0 %v624, 32
        %v1231 = vpop.permute.xlu0 %1230
        %1232 = vrot.lane.b32.xlu0 %v627, 32
        %v1233 = vpop.permute.xlu0 %1232
        %v1236 = vcombine.low %v624, %v1225
        %v1237 = vcombine.high %v624, %v1225
        %v1239 = vunpack.c.l.s4 1983009808
        %v1240 = vunpack.c.0.s8 %v1239
        %v1241 = vlaneseq
        %v1242 = vshrl.u32 %v1241, 7
        %v1243 = vsub.s32 %v1240, %v1242
        %v1244 = vrot.slane %v1236, %v1243
        %v1246 = vunpack.c.l.s4 1983009808
        %v1247 = vunpack.c.0.s8 %v1246
        %v1248 = vlaneseq
        %v1249 = vshrl.u32 %v1248, 7
        %v1250 = vsub.s32 %v1247, %v1249
        %v1251 = vrot.slane %v1237, %v1250
        %v1252 = vcombine.low %v1219, %v1231
        %v1253 = vcombine.high %v1219, %v1231
        %v1255 = vunpack.c.l.s4 1983009808
        %v1256 = vunpack.c.0.s8 %v1255
        %v1257 = vlaneseq
        %v1258 = vshrl.u32 %v1257, 7
        %v1259 = vsub.s32 %v1256, %v1258
        %v1260 = vrot.slane %v1252, %v1259
        %v1262 = vunpack.c.l.s4 1983009808
        %v1263 = vunpack.c.0.s8 %v1262
        %v1264 = vlaneseq
        %v1265 = vshrl.u32 %v1264, 7
        %v1266 = vsub.s32 %v1263, %v1265
        %v1267 = vrot.slane %v1253, %v1266
        %v1268 = vcombine.low %v1244, %v1260
        %v1269 = vcombine.high %v1244, %v1260
        %v1271 = vunpack.c.l.s4 1934713408
        %v1272 = vunpack.c.0.s8 %v1271
        %v1273 = vlaneseq
        %v1274 = vshrl.u32 %v1273, 7
        %v1275 = vsub.s32 %v1272, %v1274
        %v1276 = vrot.slane %v1268, %v1275
        %v1278 = vunpack.c.l.s4 1934713408
        %v1279 = vunpack.c.0.s8 %v1278
        %v1280 = vlaneseq
        %v1281 = vshrl.u32 %v1280, 7
        %v1282 = vsub.s32 %v1279, %v1281
        %v1283 = vrot.slane %v1269, %v1282
        %v1284 = vcombine.low %v1251, %v1267
        %v1285 = vcombine.high %v1251, %v1267
        %v1287 = vunpack.c.l.s4 1934713408
        %v1288 = vunpack.c.0.s8 %v1287
        %v1289 = vlaneseq
        %v1290 = vshrl.u32 %v1289, 7
        %v1291 = vsub.s32 %v1288, %v1290
        %v1292 = vrot.slane %v1284, %v1291
        %v1294 = vunpack.c.l.s4 1934713408
        %v1295 = vunpack.c.0.s8 %v1294
        %v1296 = vlaneseq
        %v1297 = vshrl.u32 %v1296, 7
        %v1298 = vsub.s32 %v1295, %v1297
        %v1299 = vrot.slane %v1285, %v1298
        %v1300 = vcombine.high %v1276, 0.0
        %v1301 = vcombine.high %v1283, 0.0
        %v1302 = vcombine.high %v1292, 0.0
        %v1303 = vcombine.high %v1299, 0.0
        %v1304 = vcombine.low %v627, %v1227
        %v1305 = vcombine.high %v627, %v1227
        %v1307 = vunpack.c.l.s4 1983009808
        %v1308 = vunpack.c.0.s8 %v1307
        %v1309 = vlaneseq
        %v1310 = vshrl.u32 %v1309, 7
        %v1311 = vsub.s32 %v1308, %v1310
        %v1312 = vrot.slane %v1304, %v1311
        %v1314 = vunpack.c.l.s4 1983009808
        %v1315 = vunpack.c.0.s8 %v1314
        %v1316 = vlaneseq
        %v1317 = vshrl.u32 %v1316, 7
        %v1318 = vsub.s32 %v1315, %v1317
        %v1319 = vrot.slane %v1305, %v1318
        %v1320 = vcombine.low %v1221, %v1233
        %v1321 = vcombine.high %v1221, %v1233
        %v1323 = vunpack.c.l.s4 1983009808
        %v1324 = vunpack.c.0.s8 %v1323
        %v1325 = vlaneseq
        %v1326 = vshrl.u32 %v1325, 7
        %v1327 = vsub.s32 %v1324, %v1326
        %v1328 = vrot.slane %v1320, %v1327
        %v1330 = vunpack.c.l.s4 1983009808
        %v1331 = vunpack.c.0.s8 %v1330
        %v1332 = vlaneseq
        %v1333 = vshrl.u32 %v1332, 7
        %v1334 = vsub.s32 %v1331, %v1333
        %v1335 = vrot.slane %v1321, %v1334
        %v1336 = vcombine.low %v1312, %v1328
        %v1337 = vcombine.high %v1312, %v1328
        %v1339 = vunpack.c.l.s4 1934713408
        %v1340 = vunpack.c.0.s8 %v1339
        %v1341 = vlaneseq
        %v1342 = vshrl.u32 %v1341, 7
        %v1343 = vsub.s32 %v1340, %v1342
        %v1344 = vrot.slane %v1336, %v1343
        %v1346 = vunpack.c.l.s4 1934713408
        %v1347 = vunpack.c.0.s8 %v1346
        %v1348 = vlaneseq
        %v1349 = vshrl.u32 %v1348, 7
        %v1350 = vsub.s32 %v1347, %v1349
        %v1351 = vrot.slane %v1337, %v1350
        %v1352 = vcombine.low %v1319, %v1335
        %v1353 = vcombine.high %v1319, %v1335
        %v1355 = vunpack.c.l.s4 1934713408
        %v1356 = vunpack.c.0.s8 %v1355
        %v1357 = vlaneseq
        %v1358 = vshrl.u32 %v1357, 7
        %v1359 = vsub.s32 %v1356, %v1358
        %v1360 = vrot.slane %v1352, %v1359
        %v1362 = vunpack.c.l.s4 1934713408
        %v1363 = vunpack.c.0.s8 %v1362
        %v1364 = vlaneseq
        %v1365 = vshrl.u32 %v1364, 7
        %v1366 = vsub.s32 %v1363, %v1365
        %v1367 = vrot.slane %v1353, %v1366
        %v1368 = vcombine.high %v1344, 0.0
        %v1369 = vcombine.high %v1351, 0.0
        %v1370 = vcombine.high %v1360, 0.0
        %v1371 = vcombine.high %v1367, 0.0
        %v1372 = vcombine.low %v1276, %v1283
        %v1374 = vunpack.c.l.s4 1983009808
        %v1375 = vunpack.c.0.s8 %v1374
        %v1376 = vlaneseq
        %v1377 = vshrl.u32 %v1376, 7
        %v1378 = vsub.s32 %v1375, %v1377
        %v1379 = vrot.slane %v1372, %v1378
        %v1380 = vcombine.low %v1300, %v1301
        %v1382 = vunpack.c.l.s4 1983009808
        %v1383 = vunpack.c.0.s8 %v1382
        %v1384 = vlaneseq
        %v1385 = vshrl.u32 %v1384, 7
        %v1386 = vsub.s32 %v1383, %v1385
        %v1387 = vrot.slane %v1380, %v1386
        %v1388 = vcombine.low %v1292, %v1299
        %v1390 = vunpack.c.l.s4 1983009808
        %v1391 = vunpack.c.0.s8 %v1390
        %v1392 = vlaneseq
        %v1393 = vshrl.u32 %v1392, 7
        %v1394 = vsub.s32 %v1391, %v1393
        %v1395 = vrot.slane %v1388, %v1394
        %v1396 = vcombine.low %v1302, %v1303
        %v1398 = vunpack.c.l.s4 1983009808
        %v1399 = vunpack.c.0.s8 %v1398
        %v1400 = vlaneseq
        %v1401 = vshrl.u32 %v1400, 7
        %v1402 = vsub.s32 %v1399, %v1401
        %v1403 = vrot.slane %v1396, %v1402
        %v1404 = vcombine.low %v1379, %v1387
        %v1405 = vcombine.high %v1379, %v1387
        %v1407 = vunpack.c.l.s4 1934713408
        %v1408 = vunpack.c.0.s8 %v1407
        %v1409 = vlaneseq
        %v1410 = vshrl.u32 %v1409, 7
        %v1411 = vsub.s32 %v1408, %v1410
        %v1412 = vrot.slane %v1404, %v1411
        %v1414 = vunpack.c.l.s4 1934713408
        %v1415 = vunpack.c.0.s8 %v1414
        %v1416 = vlaneseq
        %v1417 = vshrl.u32 %v1416, 7
        %v1418 = vsub.s32 %v1415, %v1417
        %v1419 = vrot.slane %v1405, %v1418
        %v1420 = vcombine.low %v1395, %v1403
        %v1421 = vcombine.high %v1395, %v1403
        %v1423 = vunpack.c.l.s4 1934713408
        %v1424 = vunpack.c.0.s8 %v1423
        %v1425 = vlaneseq
        %v1426 = vshrl.u32 %v1425, 7
        %v1427 = vsub.s32 %v1424, %v1426
        %v1428 = vrot.slane %v1420, %v1427
        %v1430 = vunpack.c.l.s4 1934713408
        %v1431 = vunpack.c.0.s8 %v1430
        %v1432 = vlaneseq
        %v1433 = vshrl.u32 %v1432, 7
        %v1434 = vsub.s32 %v1431, %v1433
        %v1435 = vrot.slane %v1421, %v1434
        %v1436 = vcombine.low %v1412, %v1428
        %v1437 = vcombine.high %v1412, %v1428
        %v1438 = vcombine.low %v1419, %v1435
        %v1439 = vcombine.high %v1419, %v1435
        %v1440 = vcombine.low %v1344, %v1351
        %v1442 = vunpack.c.l.s4 1983009808
        %v1443 = vunpack.c.0.s8 %v1442
        %v1444 = vlaneseq
        %v1445 = vshrl.u32 %v1444, 7
        %v1446 = vsub.s32 %v1443, %v1445
        %v1447 = vrot.slane %v1440, %v1446
        %v1448 = vcombine.low %v1368, %v1369
        %v1450 = vunpack.c.l.s4 1983009808
        %v1451 = vunpack.c.0.s8 %v1450
        %v1452 = vlaneseq
        %v1453 = vshrl.u32 %v1452, 7
        %v1454 = vsub.s32 %v1451, %v1453
        %v1455 = vrot.slane %v1448, %v1454
        %v1456 = vcombine.low %v1360, %v1367
        %v1458 = vunpack.c.l.s4 1983009808
        %v1459 = vunpack.c.0.s8 %v1458
        %v1460 = vlaneseq
        %v1461 = vshrl.u32 %v1460, 7
        %v1462 = vsub.s32 %v1459, %v1461
        %v1463 = vrot.slane %v1456, %v1462
        %v1464 = vcombine.low %v1370, %v1371
        %v1466 = vunpack.c.l.s4 1983009808
        %v1467 = vunpack.c.0.s8 %v1466
        %v1468 = vlaneseq
        %v1469 = vshrl.u32 %v1468, 7
        %v1470 = vsub.s32 %v1467, %v1469
        %v1471 = vrot.slane %v1464, %v1470
        %v1472 = vcombine.low %v1447, %v1455
        %v1473 = vcombine.high %v1447, %v1455
        %v1475 = vunpack.c.l.s4 1934713408
        %v1476 = vunpack.c.0.s8 %v1475
        %v1477 = vlaneseq
        %v1478 = vshrl.u32 %v1477, 7
        %v1479 = vsub.s32 %v1476, %v1478
        %v1480 = vrot.slane %v1472, %v1479
        %v1482 = vunpack.c.l.s4 1934713408
        %v1483 = vunpack.c.0.s8 %v1482
        %v1484 = vlaneseq
        %v1485 = vshrl.u32 %v1484, 7
        %v1486 = vsub.s32 %v1483, %v1485
        %v1487 = vrot.slane %v1473, %v1486
        %v1488 = vcombine.low %v1463, %v1471
        %v1489 = vcombine.high %v1463, %v1471
        %v1491 = vunpack.c.l.s4 1934713408
        %v1492 = vunpack.c.0.s8 %v1491
        %v1493 = vlaneseq
        %v1494 = vshrl.u32 %v1493, 7
        %v1495 = vsub.s32 %v1492, %v1494
        %v1496 = vrot.slane %v1488, %v1495
        %v1498 = vunpack.c.l.s4 1934713408
        %v1499 = vunpack.c.0.s8 %v1498
        %v1500 = vlaneseq
        %v1501 = vshrl.u32 %v1500, 7
        %v1502 = vsub.s32 %v1499, %v1501
        %v1503 = vrot.slane %v1489, %v1502
        %v1504 = vcombine.low %v1480, %v1496
        %v1505 = vcombine.high %v1480, %v1496
        %v1506 = vcombine.low %v1487, %v1503
        %v1507 = vcombine.high %v1487, %v1503
        %v1508 = vld [vmem:[%s4] sm:$0xf]
        %v1511 = vunpack.c.l.s4 1966171168
        %v1512 = vunpack.c.0.s8 %v1511
        %v1513 = vlaneseq
        %v1514 = vshrl.u32 %v1513, 7
        %v1515 = vsub.s32 %v1512, %v1514
        %v1516 = vrot.slane %v1508, %v1515
        %v1517 = vcombine.high %v1516, %v1516
        %v1519 = vunpack.c.l.s4 1966171168
        %v1520 = vunpack.c.0.s8 %v1519
        %v1521 = vlaneseq
        %v1522 = vshrl.u32 %v1521, 7
        %v1523 = vsub.s32 %v1520, %v1522
        %v1524 = vrot.slane %v1516, %v1523
        %v1526 = vunpack.c.l.s4 1966171168
        %v1527 = vunpack.c.0.s8 %v1526
        %v1528 = vlaneseq
        %v1529 = vshrl.u32 %v1528, 7
        %v1530 = vsub.s32 %v1527, %v1529
        %v1531 = vrot.slane %v1517, %v1530
        %v1532 = vcombine.high %v1524, %v1524
        %v1533 = vcombine.high %v1531, %v1531
        %v1534 = vld [vmem:[%s5] sm:$0xf]
        %v1537 = vunpack.c.l.s4 1966171168
        %v1538 = vunpack.c.0.s8 %v1537
        %v1539 = vlaneseq
        %v1540 = vshrl.u32 %v1539, 7
        %v1541 = vsub.s32 %v1538, %v1540
        %v1542 = vrot.slane %v1534, %v1541
        %v1543 = vcombine.high %v1542, %v1542
        %v1545 = vunpack.c.l.s4 1966171168
        %v1546 = vunpack.c.0.s8 %v1545
        %v1547 = vlaneseq
        %v1548 = vshrl.u32 %v1547, 7
        %v1549 = vsub.s32 %v1546, %v1548
        %v1550 = vrot.slane %v1542, %v1549
        %v1552 = vunpack.c.l.s4 1966171168
        %v1553 = vunpack.c.0.s8 %v1552
        %v1554 = vlaneseq
        %v1555 = vshrl.u32 %v1554, 7
        %v1556 = vsub.s32 %v1553, %v1555
        %v1557 = vrot.slane %v1543, %v1556
        %v1558 = vcombine.high %v1550, %v1550
        %v1559 = vcombine.high %v1557, %v1557
        %v1560 = vlaneseq
        %v1561 = vshrl.u32 %v1560, 7
        %v1562 = vsub.s32 0, %v1561
        %v1563 = vrot.slane %v1524, %v1562
        %v1564 = vlaneseq
        %v1565 = vshrl.u32 %v1564, 7
        %v1566 = vsub.s32 0, %v1565
        %v1567 = vrot.slane %v1531, %v1566
        %v1568 = vlaneseq
        %v1569 = vshrl.u32 %v1568, 7
        %v1570 = vsub.s32 0, %v1569
        %v1571 = vrot.slane %v1532, %v1570
        %v1572 = vlaneseq
        %v1573 = vshrl.u32 %v1572, 7
        %v1574 = vsub.s32 0, %v1573
        %v1575 = vrot.slane %v1533, %v1574
        %v1580 = vmul.f32 %v852, %v1563
        %v1581 = vmul.f32 %v920, %v1563
        %v1582 = vmul.f32 %v853, %v1567
        %v1583 = vmul.f32 %v921, %v1567
        %v1584 = vmul.f32 %v854, %v1571
        %v1585 = vmul.f32 %v922, %v1571
        %v1586 = vmul.f32 %v855, %v1575
        %v1587 = vmul.f32 %v923, %v1575
        %v1588 = vlaneseq
        %v1589 = vshrl.u32 %v1588, 7
        %v1590 = vsub.s32 0, %v1589
        %v1591 = vrot.slane %v1550, %v1590
        %v1592 = vlaneseq
        %v1593 = vshrl.u32 %v1592, 7
        %v1594 = vsub.s32 0, %v1593
        %v1595 = vrot.slane %v1557, %v1594
        %v1596 = vlaneseq
        %v1597 = vshrl.u32 %v1596, 7
        %v1598 = vsub.s32 0, %v1597
        %v1599 = vrot.slane %v1558, %v1598
        %v1600 = vlaneseq
        %v1601 = vshrl.u32 %v1600, 7
        %v1602 = vsub.s32 0, %v1601
        %v1603 = vrot.slane %v1559, %v1602
        %1608 = vrot.lane.b32.xlu0 %v1591, 16
        %v1609 = vpop.permute.xlu0 %1608
        %1610 = vrot.lane.b32.xlu0 %v1595, 16
        %v1611 = vpop.permute.xlu0 %1610
        %1612 = vrot.lane.b32.xlu0 %v1599, 16
        %v1613 = vpop.permute.xlu0 %1612
        %1614 = vrot.lane.b32.xlu0 %v1603, 16
        %v1615 = vpop.permute.xlu0 %1614
        %v1620 = vmul.f32 %v852, %v1609
        %v1621 = vmul.f32 %v920, %v1609
        %v1622 = vmul.f32 %v853, %v1611
        %v1623 = vmul.f32 %v921, %v1611
        %v1624 = vmul.f32 %v854, %v1613
        %v1625 = vmul.f32 %v922, %v1613
        %v1626 = vmul.f32 %v855, %v1615
        %v1627 = vmul.f32 %v923, %v1615
        %1636 = vrot.lane.b32.xlu0 %v1620, 112
        %v1637 = vpop.permute.xlu0 %1636
        %1638 = vrot.lane.b32.xlu0 %v1621, 112
        %v1639 = vpop.permute.xlu0 %1638
        %1640 = vrot.lane.b32.xlu0 %v1622, 112
        %v1641 = vpop.permute.xlu0 %1640
        %1642 = vrot.lane.b32.xlu0 %v1623, 112
        %v1643 = vpop.permute.xlu0 %1642
        %1644 = vrot.lane.b32.xlu0 %v1624, 112
        %v1645 = vpop.permute.xlu0 %1644
        %1646 = vrot.lane.b32.xlu0 %v1625, 112
        %v1647 = vpop.permute.xlu0 %1646
        %1648 = vrot.lane.b32.xlu0 %v1626, 112
        %v1649 = vpop.permute.xlu0 %1648
        %1650 = vrot.lane.b32.xlu0 %v1627, 112
        %v1651 = vpop.permute.xlu0 %1650
        %v1660 = vadd.f32 %v1580, %v1637
        %v1661 = vadd.f32 %v1581, %v1639
        %v1662 = vadd.f32 %v1582, %v1641
        %v1663 = vadd.f32 %v1583, %v1643
        %v1664 = vadd.f32 %v1584, %v1645
        %v1665 = vadd.f32 %v1585, %v1647
        %v1666 = vadd.f32 %v1586, %v1649
        %v1667 = vadd.f32 %v1587, %v1651
        %1668 = vrot.lane.b32.xlu0 %v1563, 16
        %v1669 = vpop.permute.xlu0 %1668
        %1670 = vrot.lane.b32.xlu0 %v1567, 16
        %v1671 = vpop.permute.xlu0 %1670
        %1672 = vrot.lane.b32.xlu0 %v1571, 16
        %v1673 = vpop.permute.xlu0 %1672
        %1674 = vrot.lane.b32.xlu0 %v1575, 16
        %v1675 = vpop.permute.xlu0 %1674
        %v1680 = vmul.f32 %v852, %v1669
        %v1681 = vmul.f32 %v920, %v1669
        %v1682 = vmul.f32 %v853, %v1671
        %v1683 = vmul.f32 %v921, %v1671
        %v1684 = vmul.f32 %v854, %v1673
        %v1685 = vmul.f32 %v922, %v1673
        %v1686 = vmul.f32 %v855, %v1675
        %v1687 = vmul.f32 %v923, %v1675
        %v1688 = vmul.f32 %v852, %v1591
        %v1689 = vmul.f32 %v920, %v1591
        %v1690 = vmul.f32 %v853, %v1595
        %v1691 = vmul.f32 %v921, %v1595
        %v1692 = vmul.f32 %v854, %v1599
        %v1693 = vmul.f32 %v922, %v1599
        %v1694 = vmul.f32 %v855, %v1603
        %v1695 = vmul.f32 %v923, %v1603
        %1704 = vrot.lane.b32.xlu0 %v1688, 16
        %v1705 = vpop.permute.xlu0 %1704
        %1706 = vrot.lane.b32.xlu0 %v1689, 16
        %v1707 = vpop.permute.xlu0 %1706
        %1708 = vrot.lane.b32.xlu0 %v1690, 16
        %v1709 = vpop.permute.xlu0 %1708
        %1710 = vrot.lane.b32.xlu0 %v1691, 16
        %v1711 = vpop.permute.xlu0 %1710
        %1712 = vrot.lane.b32.xlu0 %v1692, 16
        %v1713 = vpop.permute.xlu0 %1712
        %1714 = vrot.lane.b32.xlu0 %v1693, 16
        %v1715 = vpop.permute.xlu0 %1714
        %1716 = vrot.lane.b32.xlu0 %v1694, 16
        %v1717 = vpop.permute.xlu0 %1716
        %1718 = vrot.lane.b32.xlu0 %v1695, 16
        %v1719 = vpop.permute.xlu0 %1718
        %v1728 = vsub.f32 %v1680, %v1705
        %v1729 = vsub.f32 %v1681, %v1707
        %v1730 = vsub.f32 %v1682, %v1709
        %v1731 = vsub.f32 %v1683, %v1711
        %v1732 = vsub.f32 %v1684, %v1713
        %v1733 = vsub.f32 %v1685, %v1715
        %v1734 = vsub.f32 %v1686, %v1717
        %v1735 = vsub.f32 %v1687, %v1719
        %vm1736 = vcmask 130048
        %v1737 = vsel %vm1736, %v1660, %v1728
        %v1738 = vsel %vm1736, %v1661, %v1729
        %v1739 = vsel %vm1736, %v1662, %v1730
        %v1740 = vsel %vm1736, %v1663, %v1731
        %v1741 = vsel %vm1736, %v1664, %v1732
        %v1742 = vsel %vm1736, %v1665, %v1733
        %v1743 = vsel %vm1736, %v1666, %v1734
        %v1744 = vsel %vm1736, %v1667, %v1735
        %v1745 = vpack.c.bf16 %v1738, %v1737
        %v1746 = vpack.c.bf16 %v1740, %v1739
        %v1747 = vpack.c.bf16 %v1742, %v1741
        %v1748 = vpack.c.bf16 %v1744, %v1743
        %v1749 = vmul.f32 %v1144, %v1563
        %v1750 = vmul.f32 %v1212, %v1563
        %v1751 = vmul.f32 %v1145, %v1567
        %v1752 = vmul.f32 %v1213, %v1567
        %v1753 = vmul.f32 %v1146, %v1571
        %v1754 = vmul.f32 %v1214, %v1571
        %v1755 = vmul.f32 %v1147, %v1575
        %v1756 = vmul.f32 %v1215, %v1575
        %v1757 = vmul.f32 %v1144, %v1609
        %v1758 = vmul.f32 %v1212, %v1609
        %v1759 = vmul.f32 %v1145, %v1611
        %v1760 = vmul.f32 %v1213, %v1611
        %v1761 = vmul.f32 %v1146, %v1613
        %v1762 = vmul.f32 %v1214, %v1613
        %v1763 = vmul.f32 %v1147, %v1615
        %v1764 = vmul.f32 %v1215, %v1615
        %1773 = vrot.lane.b32.xlu0 %v1757, 112
        %v1774 = vpop.permute.xlu0 %1773
        %1775 = vrot.lane.b32.xlu0 %v1758, 112
        %v1776 = vpop.permute.xlu0 %1775
        %1777 = vrot.lane.b32.xlu0 %v1759, 112
        %v1778 = vpop.permute.xlu0 %1777
        %1779 = vrot.lane.b32.xlu0 %v1760, 112
        %v1780 = vpop.permute.xlu0 %1779
        %1781 = vrot.lane.b32.xlu0 %v1761, 112
        %v1782 = vpop.permute.xlu0 %1781
        %1783 = vrot.lane.b32.xlu0 %v1762, 112
        %v1784 = vpop.permute.xlu0 %1783
        %1785 = vrot.lane.b32.xlu0 %v1763, 112
        %v1786 = vpop.permute.xlu0 %1785
        %1787 = vrot.lane.b32.xlu0 %v1764, 112
        %v1788 = vpop.permute.xlu0 %1787
        %v1797 = vadd.f32 %v1749, %v1774
        %v1798 = vadd.f32 %v1750, %v1776
        %v1799 = vadd.f32 %v1751, %v1778
        %v1800 = vadd.f32 %v1752, %v1780
        %v1801 = vadd.f32 %v1753, %v1782
        %v1802 = vadd.f32 %v1754, %v1784
        %v1803 = vadd.f32 %v1755, %v1786
        %v1804 = vadd.f32 %v1756, %v1788
        %v1805 = vmul.f32 %v1144, %v1669
        %v1806 = vmul.f32 %v1212, %v1669
        %v1807 = vmul.f32 %v1145, %v1671
        %v1808 = vmul.f32 %v1213, %v1671
        %v1809 = vmul.f32 %v1146, %v1673
        %v1810 = vmul.f32 %v1214, %v1673
        %v1811 = vmul.f32 %v1147, %v1675
        %v1812 = vmul.f32 %v1215, %v1675
        %v1813 = vmul.f32 %v1144, %v1591
        %v1814 = vmul.f32 %v1212, %v1591
        %v1815 = vmul.f32 %v1145, %v1595
        %v1816 = vmul.f32 %v1213, %v1595
        %v1817 = vmul.f32 %v1146, %v1599
        %v1818 = vmul.f32 %v1214, %v1599
        %v1819 = vmul.f32 %v1147, %v1603
        %v1820 = vmul.f32 %v1215, %v1603
        %1829 = vrot.lane.b32.xlu0 %v1813, 16
        %v1830 = vpop.permute.xlu0 %1829
        %1831 = vrot.lane.b32.xlu0 %v1814, 16
        %v1832 = vpop.permute.xlu0 %1831
        %1833 = vrot.lane.b32.xlu0 %v1815, 16
        %v1834 = vpop.permute.xlu0 %1833
        %1835 = vrot.lane.b32.xlu0 %v1816, 16
        %v1836 = vpop.permute.xlu0 %1835
        %1837 = vrot.lane.b32.xlu0 %v1817, 16
        %v1838 = vpop.permute.xlu0 %1837
        %1839 = vrot.lane.b32.xlu0 %v1818, 16
        %v1840 = vpop.permute.xlu0 %1839
        %1841 = vrot.lane.b32.xlu0 %v1819, 16
        %v1842 = vpop.permute.xlu0 %1841
        %1843 = vrot.lane.b32.xlu0 %v1820, 16
        %v1844 = vpop.permute.xlu0 %1843
        %v1853 = vsub.f32 %v1805, %v1830
        %v1854 = vsub.f32 %v1806, %v1832
        %v1855 = vsub.f32 %v1807, %v1834
        %v1856 = vsub.f32 %v1808, %v1836
        %v1857 = vsub.f32 %v1809, %v1838
        %v1858 = vsub.f32 %v1810, %v1840
        %v1859 = vsub.f32 %v1811, %v1842
        %v1860 = vsub.f32 %v1812, %v1844
        %v1861 = vsel %vm1736, %v1797, %v1853
        %v1862 = vsel %vm1736, %v1798, %v1854
        %v1863 = vsel %vm1736, %v1799, %v1855
        %v1864 = vsel %vm1736, %v1800, %v1856
        %v1865 = vsel %vm1736, %v1801, %v1857
        %v1866 = vsel %vm1736, %v1802, %v1858
        %v1867 = vsel %vm1736, %v1803, %v1859
        %v1868 = vsel %vm1736, %v1804, %v1860
        %v1869 = vpack.c.bf16 %v1862, %v1861
        %v1870 = vpack.c.bf16 %v1864, %v1863
        %v1871 = vpack.c.bf16 %v1866, %v1865
        %v1872 = vpack.c.bf16 %v1868, %v1867
        %v1873 = vpack.c.bf16 %v1504, %v1436
        %v1874 = vpack.c.bf16 %v1505, %v1437
        %v1875 = vpack.c.bf16 %v1506, %v1438
        %v1876 = vpack.c.bf16 %v1507, %v1439
        %v1877 = vlaneseq
        %v1878 = vshrl.u32 %v1877, 7
        %v1879 = vadd.s32 %v1878, 8
        %v1880 = vlaneseq
        %v1881 = vand.u32 %v1880, 127
        %vm1882 = vcmp.le.s32.totalorder %v1881, %v1878
        %vm1883 = vcmp.le.s32.totalorder %v1881, %v1879
        %v1884 = vsel %vm1882, 0.0, -1e+30
        %v1885 = vsel %vm1883, 0.0, -1e+30
        %vm1886 = vcmask 261120
        %v1888 = vsel %vm1886, %v1745, 0
        %v1891 = vsel %vm1886, %v1869, 0
        %1893 = vmatprep.subr.bf16.mxu0 0
        %1894 = vmatpush1.bf16.xpose.msra.mxu0 %v1891
        %1895 = vmatprep.subr.bf16.mxu0 0
        %1896 = vmatpush1.bf16.xpose.msra.mxu0 0
        %1897 = vmatprep.subr.bf16.mxu0 0
        %1898 = vmatpush1.bf16.xpose.msra.mxu0 0
        %1899 = vmatprep.subr.bf16.mxu0 0
        %1900 = vmatpush1.bf16.xpose.msra.mxu0 0
        %1901 = vmatprep.subr.bf16.mxu0 0
        %1902 = vmatpush1.bf16.xpose.msra.mxu0 0
        %1903 = vmatprep.subr.bf16.mxu0 0
        %1904 = vmatpush1.bf16.xpose.msra.mxu0 0
        %1905 = vmatprep.subr.bf16.mxu0 0
        %1906 = vmatpush1.bf16.xpose.msra.mxu0 0
        %1907 = vmatprep.subr.bf16.mxu0 0
        %1908 = vmatpush1.bf16.xpose.msra.mxu0 0
        %1909 = vmatprep.subr.bf16.mxu0 0
        %1910 = vmatpush1.bf16.xpose.msra.mxu0 0
        %1911 = vmatprep.subr.bf16.mxu0 0
        %1912 = vmatpush1.bf16.xpose.msra.mxu0 0
        %1913 = vmatprep.subr.bf16.mxu0 0
        %1914 = vmatpush1.bf16.xpose.msra.mxu0 0
        %1915 = vmatprep.subr.bf16.mxu0 0
        %1916 = vmatpush1.bf16.xpose.msra.mxu0 0
        %1917 = vmatprep.subr.bf16.mxu0 0
        %1918 = vmatpush1.bf16.xpose.msra.mxu0 0
        %1919 = vmatprep.subr.bf16.mxu0 0
        %1920 = vmatpush1.bf16.xpose.msra.mxu0 0
        %1921 = vmatprep.subr.bf16.mxu0 0
        %1922 = vmatpush1.bf16.xpose.msra.mxu0 0
        %1923 = vmatprep.subr.bf16.mxu0 0
        %1924 = vmatpush1.bf16.xpose.msra.mxu0 0
        %1925 = vmatprep.mubr.bf16.mxu0 0
        %1926 = vmatmul.mubr.bf16.gmra.mrb[0].mxu0 %v1888
        %v1927 = vpop.f32.mrb[0].mxu0
        %v1928 = vadd.f32 %v1884, %v1927
        %v1929 = vpop.f32.mrb[0].mxu0
        %v1930 = vpop.f32.mrb[0].mxu0
        %v1931 = vadd.f32 %v1885, %v1930
        %v1932 = vpop.f32.mrb[0].mxu0
        %1933 = vdwg.mxu0
        %v1935 = vsel %vm1886, %v1746, 0
        %v1938 = vsel %vm1886, %v1870, 0
        %1940 = vmatprep.subr.bf16.mxu0 0
        %1941 = vmatpush1.bf16.xpose.msra.mxu0 %v1938
        %1942 = vmatprep.subr.bf16.mxu0 0
        %1943 = vmatpush1.bf16.xpose.msra.mxu0 0
        %1944 = vmatprep.subr.bf16.mxu0 0
        %1945 = vmatpush1.bf16.xpose.msra.mxu0 0
        %1946 = vmatprep.subr.bf16.mxu0 0
        %1947 = vmatpush1.bf16.xpose.msra.mxu0 0
        %1948 = vmatprep.subr.bf16.mxu0 0
        %1949 = vmatpush1.bf16.xpose.msra.mxu0 0
        %1950 = vmatprep.subr.bf16.mxu0 0
        %1951 = vmatpush1.bf16.xpose.msra.mxu0 0
        %1952 = vmatprep.subr.bf16.mxu0 0
        %1953 = vmatpush1.bf16.xpose.msra.mxu0 0
        %1954 = vmatprep.subr.bf16.mxu0 0
        %1955 = vmatpush1.bf16.xpose.msra.mxu0 0
        %1956 = vmatprep.subr.bf16.mxu0 0
        %1957 = vmatpush1.bf16.xpose.msra.mxu0 0
        %1958 = vmatprep.subr.bf16.mxu0 0
        %1959 = vmatpush1.bf16.xpose.msra.mxu0 0
        %1960 = vmatprep.subr.bf16.mxu0 0
        %1961 = vmatpush1.bf16.xpose.msra.mxu0 0
        %1962 = vmatprep.subr.bf16.mxu0 0
        %1963 = vmatpush1.bf16.xpose.msra.mxu0 0
        %1964 = vmatprep.subr.bf16.mxu0 0
        %1965 = vmatpush1.bf16.xpose.msra.mxu0 0
        %1966 = vmatprep.subr.bf16.mxu0 0
        %1967 = vmatpush1.bf16.xpose.msra.mxu0 0
        %1968 = vmatprep.subr.bf16.mxu0 0
        %1969 = vmatpush1.bf16.xpose.msra.mxu0 0
        %1970 = vmatprep.subr.bf16.mxu0 0
        %1971 = vmatpush1.bf16.xpose.msra.mxu0 0
        %1972 = vmatprep.mubr.bf16.mxu0 0
        %1973 = vmatmul.mubr.bf16.gmra.mrb[0].mxu0 %v1935
        %v1974 = vpop.f32.mrb[0].mxu0
        %v1975 = vadd.f32 %v1884, %v1974
        %v1976 = vpop.f32.mrb[0].mxu0
        %v1977 = vpop.f32.mrb[0].mxu0
        %v1978 = vadd.f32 %v1885, %v1977
        %v1979 = vpop.f32.mrb[0].mxu0
        %1980 = vdwg.mxu0
        %v1982 = vsel %vm1886, %v1747, 0
        %v1985 = vsel %vm1886, %v1871, 0
        %1987 = vmatprep.subr.bf16.mxu0 0
        %1988 = vmatpush1.bf16.xpose.msra.mxu0 %v1985
        %1989 = vmatprep.subr.bf16.mxu0 0
        %1990 = vmatpush1.bf16.xpose.msra.mxu0 0
        %1991 = vmatprep.subr.bf16.mxu0 0
        %1992 = vmatpush1.bf16.xpose.msra.mxu0 0
        %1993 = vmatprep.subr.bf16.mxu0 0
        %1994 = vmatpush1.bf16.xpose.msra.mxu0 0
        %1995 = vmatprep.subr.bf16.mxu0 0
        %1996 = vmatpush1.bf16.xpose.msra.mxu0 0
        %1997 = vmatprep.subr.bf16.mxu0 0
        %1998 = vmatpush1.bf16.xpose.msra.mxu0 0
        %1999 = vmatprep.subr.bf16.mxu0 0
        %2000 = vmatpush1.bf16.xpose.msra.mxu0 0
        %2001 = vmatprep.subr.bf16.mxu0 0
        %2002 = vmatpush1.bf16.xpose.msra.mxu0 0
        %2003 = vmatprep.subr.bf16.mxu0 0
        %2004 = vmatpush1.bf16.xpose.msra.mxu0 0
        %2005 = vmatprep.subr.bf16.mxu0 0
        %2006 = vmatpush1.bf16.xpose.msra.mxu0 0
        %2007 = vmatprep.subr.bf16.mxu0 0
        %2008 = vmatpush1.bf16.xpose.msra.mxu0 0
        %2009 = vmatprep.subr.bf16.mxu0 0
        %2010 = vmatpush1.bf16.xpose.msra.mxu0 0
        %2011 = vmatprep.subr.bf16.mxu0 0
        %2012 = vmatpush1.bf16.xpose.msra.mxu0 0
        %2013 = vmatprep.subr.bf16.mxu0 0
        %2014 = vmatpush1.bf16.xpose.msra.mxu0 0
        %2015 = vmatprep.subr.bf16.mxu0 0
        %2016 = vmatpush1.bf16.xpose.msra.mxu0 0
        %2017 = vmatprep.subr.bf16.mxu0 0
        %2018 = vmatpush1.bf16.xpose.msra.mxu0 0
        %2019 = vmatprep.mubr.bf16.mxu0 0
        %2020 = vmatmul.mubr.bf16.gmra.mrb[0].mxu0 %v1982
        %v2021 = vpop.f32.mrb[0].mxu0
        %v2022 = vadd.f32 %v1884, %v2021
        %v2023 = vpop.f32.mrb[0].mxu0
        %v2024 = vpop.f32.mrb[0].mxu0
        %v2025 = vadd.f32 %v1885, %v2024
        %v2026 = vpop.f32.mrb[0].mxu0
        %2027 = vdwg.mxu0
        %v2029 = vsel %vm1886, %v1748, 0
        %v2032 = vsel %vm1886, %v1872, 0
        %2034 = vmatprep.subr.bf16.mxu0 0
        %2035 = vmatpush1.bf16.xpose.msra.mxu0 %v2032
        %2036 = vmatprep.subr.bf16.mxu0 0
        %2037 = vmatpush1.bf16.xpose.msra.mxu0 0
        %2038 = vmatprep.subr.bf16.mxu0 0
        %2039 = vmatpush1.bf16.xpose.msra.mxu0 0
        %2040 = vmatprep.subr.bf16.mxu0 0
        %2041 = vmatpush1.bf16.xpose.msra.mxu0 0
        %2042 = vmatprep.subr.bf16.mxu0 0
        %2043 = vmatpush1.bf16.xpose.msra.mxu0 0
        %2044 = vmatprep.subr.bf16.mxu0 0
        %2045 = vmatpush1.bf16.xpose.msra.mxu0 0
        %2046 = vmatprep.subr.bf16.mxu0 0
        %2047 = vmatpush1.bf16.xpose.msra.mxu0 0
        %2048 = vmatprep.subr.bf16.mxu0 0
        %2049 = vmatpush1.bf16.xpose.msra.mxu0 0
        %2050 = vmatprep.subr.bf16.mxu0 0
        %2051 = vmatpush1.bf16.xpose.msra.mxu0 0
        %2052 = vmatprep.subr.bf16.mxu0 0
        %2053 = vmatpush1.bf16.xpose.msra.mxu0 0
        %2054 = vmatprep.subr.bf16.mxu0 0
        %2055 = vmatpush1.bf16.xpose.msra.mxu0 0
        %2056 = vmatprep.subr.bf16.mxu0 0
        %2057 = vmatpush1.bf16.xpose.msra.mxu0 0
        %2058 = vmatprep.subr.bf16.mxu0 0
        %2059 = vmatpush1.bf16.xpose.msra.mxu0 0
        %2060 = vmatprep.subr.bf16.mxu0 0
        %2061 = vmatpush1.bf16.xpose.msra.mxu0 0
        %2062 = vmatprep.subr.bf16.mxu0 0
        %2063 = vmatpush1.bf16.xpose.msra.mxu0 0
        %2064 = vmatprep.subr.bf16.mxu0 0
        %2065 = vmatpush1.bf16.xpose.msra.mxu0 0
        %2066 = vmatprep.mubr.bf16.mxu0 0
        %2067 = vmatmul.mubr.bf16.gmra.mrb[0].mxu0 %v2029
        %v2068 = vpop.f32.mrb[0].mxu0
        %v2069 = vadd.f32 %v1884, %v2068
        %v2070 = vpop.f32.mrb[0].mxu0
        %v2071 = vpop.f32.mrb[0].mxu0
        %v2072 = vadd.f32 %v1885, %v2071
        %v2073 = vpop.f32.mrb[0].mxu0
        %2074 = vdwg.mxu0
        %v2075 = vsel %vm1736, %v1928, -inf
        %2076 = vmax.xlane.f32.xlu0 %v2075
        %v2077 = vpop.xlane.xlu0 %2076
        %v2078 = vsel %vm1736, %v1931, -inf
        %2079 = vmax.xlane.f32.xlu0 %v2078
        %v2080 = vpop.xlane.xlu0 %2079
        %v2081 = vsel %vm1736, %v1975, -inf
        %2082 = vmax.xlane.f32.xlu0 %v2081
        %v2083 = vpop.xlane.xlu0 %2082
        %v2084 = vsel %vm1736, %v1978, -inf
        %2085 = vmax.xlane.f32.xlu0 %v2084
        %v2086 = vpop.xlane.xlu0 %2085
        %v2087 = vsel %vm1736, %v2022, -inf
        %2088 = vmax.xlane.f32.xlu0 %v2087
        %v2089 = vpop.xlane.xlu0 %2088
        %v2090 = vsel %vm1736, %v2025, -inf
        %2091 = vmax.xlane.f32.xlu0 %v2090
        %v2092 = vpop.xlane.xlu0 %2091
        %v2093 = vsel %vm1736, %v2069, -inf
        %2094 = vmax.xlane.f32.xlu0 %v2093
        %v2095 = vpop.xlane.xlu0 %2094
        %v2096 = vsel %vm1736, %v2072, -inf
        %2097 = vmax.xlane.f32.xlu0 %v2096
        %v2098 = vpop.xlane.xlu0 %2097
        %v2099 = vsub.f32 %v1928, %v2077
        %v2100 = vsub.f32 %v1931, %v2080
        %v2101 = vsub.f32 %v1975, %v2083
        %v2102 = vsub.f32 %v1978, %v2086
        %v2103 = vsub.f32 %v2022, %v2089
        %v2104 = vsub.f32 %v2025, %v2092
        %v2105 = vsub.f32 %v2069, %v2095
        %v2106 = vsub.f32 %v2072, %v2098
        %v2107 = vmul.f32 %v2099, 1.442695
        %v2108 = vpow.pop %v2107
        %v2109 = vmul.f32 %v2100, 1.442695
        %v2110 = vpow.pop %v2109
        %v2111 = vmul.f32 %v2101, 1.442695
        %v2112 = vpow.pop %v2111
        %v2113 = vmul.f32 %v2102, 1.442695
        %v2114 = vpow.pop %v2113
        %v2115 = vmul.f32 %v2103, 1.442695
        %v2116 = vpow.pop %v2115
        %v2117 = vmul.f32 %v2104, 1.442695
        %v2118 = vpow.pop %v2117
        %v2119 = vmul.f32 %v2105, 1.442695
        %v2120 = vpow.pop %v2119
        %v2121 = vmul.f32 %v2106, 1.442695
        %v2122 = vpow.pop %v2121
        %v2123 = vsel %vm1736, %v2108, 0.0
        %2124 = vadd.xlane.f32.xlu0 %v2123
        %v2125 = vpop.xlane.xlu0 %2124
        %v2126 = vsel %vm1736, %v2110, 0.0
        %2127 = vadd.xlane.f32.xlu0 %v2126
        %v2128 = vpop.xlane.xlu0 %2127
        %v2129 = vsel %vm1736, %v2112, 0.0
        %2130 = vadd.xlane.f32.xlu0 %v2129
        %v2131 = vpop.xlane.xlu0 %2130
        %v2132 = vsel %vm1736, %v2114, 0.0
        %2133 = vadd.xlane.f32.xlu0 %v2132
        %v2134 = vpop.xlane.xlu0 %2133
        %v2135 = vsel %vm1736, %v2116, 0.0
        %2136 = vadd.xlane.f32.xlu0 %v2135
        %v2137 = vpop.xlane.xlu0 %2136
        %v2138 = vsel %vm1736, %v2118, 0.0
        %2139 = vadd.xlane.f32.xlu0 %v2138
        %v2140 = vpop.xlane.xlu0 %2139
        %v2141 = vsel %vm1736, %v2120, 0.0
        %2142 = vadd.xlane.f32.xlu0 %v2141
        %v2143 = vpop.xlane.xlu0 %2142
        %v2144 = vsel %vm1736, %v2122, 0.0
        %2145 = vadd.xlane.f32.xlu0 %v2144
        %v2146 = vpop.xlane.xlu0 %2145
        %v2147 = vrcp.pop %v2125
        %v2148 = vrcp.pop %v2128
        %v2149 = vrcp.pop %v2131
        %v2150 = vrcp.pop %v2134
        %v2151 = vrcp.pop %v2137
        %v2152 = vrcp.pop %v2140
        %v2153 = vrcp.pop %v2143
        %v2154 = vrcp.pop %v2146
        %v2155 = vmul.f32 %v2108, %v2147
        %v2156 = vmul.f32 %v2110, %v2148
        %v2157 = vmul.f32 %v2112, %v2149
        %v2158 = vmul.f32 %v2114, %v2150
        %v2159 = vmul.f32 %v2116, %v2151
        %v2160 = vmul.f32 %v2118, %v2152
        %v2161 = vmul.f32 %v2120, %v2153
        %v2162 = vmul.f32 %v2122, %v2154
        %v2163 = vpack.c.bf16 %v2156, %v2155
        %v2164 = vpack.c.bf16 %v2158, %v2157
        %v2165 = vpack.c.bf16 %v2160, %v2159
        %v2166 = vpack.c.bf16 %v2162, %v2161
        %v2168 = vsel %vm1736, %v2163, 0
        %2170 = vmatprep.subr.bf16.mxu0 0
        %2171 = vmatpush1.bf16.msra.mxu0 %v1873
        %2172 = vmatprep.subr.bf16.mxu0 0
        %2173 = vmatpush1.bf16.msra.mxu0 0
        %2174 = vmatprep.subr.bf16.mxu0 0
        %2175 = vmatpush1.bf16.msra.mxu0 0
        %2176 = vmatprep.subr.bf16.mxu0 0
        %2177 = vmatpush1.bf16.msra.mxu0 0
        %2178 = vmatprep.subr.bf16.mxu0 0
        %2179 = vmatpush1.bf16.msra.mxu0 0
        %2180 = vmatprep.subr.bf16.mxu0 0
        %2181 = vmatpush1.bf16.msra.mxu0 0
        %2182 = vmatprep.subr.bf16.mxu0 0
        %2183 = vmatpush1.bf16.msra.mxu0 0
        %2184 = vmatprep.subr.bf16.mxu0 0
        %2185 = vmatpush1.bf16.msra.mxu0 0
        %2186 = vmatprep.subr.bf16.mxu0 0
        %2187 = vmatpush1.bf16.msra.mxu0 0
        %2188 = vmatprep.subr.bf16.mxu0 0
        %2189 = vmatpush1.bf16.msra.mxu0 0
        %2190 = vmatprep.subr.bf16.mxu0 0
        %2191 = vmatpush1.bf16.msra.mxu0 0
        %2192 = vmatprep.subr.bf16.mxu0 0
        %2193 = vmatpush1.bf16.msra.mxu0 0
        %2194 = vmatprep.subr.bf16.mxu0 0
        %2195 = vmatpush1.bf16.msra.mxu0 0
        %2196 = vmatprep.subr.bf16.mxu0 0
        %2197 = vmatpush1.bf16.msra.mxu0 0
        %2198 = vmatprep.subr.bf16.mxu0 0
        %2199 = vmatpush1.bf16.msra.mxu0 0
        %2200 = vmatprep.subr.bf16.mxu0 0
        %2201 = vmatpush1.bf16.msra.mxu0 0
        %2202 = vmatprep.mubr.bf16.mxu0 0
        %2203 = vmatmul.mubr.bf16.gmra.mrb[0].mxu0 %v2168
        %v2204 = vpop.f32.mrb[0].mxu0
        %v2205 = vadd.f32 0.0, %v2204
        %v2206 = vpop.f32.mrb[0].mxu0
        %v2207 = vpop.f32.mrb[0].mxu0
        %v2208 = vadd.f32 0.0, %v2207
        %v2209 = vpop.f32.mrb[0].mxu0
        %2210 = vdwg.mxu0
        %v2212 = vsel %vm1736, %v2164, 0
        %2214 = vmatprep.subr.bf16.mxu0 0
        %2215 = vmatpush1.bf16.msra.mxu0 %v1874
        %2216 = vmatprep.subr.bf16.mxu0 0
        %2217 = vmatpush1.bf16.msra.mxu0 0
        %2218 = vmatprep.subr.bf16.mxu0 0
        %2219 = vmatpush1.bf16.msra.mxu0 0
        %2220 = vmatprep.subr.bf16.mxu0 0
        %2221 = vmatpush1.bf16.msra.mxu0 0
        %2222 = vmatprep.subr.bf16.mxu0 0
        %2223 = vmatpush1.bf16.msra.mxu0 0
        %2224 = vmatprep.subr.bf16.mxu0 0
        %2225 = vmatpush1.bf16.msra.mxu0 0
        %2226 = vmatprep.subr.bf16.mxu0 0
        %2227 = vmatpush1.bf16.msra.mxu0 0
        %2228 = vmatprep.subr.bf16.mxu0 0
        %2229 = vmatpush1.bf16.msra.mxu0 0
        %2230 = vmatprep.subr.bf16.mxu0 0
        %2231 = vmatpush1.bf16.msra.mxu0 0
        %2232 = vmatprep.subr.bf16.mxu0 0
        %2233 = vmatpush1.bf16.msra.mxu0 0
        %2234 = vmatprep.subr.bf16.mxu0 0
        %2235 = vmatpush1.bf16.msra.mxu0 0
        %2236 = vmatprep.subr.bf16.mxu0 0
        %2237 = vmatpush1.bf16.msra.mxu0 0
        %2238 = vmatprep.subr.bf16.mxu0 0
        %2239 = vmatpush1.bf16.msra.mxu0 0
        %2240 = vmatprep.subr.bf16.mxu0 0
        %2241 = vmatpush1.bf16.msra.mxu0 0
        %2242 = vmatprep.subr.bf16.mxu0 0
        %2243 = vmatpush1.bf16.msra.mxu0 0
        %2244 = vmatprep.subr.bf16.mxu0 0
        %2245 = vmatpush1.bf16.msra.mxu0 0
        %2246 = vmatprep.mubr.bf16.mxu0 0
        %2247 = vmatmul.mubr.bf16.gmra.mrb[0].mxu0 %v2212
        %v2248 = vpop.f32.mrb[0].mxu0
        %v2249 = vadd.f32 0.0, %v2248
        %v2250 = vpop.f32.mrb[0].mxu0
        %v2251 = vpop.f32.mrb[0].mxu0
        %v2252 = vadd.f32 0.0, %v2251
        %v2253 = vpop.f32.mrb[0].mxu0
        %2254 = vdwg.mxu0
        %v2256 = vsel %vm1736, %v2165, 0
        %2258 = vmatprep.subr.bf16.mxu0 0
        %2259 = vmatpush1.bf16.msra.mxu0 %v1875
        %2260 = vmatprep.subr.bf16.mxu0 0
        %2261 = vmatpush1.bf16.msra.mxu0 0
        %2262 = vmatprep.subr.bf16.mxu0 0
        %2263 = vmatpush1.bf16.msra.mxu0 0
        %2264 = vmatprep.subr.bf16.mxu0 0
        %2265 = vmatpush1.bf16.msra.mxu0 0
        %2266 = vmatprep.subr.bf16.mxu0 0
        %2267 = vmatpush1.bf16.msra.mxu0 0
        %2268 = vmatprep.subr.bf16.mxu0 0
        %2269 = vmatpush1.bf16.msra.mxu0 0
        %2270 = vmatprep.subr.bf16.mxu0 0
        %2271 = vmatpush1.bf16.msra.mxu0 0
        %2272 = vmatprep.subr.bf16.mxu0 0
        %2273 = vmatpush1.bf16.msra.mxu0 0
        %2274 = vmatprep.subr.bf16.mxu0 0
        %2275 = vmatpush1.bf16.msra.mxu0 0
        %2276 = vmatprep.subr.bf16.mxu0 0
        %2277 = vmatpush1.bf16.msra.mxu0 0
        %2278 = vmatprep.subr.bf16.mxu0 0
        %2279 = vmatpush1.bf16.msra.mxu0 0
        %2280 = vmatprep.subr.bf16.mxu0 0
        %2281 = vmatpush1.bf16.msra.mxu0 0
        %2282 = vmatprep.subr.bf16.mxu0 0
        %2283 = vmatpush1.bf16.msra.mxu0 0
        %2284 = vmatprep.subr.bf16.mxu0 0
        %2285 = vmatpush1.bf16.msra.mxu0 0
        %2286 = vmatprep.subr.bf16.mxu0 0
        %2287 = vmatpush1.bf16.msra.mxu0 0
        %2288 = vmatprep.subr.bf16.mxu0 0
        %2289 = vmatpush1.bf16.msra.mxu0 0
        %2290 = vmatprep.mubr.bf16.mxu0 0
        %2291 = vmatmul.mubr.bf16.gmra.mrb[0].mxu0 %v2256
        %v2292 = vpop.f32.mrb[0].mxu0
        %v2293 = vadd.f32 0.0, %v2292
        %v2294 = vpop.f32.mrb[0].mxu0
        %v2295 = vpop.f32.mrb[0].mxu0
        %v2296 = vadd.f32 0.0, %v2295
        %v2297 = vpop.f32.mrb[0].mxu0
        %2298 = vdwg.mxu0
        %v2300 = vsel %vm1736, %v2166, 0
        %2302 = vmatprep.subr.bf16.mxu0 0
        %2303 = vmatpush1.bf16.msra.mxu0 %v1876
        %2304 = vmatprep.subr.bf16.mxu0 0
        %2305 = vmatpush1.bf16.msra.mxu0 0
        %2306 = vmatprep.subr.bf16.mxu0 0
        %2307 = vmatpush1.bf16.msra.mxu0 0
        %2308 = vmatprep.subr.bf16.mxu0 0
        %2309 = vmatpush1.bf16.msra.mxu0 0
        %2310 = vmatprep.subr.bf16.mxu0 0
        %2311 = vmatpush1.bf16.msra.mxu0 0
        %2312 = vmatprep.subr.bf16.mxu0 0
        %2313 = vmatpush1.bf16.msra.mxu0 0
        %2314 = vmatprep.subr.bf16.mxu0 0
        %2315 = vmatpush1.bf16.msra.mxu0 0
        %2316 = vmatprep.subr.bf16.mxu0 0
        %2317 = vmatpush1.bf16.msra.mxu0 0
        %2318 = vmatprep.subr.bf16.mxu0 0
        %2319 = vmatpush1.bf16.msra.mxu0 0
        %2320 = vmatprep.subr.bf16.mxu0 0
        %2321 = vmatpush1.bf16.msra.mxu0 0
        %2322 = vmatprep.subr.bf16.mxu0 0
        %2323 = vmatpush1.bf16.msra.mxu0 0
        %2324 = vmatprep.subr.bf16.mxu0 0
        %2325 = vmatpush1.bf16.msra.mxu0 0
        %2326 = vmatprep.subr.bf16.mxu0 0
        %2327 = vmatpush1.bf16.msra.mxu0 0
        %2328 = vmatprep.subr.bf16.mxu0 0
        %2329 = vmatpush1.bf16.msra.mxu0 0
        %2330 = vmatprep.subr.bf16.mxu0 0
        %2331 = vmatpush1.bf16.msra.mxu0 0
        %2332 = vmatprep.subr.bf16.mxu0 0
        %2333 = vmatpush1.bf16.msra.mxu0 0
        %2334 = vmatprep.mubr.bf16.mxu0 0
        %2335 = vmatmul.mubr.bf16.gmra.mrb[0].mxu0 %v2300
        %v2336 = vpop.f32.mrb[0].mxu0
        %v2337 = vadd.f32 0.0, %v2336
        %v2338 = vpop.f32.mrb[0].mxu0
        %v2339 = vpop.f32.mrb[0].mxu0
        %v2340 = vadd.f32 0.0, %v2339
        %v2341 = vpop.f32.mrb[0].mxu0
        %2342 = vdwg.mxu0
        %v2343 = vcombine.low %v2205, %v2293
        %v2344 = vcombine.high %v2205, %v2293
        %v2346 = vunpack.c.l.s4 1983009808
        %v2347 = vunpack.c.0.s8 %v2346
        %v2348 = vlaneseq
        %v2349 = vshrl.u32 %v2348, 7
        %v2350 = vsub.s32 %v2347, %v2349
        %v2351 = vrot.slane %v2343, %v2350
        %v2353 = vunpack.c.l.s4 1983009808
        %v2354 = vunpack.c.0.s8 %v2353
        %v2355 = vlaneseq
        %v2356 = vshrl.u32 %v2355, 7
        %v2357 = vsub.s32 %v2354, %v2356
        %v2358 = vrot.slane %v2344, %v2357
        %v2359 = vcombine.low %v2249, %v2337
        %v2360 = vcombine.high %v2249, %v2337
        %v2362 = vunpack.c.l.s4 1983009808
        %v2363 = vunpack.c.0.s8 %v2362
        %v2364 = vlaneseq
        %v2365 = vshrl.u32 %v2364, 7
        %v2366 = vsub.s32 %v2363, %v2365
        %v2367 = vrot.slane %v2359, %v2366
        %v2369 = vunpack.c.l.s4 1983009808
        %v2370 = vunpack.c.0.s8 %v2369
        %v2371 = vlaneseq
        %v2372 = vshrl.u32 %v2371, 7
        %v2373 = vsub.s32 %v2370, %v2372
        %v2374 = vrot.slane %v2360, %v2373
        %v2375 = vcombine.low %v2351, %v2367
        %v2376 = vcombine.high %v2351, %v2367
        %v2378 = vunpack.c.l.s4 1934713408
        %v2379 = vunpack.c.0.s8 %v2378
        %v2380 = vlaneseq
        %v2381 = vshrl.u32 %v2380, 7
        %v2382 = vsub.s32 %v2379, %v2381
        %v2383 = vrot.slane %v2375, %v2382
        %v2385 = vunpack.c.l.s4 1934713408
        %v2386 = vunpack.c.0.s8 %v2385
        %v2387 = vlaneseq
        %v2388 = vshrl.u32 %v2387, 7
        %v2389 = vsub.s32 %v2386, %v2388
        %v2390 = vrot.slane %v2376, %v2389
        %v2391 = vcombine.low %v2358, %v2374
        %v2392 = vcombine.high %v2358, %v2374
        %v2394 = vunpack.c.l.s4 1934713408
        %v2395 = vunpack.c.0.s8 %v2394
        %v2396 = vlaneseq
        %v2397 = vshrl.u32 %v2396, 7
        %v2398 = vsub.s32 %v2395, %v2397
        %v2399 = vrot.slane %v2391, %v2398
        %v2401 = vunpack.c.l.s4 1934713408
        %v2402 = vunpack.c.0.s8 %v2401
        %v2403 = vlaneseq
        %v2404 = vshrl.u32 %v2403, 7
        %v2405 = vsub.s32 %v2402, %v2404
        %v2406 = vrot.slane %v2392, %v2405
        %v2407 = vcombine.high %v2383, 0.0
        %v2408 = vcombine.high %v2390, 0.0
        %v2409 = vcombine.high %v2399, 0.0
        %v2410 = vcombine.high %v2406, 0.0
        %v2411 = vcombine.low %v2208, %v2296
        %v2412 = vcombine.high %v2208, %v2296
        %v2414 = vunpack.c.l.s4 1983009808
        %v2415 = vunpack.c.0.s8 %v2414
        %v2416 = vlaneseq
        %v2417 = vshrl.u32 %v2416, 7
        %v2418 = vsub.s32 %v2415, %v2417
        %v2419 = vrot.slane %v2411, %v2418
        %v2421 = vunpack.c.l.s4 1983009808
        %v2422 = vunpack.c.0.s8 %v2421
        %v2423 = vlaneseq
        %v2424 = vshrl.u32 %v2423, 7
        %v2425 = vsub.s32 %v2422, %v2424
        %v2426 = vrot.slane %v2412, %v2425
        %v2427 = vcombine.low %v2252, %v2340
        %v2428 = vcombine.high %v2252, %v2340
        %v2430 = vunpack.c.l.s4 1983009808
        %v2431 = vunpack.c.0.s8 %v2430
        %v2432 = vlaneseq
        %v2433 = vshrl.u32 %v2432, 7
        %v2434 = vsub.s32 %v2431, %v2433
        %v2435 = vrot.slane %v2427, %v2434
        %v2437 = vunpack.c.l.s4 1983009808
        %v2438 = vunpack.c.0.s8 %v2437
        %v2439 = vlaneseq
        %v2440 = vshrl.u32 %v2439, 7
        %v2441 = vsub.s32 %v2438, %v2440
        %v2442 = vrot.slane %v2428, %v2441
        %v2443 = vcombine.low %v2419, %v2435
        %v2444 = vcombine.high %v2419, %v2435
        %v2446 = vunpack.c.l.s4 1934713408
        %v2447 = vunpack.c.0.s8 %v2446
        %v2448 = vlaneseq
        %v2449 = vshrl.u32 %v2448, 7
        %v2450 = vsub.s32 %v2447, %v2449
        %v2451 = vrot.slane %v2443, %v2450
        %v2453 = vunpack.c.l.s4 1934713408
        %v2454 = vunpack.c.0.s8 %v2453
        %v2455 = vlaneseq
        %v2456 = vshrl.u32 %v2455, 7
        %v2457 = vsub.s32 %v2454, %v2456
        %v2458 = vrot.slane %v2444, %v2457
        %v2459 = vcombine.low %v2426, %v2442
        %v2460 = vcombine.high %v2426, %v2442
        %v2462 = vunpack.c.l.s4 1934713408
        %v2463 = vunpack.c.0.s8 %v2462
        %v2464 = vlaneseq
        %v2465 = vshrl.u32 %v2464, 7
        %v2466 = vsub.s32 %v2463, %v2465
        %v2467 = vrot.slane %v2459, %v2466
        %v2469 = vunpack.c.l.s4 1934713408
        %v2470 = vunpack.c.0.s8 %v2469
        %v2471 = vlaneseq
        %v2472 = vshrl.u32 %v2471, 7
        %v2473 = vsub.s32 %v2470, %v2472
        %v2474 = vrot.slane %v2460, %v2473
        %v2475 = vcombine.high %v2451, 0.0
        %v2476 = vcombine.high %v2458, 0.0
        %v2477 = vcombine.high %v2467, 0.0
        %v2478 = vcombine.high %v2474, 0.0
        %v2479 = vcombine.low %v2383, %v2390
        %v2481 = vunpack.c.l.s4 1983009808
        %v2482 = vunpack.c.0.s8 %v2481
        %v2483 = vlaneseq
        %v2484 = vshrl.u32 %v2483, 7
        %v2485 = vsub.s32 %v2482, %v2484
        %v2486 = vrot.slane %v2479, %v2485
        %v2487 = vcombine.low %v2407, %v2408
        %v2489 = vunpack.c.l.s4 1983009808
        %v2490 = vunpack.c.0.s8 %v2489
        %v2491 = vlaneseq
        %v2492 = vshrl.u32 %v2491, 7
        %v2493 = vsub.s32 %v2490, %v2492
        %v2494 = vrot.slane %v2487, %v2493
        %v2495 = vcombine.low %v2399, %v2406
        %v2497 = vunpack.c.l.s4 1983009808
        %v2498 = vunpack.c.0.s8 %v2497
        %v2499 = vlaneseq
        %v2500 = vshrl.u32 %v2499, 7
        %v2501 = vsub.s32 %v2498, %v2500
        %v2502 = vrot.slane %v2495, %v2501
        %v2503 = vcombine.low %v2409, %v2410
        %v2505 = vunpack.c.l.s4 1983009808
        %v2506 = vunpack.c.0.s8 %v2505
        %v2507 = vlaneseq
        %v2508 = vshrl.u32 %v2507, 7
        %v2509 = vsub.s32 %v2506, %v2508
        %v2510 = vrot.slane %v2503, %v2509
        %v2511 = vcombine.low %v2486, %v2494
        %v2512 = vcombine.high %v2486, %v2494
        %v2514 = vunpack.c.l.s4 1934713408
        %v2515 = vunpack.c.0.s8 %v2514
        %v2516 = vlaneseq
        %v2517 = vshrl.u32 %v2516, 7
        %v2518 = vsub.s32 %v2515, %v2517
        %v2519 = vrot.slane %v2511, %v2518
        %v2521 = vunpack.c.l.s4 1934713408
        %v2522 = vunpack.c.0.s8 %v2521
        %v2523 = vlaneseq
        %v2524 = vshrl.u32 %v2523, 7
        %v2525 = vsub.s32 %v2522, %v2524
        %v2526 = vrot.slane %v2512, %v2525
        %v2527 = vcombine.low %v2502, %v2510
        %v2528 = vcombine.high %v2502, %v2510
        %v2530 = vunpack.c.l.s4 1934713408
        %v2531 = vunpack.c.0.s8 %v2530
        %v2532 = vlaneseq
        %v2533 = vshrl.u32 %v2532, 7
        %v2534 = vsub.s32 %v2531, %v2533
        %v2535 = vrot.slane %v2527, %v2534
        %v2537 = vunpack.c.l.s4 1934713408
        %v2538 = vunpack.c.0.s8 %v2537
        %v2539 = vlaneseq
        %v2540 = vshrl.u32 %v2539, 7
        %v2541 = vsub.s32 %v2538, %v2540
        %v2542 = vrot.slane %v2528, %v2541
        %v2543 = vcombine.low %v2519, %v2535
        %v2544 = vcombine.high %v2519, %v2535
        %v2545 = vcombine.low %v2526, %v2542
        %v2546 = vcombine.high %v2526, %v2542
        %v2547 = vcombine.low %v2451, %v2458
        %v2549 = vunpack.c.l.s4 1983009808
        %v2550 = vunpack.c.0.s8 %v2549
        %v2551 = vlaneseq
        %v2552 = vshrl.u32 %v2551, 7
        %v2553 = vsub.s32 %v2550, %v2552
        %v2554 = vrot.slane %v2547, %v2553
        %v2555 = vcombine.low %v2475, %v2476
        %v2557 = vunpack.c.l.s4 1983009808
        %v2558 = vunpack.c.0.s8 %v2557
        %v2559 = vlaneseq
        %v2560 = vshrl.u32 %v2559, 7
        %v2561 = vsub.s32 %v2558, %v2560
        %v2562 = vrot.slane %v2555, %v2561
        %v2563 = vcombine.low %v2467, %v2474
        %v2565 = vunpack.c.l.s4 1983009808
        %v2566 = vunpack.c.0.s8 %v2565
        %v2567 = vlaneseq
        %v2568 = vshrl.u32 %v2567, 7
        %v2569 = vsub.s32 %v2566, %v2568
        %v2570 = vrot.slane %v2563, %v2569
        %v2571 = vcombine.low %v2477, %v2478
        %v2573 = vunpack.c.l.s4 1983009808
        %v2574 = vunpack.c.0.s8 %v2573
        %v2575 = vlaneseq
        %v2576 = vshrl.u32 %v2575, 7
        %v2577 = vsub.s32 %v2574, %v2576
        %v2578 = vrot.slane %v2571, %v2577
        %v2579 = vcombine.low %v2554, %v2562
        %v2580 = vcombine.high %v2554, %v2562
        %v2582 = vunpack.c.l.s4 1934713408
        %v2583 = vunpack.c.0.s8 %v2582
        %v2584 = vlaneseq
        %v2585 = vshrl.u32 %v2584, 7
        %v2586 = vsub.s32 %v2583, %v2585
        %v2587 = vrot.slane %v2579, %v2586
        %v2589 = vunpack.c.l.s4 1934713408
        %v2590 = vunpack.c.0.s8 %v2589
        %v2591 = vlaneseq
        %v2592 = vshrl.u32 %v2591, 7
        %v2593 = vsub.s32 %v2590, %v2592
        %v2594 = vrot.slane %v2580, %v2593
        %v2595 = vcombine.low %v2570, %v2578
        %v2596 = vcombine.high %v2570, %v2578
        %v2598 = vunpack.c.l.s4 1934713408
        %v2599 = vunpack.c.0.s8 %v2598
        %v2600 = vlaneseq
        %v2601 = vshrl.u32 %v2600, 7
        %v2602 = vsub.s32 %v2599, %v2601
        %v2603 = vrot.slane %v2595, %v2602
        %v2605 = vunpack.c.l.s4 1934713408
        %v2606 = vunpack.c.0.s8 %v2605
        %v2607 = vlaneseq
        %v2608 = vshrl.u32 %v2607, 7
        %v2609 = vsub.s32 %v2606, %v2608
        %v2610 = vrot.slane %v2596, %v2609
        %v2611 = vcombine.low %v2587, %v2603
        %v2612 = vcombine.high %v2587, %v2603
        %v2613 = vcombine.low %v2594, %v2610
        %v2614 = vcombine.high %v2594, %v2610
        %2617 = vrot.lane.b32.xlu0 %v2544, 32
        %v2618 = vpop.permute.xlu0 %2617
        %2619 = vrot.lane.b32.xlu0 %v2612, 32
        %v2620 = vpop.permute.xlu0 %2619
        %2625 = vrot.lane.b32.xlu0 %v2545, 64
        %v2626 = vpop.permute.xlu0 %2625
        %2627 = vrot.lane.b32.xlu0 %v2613, 64
        %v2628 = vpop.permute.xlu0 %2627
        %2633 = vrot.lane.b32.xlu0 %v2546, 96
        %v2634 = vpop.permute.xlu0 %2633
        %2635 = vrot.lane.b32.xlu0 %v2614, 96
        %v2636 = vpop.permute.xlu0 %2635
        %v2639 = vsel %vm1886, %v2543, %v2618
        %v2640 = vsel %vm1886, %v2611, %v2620
        %vm2641 = vcmask 523264
        %v2642 = vsel %vm2641, %v2639, %v2626
        %v2643 = vsel %vm2641, %v2640, %v2628
        %vm2644 = vcmask 785408
        %v2645 = vsel %vm2644, %v2642, %v2634
        %v2646 = vsel %vm2644, %v2643, %v2636
        %v2647 = vpack.c.bf16 %v2646, %v2645
        %v2648 = vld [vmem:[%s3] sm:$0xf]
        %v2649 = vld [vmem:[%s3 + $0x4] sm:$0xf]
        %v2650 = vld [vmem:[%s3 + $0x8] sm:$0xf]
        %v2651 = vld [vmem:[%s3 + $0xc] sm:$0xf]
        %v2652 = vld [vmem:[%s3 + $0x10] sm:$0xf]
        %v2653 = vld [vmem:[%s3 + $0x14] sm:$0xf]
        %v2654 = vld [vmem:[%s3 + $0x18] sm:$0xf]
        %v2655 = vld [vmem:[%s3 + $0x1c] sm:$0xf]
        %v2656 = vld [vmem:[%s3 + $0x20] sm:$0xf]
        %v2657 = vld [vmem:[%s3 + $0x24] sm:$0xf]
        %v2658 = vld [vmem:[%s3 + $0x28] sm:$0xf]
        %v2659 = vld [vmem:[%s3 + $0x2c] sm:$0xf]
        %v2660 = vld [vmem:[%s3 + $0x30] sm:$0xf]
        %v2661 = vld [vmem:[%s3 + $0x34] sm:$0xf]
        %v2662 = vld [vmem:[%s3 + $0x38] sm:$0xf]
        %v2663 = vld [vmem:[%s3 + $0x3c] sm:$0xf]
        %v2680 = vunpack.c.l.b16 %v2648
        %v2681 = vunpack.c.l.b16 %v2649
        %v2682 = vunpack.c.l.b16 %v2650
        %v2683 = vunpack.c.l.b16 %v2651
        %v2684 = vunpack.c.l.b16 %v2652
        %v2685 = vunpack.c.l.b16 %v2653
        %v2686 = vunpack.c.l.b16 %v2654
        %v2687 = vunpack.c.l.b16 %v2655
        %v2688 = vunpack.c.l.b16 %v2656
        %v2689 = vunpack.c.l.b16 %v2657
        %v2690 = vunpack.c.l.b16 %v2658
        %v2691 = vunpack.c.l.b16 %v2659
        %v2692 = vunpack.c.l.b16 %v2660
        %v2693 = vunpack.c.l.b16 %v2661
        %v2694 = vunpack.c.l.b16 %v2662
        %v2695 = vunpack.c.l.b16 %v2663
        %v2696 = vpack.c.b16 %v2681, %v2680
        %v2697 = vpack.c.b16 %v2683, %v2682
        %v2698 = vpack.c.b16 %v2685, %v2684
        %v2699 = vpack.c.b16 %v2687, %v2686
        %v2700 = vpack.c.b16 %v2689, %v2688
        %v2701 = vpack.c.b16 %v2691, %v2690
        %v2702 = vpack.c.b16 %v2693, %v2692
        %v2703 = vpack.c.b16 %v2695, %v2694
        %2712 = vmatprep.subr.bf16.mxu0 0
        %2713 = vmatpush1.bf16.msra.mxu0 %v2696
        %2714 = vmatprep.subr.bf16.mxu0 0
        %2715 = vmatpush1.bf16.msra.mxu0 %v2697
        %2716 = vmatprep.subr.bf16.mxu0 0
        %2717 = vmatpush1.bf16.msra.mxu0 %v2698
        %2718 = vmatprep.subr.bf16.mxu0 0
        %2719 = vmatpush1.bf16.msra.mxu0 %v2699
        %2720 = vmatprep.subr.bf16.mxu0 0
        %2721 = vmatpush1.bf16.msra.mxu0 %v2700
        %2722 = vmatprep.subr.bf16.mxu0 0
        %2723 = vmatpush1.bf16.msra.mxu0 %v2701
        %2724 = vmatprep.subr.bf16.mxu0 0
        %2725 = vmatpush1.bf16.msra.mxu0 %v2702
        %2726 = vmatprep.subr.bf16.mxu0 0
        %2727 = vmatpush1.bf16.msra.mxu0 %v2703
        %2728 = vmatprep.subr.bf16.mxu0 0
        %2729 = vmatpush1.bf16.msra.mxu0 0
        %2730 = vmatprep.subr.bf16.mxu0 0
        %2731 = vmatpush1.bf16.msra.mxu0 0
        %2732 = vmatprep.subr.bf16.mxu0 0
        %2733 = vmatpush1.bf16.msra.mxu0 0
        %2734 = vmatprep.subr.bf16.mxu0 0
        %2735 = vmatpush1.bf16.msra.mxu0 0
        %2736 = vmatprep.subr.bf16.mxu0 0
        %2737 = vmatpush1.bf16.msra.mxu0 0
        %2738 = vmatprep.subr.bf16.mxu0 0
        %2739 = vmatpush1.bf16.msra.mxu0 0
        %2740 = vmatprep.subr.bf16.mxu0 0
        %2741 = vmatpush1.bf16.msra.mxu0 0
        %2742 = vmatprep.subr.bf16.mxu0 0
        %2743 = vmatpush1.bf16.msra.mxu0 0
        %2744 = vmatprep.mubr.bf16.mxu0 0
        %2745 = vmatmul.mubr.bf16.gmra.mrb[0].mxu0 %v2647
        %v2746 = vpop.f32.mrb[0].mxu0
        %v2747 = vadd.f32 0.0, %v2746
        %v2748 = vpop.f32.mrb[0].mxu0
        %v2749 = vpop.f32.mrb[0].mxu0
        %v2750 = vadd.f32 0.0, %v2749
        %v2751 = vpop.f32.mrb[0].mxu0
        %2752 = vdwg.mxu0
        %v2753 = vadd.f32 %v359, %v2747
        %v2754 = vadd.f32 %v360, %v2750
        %v2755 = vld [vmem:[%s6] sm:$0x1]
        %v2756 = vmul.f32 %v2753, %v2753
        %v2757 = vmul.f32 %v2754, %v2754
        %2758 = vadd.xlane.f32.xlu0 %v2756
        %v2759 = vpop.xlane.xlu0 %2758
        %2760 = vadd.xlane.f32.xlu0 %v2757
        %v2761 = vpop.xlane.xlu0 %2760
        %v2762 = vmul.f32 %v2759, %v368
        %v2763 = vmul.f32 %v2761, %v368
        %v2764 = vadd.f32 %v2762, 1.1920929e-07
        %v2765 = vadd.f32 %v2763, 1.1920929e-07
        %v2766 = vrsqrt.pop %v2764
        %v2767 = vrsqrt.pop %v2765
        %v2768 = vmul.f32 %v2753, %v2766
        %v2769 = vmul.f32 %v2754, %v2767
        %v2771 = vlaneseq
        %v2772 = vshrl.u32 %v2771, 7
        %v2773 = vsub.s32 0, %v2772
        %v2774 = vrot.slane %v2755, %v2773
        %v2776 = vmul.f32 %v2768, %v2774
        %v2777 = vmul.f32 %v2769, %v2774
        %v2778 = vpack.c.bf16 %v2777, %v2776
        %v2779 = vld [vmem:[%s7] sm:$0xff]
        %v2780 = vld [vmem:[%s7 + $0x8] sm:$0xf]
        %v2781 = vld [vmem:[%s7 + $0xc] sm:$0xff]
        %v2782 = vld [vmem:[%s7 + $0x14] sm:$0xf]
        %v2783 = vld [vmem:[%s7 + $0x18] sm:$0xff]
        %v2784 = vld [vmem:[%s7 + $0x20] sm:$0xf]
        %v2785 = vld [vmem:[%s7 + $0x24] sm:$0xff]
        %v2786 = vld [vmem:[%s7 + $0x2c] sm:$0xf]
        %v2787 = vld [vmem:[%s7 + $0x30] sm:$0xff]
        %v2788 = vld [vmem:[%s7 + $0x38] sm:$0xf]
        %v2789 = vld [vmem:[%s7 + $0x3c] sm:$0xff]
        %v2790 = vld [vmem:[%s7 + $0x44] sm:$0xf]
        %v2791 = vld [vmem:[%s7 + $0x48] sm:$0xff]
        %v2792 = vld [vmem:[%s7 + $0x50] sm:$0xf]
        %v2793 = vld [vmem:[%s7 + $0x54] sm:$0xff]
        %v2794 = vld [vmem:[%s7 + $0x5c] sm:$0xf]
        %v2795 = vld [vmem:[%s7 + $0x60] sm:$0xff]
        %v2796 = vld [vmem:[%s7 + $0x68] sm:$0xf]
        %v2797 = vld [vmem:[%s7 + $0x6c] sm:$0xff]
        %v2798 = vld [vmem:[%s7 + $0x74] sm:$0xf]
        %v2799 = vld [vmem:[%s7 + $0x78] sm:$0xff]
        %v2800 = vld [vmem:[%s7 + $0x80] sm:$0xf]
        %v2801 = vld [vmem:[%s7 + $0x84] sm:$0xff]
        %v2802 = vld [vmem:[%s7 + $0x8c] sm:$0xf]
        %v2803 = vld [vmem:[%s7 + $0x90] sm:$0xff]
        %v2804 = vld [vmem:[%s7 + $0x98] sm:$0xf]
        %v2805 = vld [vmem:[%s7 + $0x9c] sm:$0xff]
        %v2806 = vld [vmem:[%s7 + $0xa4] sm:$0xf]
        %v2807 = vld [vmem:[%s7 + $0xa8] sm:$0xff]
        %v2808 = vld [vmem:[%s7 + $0xb0] sm:$0xf]
        %v2809 = vld [vmem:[%s7 + $0xb4] sm:$0xff]
        %v2810 = vld [vmem:[%s7 + $0xbc] sm:$0xf]
        %v2843 = vunpack.c.l.b16 %v2779
        %v2844 = vunpack.c.h.b16 %v2779
        %v2845 = vunpack.c.l.b16 %v2780
        %v2846 = vunpack.c.l.b16 %v2781
        %v2847 = vunpack.c.h.b16 %v2781
        %v2848 = vunpack.c.l.b16 %v2782
        %v2849 = vunpack.c.l.b16 %v2783
        %v2850 = vunpack.c.h.b16 %v2783
        %v2851 = vunpack.c.l.b16 %v2784
        %v2852 = vunpack.c.l.b16 %v2785
        %v2853 = vunpack.c.h.b16 %v2785
        %v2854 = vunpack.c.l.b16 %v2786
        %v2855 = vunpack.c.l.b16 %v2787
        %v2856 = vunpack.c.h.b16 %v2787
        %v2857 = vunpack.c.l.b16 %v2788
        %v2858 = vunpack.c.l.b16 %v2789
        %v2859 = vunpack.c.h.b16 %v2789
        %v2860 = vunpack.c.l.b16 %v2790
        %v2861 = vunpack.c.l.b16 %v2791
        %v2862 = vunpack.c.h.b16 %v2791
        %v2863 = vunpack.c.l.b16 %v2792
        %v2864 = vunpack.c.l.b16 %v2793
        %v2865 = vunpack.c.h.b16 %v2793
        %v2866 = vunpack.c.l.b16 %v2794
        %v2867 = vunpack.c.l.b16 %v2795
        %v2868 = vunpack.c.h.b16 %v2795
        %v2869 = vunpack.c.l.b16 %v2796
        %v2870 = vunpack.c.l.b16 %v2797
        %v2871 = vunpack.c.h.b16 %v2797
        %v2872 = vunpack.c.l.b16 %v2798
        %v2873 = vunpack.c.l.b16 %v2799
        %v2874 = vunpack.c.h.b16 %v2799
        %v2875 = vunpack.c.l.b16 %v2800
        %v2876 = vunpack.c.l.b16 %v2801
        %v2877 = vunpack.c.h.b16 %v2801
        %v2878 = vunpack.c.l.b16 %v2802
        %v2879 = vunpack.c.l.b16 %v2803
        %v2880 = vunpack.c.h.b16 %v2803
        %v2881 = vunpack.c.l.b16 %v2804
        %v2882 = vunpack.c.l.b16 %v2805
        %v2883 = vunpack.c.h.b16 %v2805
        %v2884 = vunpack.c.l.b16 %v2806
        %v2885 = vunpack.c.l.b16 %v2807
        %v2886 = vunpack.c.h.b16 %v2807
        %v2887 = vunpack.c.l.b16 %v2808
        %v2888 = vunpack.c.l.b16 %v2809
        %v2889 = vunpack.c.h.b16 %v2809
        %v2890 = vunpack.c.l.b16 %v2810
        %v2891 = vpack.c.b16 %v2846, %v2843
        %v2892 = vpack.c.b16 %v2847, %v2844
        %v2893 = vpack.c.b16 %v2848, %v2845
        %v2894 = vpack.c.b16 %v2852, %v2849
        %v2895 = vpack.c.b16 %v2853, %v2850
        %v2896 = vpack.c.b16 %v2854, %v2851
        %v2897 = vpack.c.b16 %v2858, %v2855
        %v2898 = vpack.c.b16 %v2859, %v2856
        %v2899 = vpack.c.b16 %v2860, %v2857
        %v2900 = vpack.c.b16 %v2864, %v2861
        %v2901 = vpack.c.b16 %v2865, %v2862
        %v2902 = vpack.c.b16 %v2866, %v2863
        %v2903 = vpack.c.b16 %v2870, %v2867
        %v2904 = vpack.c.b16 %v2871, %v2868
        %v2905 = vpack.c.b16 %v2872, %v2869
        %v2906 = vpack.c.b16 %v2876, %v2873
        %v2907 = vpack.c.b16 %v2877, %v2874
        %v2908 = vpack.c.b16 %v2878, %v2875
        %v2909 = vpack.c.b16 %v2882, %v2879
        %v2910 = vpack.c.b16 %v2883, %v2880
        %v2911 = vpack.c.b16 %v2884, %v2881
        %v2912 = vpack.c.b16 %v2888, %v2885
        %v2913 = vpack.c.b16 %v2889, %v2886
        %v2914 = vpack.c.b16 %v2890, %v2887
        %2939 = vmatprep.subr.bf16.mxu0 %v2892
        %2940 = vmatpush1.bf16.msra.mxu0 %v2891
        %2941 = vmatprep.subr.bf16.mxu0 %v2895
        %2942 = vmatpush1.bf16.msra.mxu0 %v2894
        %2943 = vmatprep.subr.bf16.mxu0 %v2898
        %2944 = vmatpush1.bf16.msra.mxu0 %v2897
        %2945 = vmatprep.subr.bf16.mxu0 %v2901
        %2946 = vmatpush1.bf16.msra.mxu0 %v2900
        %2947 = vmatprep.subr.bf16.mxu0 %v2904
        %2948 = vmatpush1.bf16.msra.mxu0 %v2903
        %2949 = vmatprep.subr.bf16.mxu0 %v2907
        %2950 = vmatpush1.bf16.msra.mxu0 %v2906
        %2951 = vmatprep.subr.bf16.mxu0 %v2910
        %2952 = vmatpush1.bf16.msra.mxu0 %v2909
        %2953 = vmatprep.subr.bf16.mxu0 %v2913
        %2954 = vmatpush1.bf16.msra.mxu0 %v2912
        %2955 = vmatprep.subr.bf16.mxu0 0
        %2956 = vmatpush1.bf16.msra.mxu0 0
        %2957 = vmatprep.subr.bf16.mxu0 0
        %2958 = vmatpush1.bf16.msra.mxu0 0
        %2959 = vmatprep.subr.bf16.mxu0 0
        %2960 = vmatpush1.bf16.msra.mxu0 0
        %2961 = vmatprep.subr.bf16.mxu0 0
        %2962 = vmatpush1.bf16.msra.mxu0 0
        %2963 = vmatprep.subr.bf16.mxu0 0
        %2964 = vmatpush1.bf16.msra.mxu0 0
        %2965 = vmatprep.subr.bf16.mxu0 0
        %2966 = vmatpush1.bf16.msra.mxu0 0
        %2967 = vmatprep.subr.bf16.mxu0 0
        %2968 = vmatpush1.bf16.msra.mxu0 0
        %2969 = vmatprep.subr.bf16.mxu0 0
        %2970 = vmatpush1.bf16.msra.mxu0 0
        %2971 = vmatprep.mubr.bf16.mxu0 0
        %2972 = vmatmul.mubr.bf16.gmra.mrb[0].mxu0 %v2778
        %v2973 = vpop.f32.mrb[0].mxu0
        %v2974 = vadd.f32 0.0, %v2973
        %v2975 = vpop.f32.mrb[0].mxu0
        %v2976 = vadd.f32 0.0, %v2975
        %v2977 = vpop.f32.mrb[0].mxu0
        %v2978 = vadd.f32 0.0, %v2977
        %v2979 = vpop.f32.mrb[0].mxu0
        %v2980 = vadd.f32 0.0, %v2979
        %2981 = vdwg.mxu0
        %2982 = vmatprep.subr.bf16.mxu0 0
        %2983 = vmatpush1.bf16.msra.mxu0 %v2893
        %2984 = vmatprep.subr.bf16.mxu0 0
        %2985 = vmatpush1.bf16.msra.mxu0 %v2896
        %2986 = vmatprep.subr.bf16.mxu0 0
        %2987 = vmatpush1.bf16.msra.mxu0 %v2899
        %2988 = vmatprep.subr.bf16.mxu0 0
        %2989 = vmatpush1.bf16.msra.mxu0 %v2902
        %2990 = vmatprep.subr.bf16.mxu0 0
        %2991 = vmatpush1.bf16.msra.mxu0 %v2905
        %2992 = vmatprep.subr.bf16.mxu0 0
        %2993 = vmatpush1.bf16.msra.mxu0 %v2908
        %2994 = vmatprep.subr.bf16.mxu0 0
        %2995 = vmatpush1.bf16.msra.mxu0 %v2911
        %2996 = vmatprep.subr.bf16.mxu0 0
        %2997 = vmatpush1.bf16.msra.mxu0 %v2914
        %2998 = vmatprep.subr.bf16.mxu0 0
        %2999 = vmatpush1.bf16.msra.mxu0 0
        %3000 = vmatprep.subr.bf16.mxu0 0
        %3001 = vmatpush1.bf16.msra.mxu0 0
        %3002 = vmatprep.subr.bf16.mxu0 0
        %3003 = vmatpush1.bf16.msra.mxu0 0
        %3004 = vmatprep.subr.bf16.mxu0 0
        %3005 = vmatpush1.bf16.msra.mxu0 0
        %3006 = vmatprep.subr.bf16.mxu0 0
        %3007 = vmatpush1.bf16.msra.mxu0 0
        %3008 = vmatprep.subr.bf16.mxu0 0
        %3009 = vmatpush1.bf16.msra.mxu0 0
        %3010 = vmatprep.subr.bf16.mxu0 0
        %3011 = vmatpush1.bf16.msra.mxu0 0
        %3012 = vmatprep.subr.bf16.mxu0 0
        %3013 = vmatpush1.bf16.msra.mxu0 0
        %3014 = vmatprep.mubr.bf16.mxu0 0
        %3015 = vmatmul.mubr.bf16.gmra.mrb[0].mxu0 %v2778
        %v3016 = vpop.f32.mrb[0].mxu0
        %v3017 = vadd.f32 0.0, %v3016
        %v3018 = vpop.f32.mrb[0].mxu0
        %v3019 = vpop.f32.mrb[0].mxu0
        %v3020 = vadd.f32 0.0, %v3019
        %v3021 = vpop.f32.mrb[0].mxu0
        %3022 = vdwg.mxu0
        %v3023 = vld [vmem:[%s8] sm:$0xff]
        %v3024 = vld [vmem:[%s8 + $0x8] sm:$0xf]
        %v3025 = vld [vmem:[%s8 + $0xc] sm:$0xff]
        %v3026 = vld [vmem:[%s8 + $0x14] sm:$0xf]
        %v3027 = vld [vmem:[%s8 + $0x18] sm:$0xff]
        %v3028 = vld [vmem:[%s8 + $0x20] sm:$0xf]
        %v3029 = vld [vmem:[%s8 + $0x24] sm:$0xff]
        %v3030 = vld [vmem:[%s8 + $0x2c] sm:$0xf]
        %v3031 = vld [vmem:[%s8 + $0x30] sm:$0xff]
        %v3032 = vld [vmem:[%s8 + $0x38] sm:$0xf]
        %v3033 = vld [vmem:[%s8 + $0x3c] sm:$0xff]
        %v3034 = vld [vmem:[%s8 + $0x44] sm:$0xf]
        %v3035 = vld [vmem:[%s8 + $0x48] sm:$0xff]
        %v3036 = vld [vmem:[%s8 + $0x50] sm:$0xf]
        %v3037 = vld [vmem:[%s8 + $0x54] sm:$0xff]
        %v3038 = vld [vmem:[%s8 + $0x5c] sm:$0xf]
        %v3039 = vld [vmem:[%s8 + $0x60] sm:$0xff]
        %v3040 = vld [vmem:[%s8 + $0x68] sm:$0xf]
        %v3041 = vld [vmem:[%s8 + $0x6c] sm:$0xff]
        %v3042 = vld [vmem:[%s8 + $0x74] sm:$0xf]
        %v3043 = vld [vmem:[%s8 + $0x78] sm:$0xff]
        %v3044 = vld [vmem:[%s8 + $0x80] sm:$0xf]
        %v3045 = vld [vmem:[%s8 + $0x84] sm:$0xff]
        %v3046 = vld [vmem:[%s8 + $0x8c] sm:$0xf]
        %v3047 = vld [vmem:[%s8 + $0x90] sm:$0xff]
        %v3048 = vld [vmem:[%s8 + $0x98] sm:$0xf]
        %v3049 = vld [vmem:[%s8 + $0x9c] sm:$0xff]
        %v3050 = vld [vmem:[%s8 + $0xa4] sm:$0xf]
        %v3051 = vld [vmem:[%s8 + $0xa8] sm:$0xff]
        %v3052 = vld [vmem:[%s8 + $0xb0] sm:$0xf]
        %v3053 = vld [vmem:[%s8 + $0xb4] sm:$0xff]
        %v3054 = vld [vmem:[%s8 + $0xbc] sm:$0xf]
        %v3087 = vunpack.c.l.b16 %v3023
        %v3088 = vunpack.c.h.b16 %v3023
        %v3089 = vunpack.c.l.b16 %v3024
        %v3090 = vunpack.c.l.b16 %v3025
        %v3091 = vunpack.c.h.b16 %v3025
        %v3092 = vunpack.c.l.b16 %v3026
        %v3093 = vunpack.c.l.b16 %v3027
        %v3094 = vunpack.c.h.b16 %v3027
        %v3095 = vunpack.c.l.b16 %v3028
        %v3096 = vunpack.c.l.b16 %v3029
        %v3097 = vunpack.c.h.b16 %v3029
        %v3098 = vunpack.c.l.b16 %v3030
        %v3099 = vunpack.c.l.b16 %v3031
        %v3100 = vunpack.c.h.b16 %v3031
        %v3101 = vunpack.c.l.b16 %v3032
        %v3102 = vunpack.c.l.b16 %v3033
        %v3103 = vunpack.c.h.b16 %v3033
        %v3104 = vunpack.c.l.b16 %v3034
        %v3105 = vunpack.c.l.b16 %v3035
        %v3106 = vunpack.c.h.b16 %v3035
        %v3107 = vunpack.c.l.b16 %v3036
        %v3108 = vunpack.c.l.b16 %v3037
        %v3109 = vunpack.c.h.b16 %v3037
        %v3110 = vunpack.c.l.b16 %v3038
        %v3111 = vunpack.c.l.b16 %v3039
        %v3112 = vunpack.c.h.b16 %v3039
        %v3113 = vunpack.c.l.b16 %v3040
        %v3114 = vunpack.c.l.b16 %v3041
        %v3115 = vunpack.c.h.b16 %v3041
        %v3116 = vunpack.c.l.b16 %v3042
        %v3117 = vunpack.c.l.b16 %v3043
        %v3118 = vunpack.c.h.b16 %v3043
        %v3119 = vunpack.c.l.b16 %v3044
        %v3120 = vunpack.c.l.b16 %v3045
        %v3121 = vunpack.c.h.b16 %v3045
        %v3122 = vunpack.c.l.b16 %v3046
        %v3123 = vunpack.c.l.b16 %v3047
        %v3124 = vunpack.c.h.b16 %v3047
        %v3125 = vunpack.c.l.b16 %v3048
        %v3126 = vunpack.c.l.b16 %v3049
        %v3127 = vunpack.c.h.b16 %v3049
        %v3128 = vunpack.c.l.b16 %v3050
        %v3129 = vunpack.c.l.b16 %v3051
        %v3130 = vunpack.c.h.b16 %v3051
        %v3131 = vunpack.c.l.b16 %v3052
        %v3132 = vunpack.c.l.b16 %v3053
        %v3133 = vunpack.c.h.b16 %v3053
        %v3134 = vunpack.c.l.b16 %v3054
        %v3135 = vpack.c.b16 %v3090, %v3087
        %v3136 = vpack.c.b16 %v3091, %v3088
        %v3137 = vpack.c.b16 %v3092, %v3089
        %v3138 = vpack.c.b16 %v3096, %v3093
        %v3139 = vpack.c.b16 %v3097, %v3094
        %v3140 = vpack.c.b16 %v3098, %v3095
        %v3141 = vpack.c.b16 %v3102, %v3099
        %v3142 = vpack.c.b16 %v3103, %v3100
        %v3143 = vpack.c.b16 %v3104, %v3101
        %v3144 = vpack.c.b16 %v3108, %v3105
        %v3145 = vpack.c.b16 %v3109, %v3106
        %v3146 = vpack.c.b16 %v3110, %v3107
        %v3147 = vpack.c.b16 %v3114, %v3111
        %v3148 = vpack.c.b16 %v3115, %v3112
        %v3149 = vpack.c.b16 %v3116, %v3113
        %v3150 = vpack.c.b16 %v3120, %v3117
        %v3151 = vpack.c.b16 %v3121, %v3118
        %v3152 = vpack.c.b16 %v3122, %v3119
        %v3153 = vpack.c.b16 %v3126, %v3123
        %v3154 = vpack.c.b16 %v3127, %v3124
        %v3155 = vpack.c.b16 %v3128, %v3125
        %v3156 = vpack.c.b16 %v3132, %v3129
        %v3157 = vpack.c.b16 %v3133, %v3130
        %v3158 = vpack.c.b16 %v3134, %v3131
        %3183 = vmatprep.subr.bf16.mxu0 %v3136
        %3184 = vmatpush1.bf16.msra.mxu0 %v3135
        %3185 = vmatprep.subr.bf16.mxu0 %v3139
        %3186 = vmatpush1.bf16.msra.mxu0 %v3138
        %3187 = vmatprep.subr.bf16.mxu0 %v3142
        %3188 = vmatpush1.bf16.msra.mxu0 %v3141
        %3189 = vmatprep.subr.bf16.mxu0 %v3145
        %3190 = vmatpush1.bf16.msra.mxu0 %v3144
        %3191 = vmatprep.subr.bf16.mxu0 %v3148
        %3192 = vmatpush1.bf16.msra.mxu0 %v3147
        %3193 = vmatprep.subr.bf16.mxu0 %v3151
        %3194 = vmatpush1.bf16.msra.mxu0 %v3150
        %3195 = vmatprep.subr.bf16.mxu0 %v3154
        %3196 = vmatpush1.bf16.msra.mxu0 %v3153
        %3197 = vmatprep.subr.bf16.mxu0 %v3157
        %3198 = vmatpush1.bf16.msra.mxu0 %v3156
        %3199 = vmatprep.subr.bf16.mxu0 0
        %3200 = vmatpush1.bf16.msra.mxu0 0
        %3201 = vmatprep.subr.bf16.mxu0 0
        %3202 = vmatpush1.bf16.msra.mxu0 0
        %3203 = vmatprep.subr.bf16.mxu0 0
        %3204 = vmatpush1.bf16.msra.mxu0 0
        %3205 = vmatprep.subr.bf16.mxu0 0
        %3206 = vmatpush1.bf16.msra.mxu0 0
        %3207 = vmatprep.subr.bf16.mxu0 0
        %3208 = vmatpush1.bf16.msra.mxu0 0
        %3209 = vmatprep.subr.bf16.mxu0 0
        %3210 = vmatpush1.bf16.msra.mxu0 0
        %3211 = vmatprep.subr.bf16.mxu0 0
        %3212 = vmatpush1.bf16.msra.mxu0 0
        %3213 = vmatprep.subr.bf16.mxu0 0
        %3214 = vmatpush1.bf16.msra.mxu0 0
        %3215 = vmatprep.mubr.bf16.mxu0 0
        %3216 = vmatmul.mubr.bf16.gmra.mrb[0].mxu0 %v2778
        %v3217 = vpop.f32.mrb[0].mxu0
        %v3218 = vadd.f32 0.0, %v3217
        %v3219 = vpop.f32.mrb[0].mxu0
        %v3220 = vadd.f32 0.0, %v3219
        %v3221 = vpop.f32.mrb[0].mxu0
        %v3222 = vadd.f32 0.0, %v3221
        %v3223 = vpop.f32.mrb[0].mxu0
        %v3224 = vadd.f32 0.0, %v3223
        %3225 = vdwg.mxu0
        %3226 = vmatprep.subr.bf16.mxu0 0
        %3227 = vmatpush1.bf16.msra.mxu0 %v3137
        %3228 = vmatprep.subr.bf16.mxu0 0
        %3229 = vmatpush1.bf16.msra.mxu0 %v3140
        %3230 = vmatprep.subr.bf16.mxu0 0
        %3231 = vmatpush1.bf16.msra.mxu0 %v3143
        %3232 = vmatprep.subr.bf16.mxu0 0
        %3233 = vmatpush1.bf16.msra.mxu0 %v3146
        %3234 = vmatprep.subr.bf16.mxu0 0
        %3235 = vmatpush1.bf16.msra.mxu0 %v3149
        %3236 = vmatprep.subr.bf16.mxu0 0
        %3237 = vmatpush1.bf16.msra.mxu0 %v3152
        %3238 = vmatprep.subr.bf16.mxu0 0
        %3239 = vmatpush1.bf16.msra.mxu0 %v3155
        %3240 = vmatprep.subr.bf16.mxu0 0
        %3241 = vmatpush1.bf16.msra.mxu0 %v3158
        %3242 = vmatprep.subr.bf16.mxu0 0
        %3243 = vmatpush1.bf16.msra.mxu0 0
        %3244 = vmatprep.subr.bf16.mxu0 0
        %3245 = vmatpush1.bf16.msra.mxu0 0
        %3246 = vmatprep.subr.bf16.mxu0 0
        %3247 = vmatpush1.bf16.msra.mxu0 0
        %3248 = vmatprep.subr.bf16.mxu0 0
        %3249 = vmatpush1.bf16.msra.mxu0 0
        %3250 = vmatprep.subr.bf16.mxu0 0
        %3251 = vmatpush1.bf16.msra.mxu0 0
        %3252 = vmatprep.subr.bf16.mxu0 0
        %3253 = vmatpush1.bf16.msra.mxu0 0
        %3254 = vmatprep.subr.bf16.mxu0 0
        %3255 = vmatpush1.bf16.msra.mxu0 0
        %3256 = vmatprep.subr.bf16.mxu0 0
        %3257 = vmatpush1.bf16.msra.mxu0 0
        %3258 = vmatprep.mubr.bf16.mxu0 0
        %3259 = vmatmul.mubr.bf16.gmra.mrb[0].mxu0 %v2778
        %v3260 = vpop.f32.mrb[0].mxu0
        %v3261 = vadd.f32 0.0, %v3260
        %v3262 = vpop.f32.mrb[0].mxu0
        %v3263 = vpop.f32.mrb[0].mxu0
        %v3264 = vadd.f32 0.0, %v3263
        %v3265 = vpop.f32.mrb[0].mxu0
        %3266 = vdwg.mxu0
        %v3267 = vxor.u32 %v2974, 2147483648
        %v3268 = vxor.u32 %v2976, 2147483648
        %v3269 = vxor.u32 %v3017, 2147483648
        %v3270 = vxor.u32 %v2978, 2147483648
        %v3271 = vxor.u32 %v2980, 2147483648
        %v3272 = vxor.u32 %v3020, 2147483648
        %v3273 = vmul.f32 %v3267, 1.442695
        %v3274 = vpow.pop %v3273
        %v3275 = vmul.f32 %v3268, 1.442695
        %v3276 = vpow.pop %v3275
        %v3277 = vmul.f32 %v3269, 1.442695
        %v3278 = vpow.pop %v3277
        %v3279 = vmul.f32 %v3270, 1.442695
        %v3280 = vpow.pop %v3279
        %v3281 = vmul.f32 %v3271, 1.442695
        %v3282 = vpow.pop %v3281
        %v3283 = vmul.f32 %v3272, 1.442695
        %v3284 = vpow.pop %v3283
        %v3285 = vadd.f32 %v3274, 1.0
        %v3286 = vadd.f32 %v3276, 1.0
        %v3287 = vadd.f32 %v3278, 1.0
        %v3288 = vadd.f32 %v3280, 1.0
        %v3289 = vadd.f32 %v3282, 1.0
        %v3290 = vadd.f32 %v3284, 1.0
        %v3291 = vrcp.pop %v3285
        %v3292 = vmul.f32 1.0, %v3291
        %v3293 = vrcp.pop %v3286
        %v3294 = vmul.f32 1.0, %v3293
        %v3295 = vrcp.pop %v3287
        %v3296 = vmul.f32 1.0, %v3295
        %v3297 = vrcp.pop %v3288
        %v3298 = vmul.f32 1.0, %v3297
        %v3299 = vrcp.pop %v3289
        %v3300 = vmul.f32 1.0, %v3299
        %v3301 = vrcp.pop %v3290
        %v3302 = vmul.f32 1.0, %v3301
        %v3303 = vmul.f32 %v2974, %v3292
        %v3304 = vmul.f32 %v2976, %v3294
        %v3305 = vmul.f32 %v3017, %v3296
        %v3306 = vmul.f32 %v2978, %v3298
        %v3307 = vmul.f32 %v2980, %v3300
        %v3308 = vmul.f32 %v3020, %v3302
        %v3309 = vmul.f32 %v3303, %v3218
        %v3310 = vmul.f32 %v3304, %v3220
        %v3311 = vmul.f32 %v3305, %v3261
        %v3312 = vmul.f32 %v3306, %v3222
        %v3313 = vmul.f32 %v3307, %v3224
        %v3314 = vmul.f32 %v3308, %v3264
        %v3315 = vpack.c.bf16 %v3312, %v3309
        %v3316 = vpack.c.bf16 %v3313, %v3310
        %v3317 = vpack.c.bf16 %v3314, %v3311
        %v3318 = vld [vmem:[%s9] sm:$0xf]
        %v3319 = vld [vmem:[%s9 + $0x4] sm:$0xf]
        %v3320 = vld [vmem:[%s9 + $0x8] sm:$0xf]
        %v3321 = vld [vmem:[%s9 + $0xc] sm:$0xf]
        %v3322 = vld [vmem:[%s9 + $0x10] sm:$0xf]
        %v3323 = vld [vmem:[%s9 + $0x14] sm:$0xf]
        %v3324 = vld [vmem:[%s9 + $0x18] sm:$0xf]
        %v3325 = vld [vmem:[%s9 + $0x1c] sm:$0xf]
        %v3326 = vld [vmem:[%s9 + $0x20] sm:$0xf]
        %v3327 = vld [vmem:[%s9 + $0x24] sm:$0xf]
        %v3328 = vld [vmem:[%s9 + $0x28] sm:$0xf]
        %v3329 = vld [vmem:[%s9 + $0x2c] sm:$0xf]
        %v3330 = vld [vmem:[%s9 + $0x30] sm:$0xf]
        %v3331 = vld [vmem:[%s9 + $0x34] sm:$0xf]
        %v3332 = vld [vmem:[%s9 + $0x38] sm:$0xf]
        %v3333 = vld [vmem:[%s9 + $0x3c] sm:$0xf]
        %v3334 = vld [vmem:[%s9 + $0x40] sm:$0xf]
        %v3335 = vld [vmem:[%s9 + $0x44] sm:$0xf]
        %v3336 = vld [vmem:[%s9 + $0x48] sm:$0xf]
        %v3337 = vld [vmem:[%s9 + $0x4c] sm:$0xf]
        %v3338 = vld [vmem:[%s9 + $0x50] sm:$0xf]
        %v3339 = vld [vmem:[%s9 + $0x54] sm:$0xf]
        %v3340 = vld [vmem:[%s9 + $0x58] sm:$0xf]
        %v3341 = vld [vmem:[%s9 + $0x5c] sm:$0xf]
        %v3342 = vld [vmem:[%s9 + $0x60] sm:$0xf]
        %v3343 = vld [vmem:[%s9 + $0x64] sm:$0xf]
        %v3344 = vld [vmem:[%s9 + $0x68] sm:$0xf]
        %v3345 = vld [vmem:[%s9 + $0x6c] sm:$0xf]
        %v3346 = vld [vmem:[%s9 + $0x70] sm:$0xf]
        %v3347 = vld [vmem:[%s9 + $0x74] sm:$0xf]
        %v3348 = vld [vmem:[%s9 + $0x78] sm:$0xf]
        %v3349 = vld [vmem:[%s9 + $0x7c] sm:$0xf]
        %v3350 = vld [vmem:[%s9 + $0x80] sm:$0xf]
        %v3351 = vld [vmem:[%s9 + $0x84] sm:$0xf]
        %v3352 = vld [vmem:[%s9 + $0x88] sm:$0xf]
        %v3353 = vld [vmem:[%s9 + $0x8c] sm:$0xf]
        %v3354 = vld [vmem:[%s9 + $0x90] sm:$0xf]
        %v3355 = vld [vmem:[%s9 + $0x94] sm:$0xf]
        %v3356 = vld [vmem:[%s9 + $0x98] sm:$0xf]
        %v3357 = vld [vmem:[%s9 + $0x9c] sm:$0xf]
        %v3358 = vld [vmem:[%s9 + $0xa0] sm:$0xf]
        %v3359 = vld [vmem:[%s9 + $0xa4] sm:$0xf]
        %v3360 = vld [vmem:[%s9 + $0xa8] sm:$0x7]
        %v3404 = vunpack.c.l.b16 %v3318
        %v3405 = vunpack.c.l.b16 %v3319
        %v3406 = vunpack.c.l.b16 %v3320
        %v3407 = vunpack.c.l.b16 %v3321
        %v3408 = vunpack.c.l.b16 %v3322
        %v3409 = vunpack.c.l.b16 %v3323
        %v3410 = vunpack.c.l.b16 %v3324
        %v3411 = vunpack.c.l.b16 %v3325
        %v3412 = vunpack.c.l.b16 %v3326
        %v3413 = vunpack.c.l.b16 %v3327
        %v3414 = vunpack.c.l.b16 %v3328
        %v3415 = vunpack.c.l.b16 %v3329
        %v3416 = vunpack.c.l.b16 %v3330
        %v3417 = vunpack.c.l.b16 %v3331
        %v3418 = vunpack.c.l.b16 %v3332
        %v3419 = vunpack.c.l.b16 %v3333
        %v3420 = vunpack.c.l.b16 %v3334
        %v3421 = vunpack.c.l.b16 %v3335
        %v3422 = vunpack.c.l.b16 %v3336
        %v3423 = vunpack.c.l.b16 %v3337
        %v3424 = vunpack.c.l.b16 %v3338
        %v3425 = vunpack.c.l.b16 %v3339
        %v3426 = vunpack.c.l.b16 %v3340
        %v3427 = vunpack.c.l.b16 %v3341
        %v3428 = vunpack.c.l.b16 %v3342
        %v3429 = vunpack.c.l.b16 %v3343
        %v3430 = vunpack.c.l.b16 %v3344
        %v3431 = vunpack.c.l.b16 %v3345
        %v3432 = vunpack.c.l.b16 %v3346
        %v3433 = vunpack.c.l.b16 %v3347
        %v3434 = vunpack.c.l.b16 %v3348
        %v3435 = vunpack.c.l.b16 %v3349
        %v3436 = vunpack.c.l.b16 %v3350
        %v3437 = vunpack.c.l.b16 %v3351
        %v3438 = vunpack.c.l.b16 %v3352
        %v3439 = vunpack.c.l.b16 %v3353
        %v3440 = vunpack.c.l.b16 %v3354
        %v3441 = vunpack.c.l.b16 %v3355
        %v3442 = vunpack.c.l.b16 %v3356
        %v3443 = vunpack.c.l.b16 %v3357
        %v3444 = vunpack.c.l.b16 %v3358
        %v3445 = vunpack.c.l.b16 %v3359
        %v3446 = vunpack.c.l.b16 %v3360
        %v3447 = vpack.c.b16 %v3405, %v3404
        %v3448 = vpack.c.b16 %v3407, %v3406
        %v3449 = vpack.c.b16 %v3409, %v3408
        %v3450 = vpack.c.b16 %v3411, %v3410
        %v3451 = vpack.c.b16 %v3413, %v3412
        %v3452 = vpack.c.b16 %v3415, %v3414
        %v3453 = vpack.c.b16 %v3417, %v3416
        %v3454 = vpack.c.b16 %v3419, %v3418
        %v3455 = vpack.c.b16 %v3421, %v3420
        %v3456 = vpack.c.b16 %v3423, %v3422
        %v3457 = vpack.c.b16 %v3425, %v3424
        %v3458 = vpack.c.b16 %v3427, %v3426
        %v3459 = vpack.c.b16 %v3429, %v3428
        %v3460 = vpack.c.b16 %v3431, %v3430
        %v3461 = vpack.c.b16 %v3433, %v3432
        %v3462 = vpack.c.b16 %v3435, %v3434
        %v3463 = vpack.c.b16 %v3437, %v3436
        %v3464 = vpack.c.b16 %v3439, %v3438
        %v3465 = vpack.c.b16 %v3441, %v3440
        %v3466 = vpack.c.b16 %v3443, %v3442
        %v3467 = vpack.c.b16 %v3445, %v3444
        %v3468 = vpack.c.b16 %v3446, %v3446
        %vm3490 = vcmask 695296
        %v3492 = vsel %vm3490, %v3317, 0
        %vm3494 = vcmask 1041408
        %vm3495 = vcmask 1042432
        %v3496 = vsel %vm3494, 4294967295, 65535
        %v3497 = vsel %vm3495, %v3496, 0
        %v3499 = vand.u32 %v3468, %v3497
        %3501 = vmatprep.subr.bf16.mxu0 0
        %3502 = vmatpush1.bf16.msra.mxu0 %v3447
        %3503 = vmatprep.subr.bf16.mxu0 0
        %3504 = vmatpush1.bf16.msra.mxu0 %v3448
        %3505 = vmatprep.subr.bf16.mxu0 0
        %3506 = vmatpush1.bf16.msra.mxu0 %v3449
        %3507 = vmatprep.subr.bf16.mxu0 0
        %3508 = vmatpush1.bf16.msra.mxu0 %v3450
        %3509 = vmatprep.subr.bf16.mxu0 0
        %3510 = vmatpush1.bf16.msra.mxu0 %v3451
        %3511 = vmatprep.subr.bf16.mxu0 0
        %3512 = vmatpush1.bf16.msra.mxu0 %v3452
        %3513 = vmatprep.subr.bf16.mxu0 0
        %3514 = vmatpush1.bf16.msra.mxu0 %v3453
        %3515 = vmatprep.subr.bf16.mxu0 0
        %3516 = vmatpush1.bf16.msra.mxu0 %v3454
        %3517 = vmatprep.subr.bf16.mxu0 0
        %3518 = vmatpush1.bf16.msra.mxu0 %v3455
        %3519 = vmatprep.subr.bf16.mxu0 0
        %3520 = vmatpush1.bf16.msra.mxu0 %v3456
        %3521 = vmatprep.subr.bf16.mxu0 0
        %3522 = vmatpush1.bf16.msra.mxu0 %v3457
        %3523 = vmatprep.subr.bf16.mxu0 0
        %3524 = vmatpush1.bf16.msra.mxu0 %v3458
        %3525 = vmatprep.subr.bf16.mxu0 0
        %3526 = vmatpush1.bf16.msra.mxu0 %v3459
        %3527 = vmatprep.subr.bf16.mxu0 0
        %3528 = vmatpush1.bf16.msra.mxu0 %v3460
        %3529 = vmatprep.subr.bf16.mxu0 0
        %3530 = vmatpush1.bf16.msra.mxu0 %v3461
        %3531 = vmatprep.subr.bf16.mxu0 0
        %3532 = vmatpush1.bf16.msra.mxu0 %v3462
        %3533 = vmatprep.mubr.bf16.mxu0 %v3316
        %3534 = vmatmul.mubr.bf16.gmra.mrb[0].mxu0 %v3315
        %v3535 = vpop.f32.mrb[0].mxu0
        %v3536 = vadd.f32 0.0, %v3535
        %v3537 = vpop.f32.mrb[0].mxu0
        %v3538 = vpop.f32.mrb[0].mxu0
        %v3539 = vadd.f32 0.0, %v3538
        %v3540 = vpop.f32.mrb[0].mxu0
        %3541 = vdwg.mxu0
        %3542 = vmatprep.subr.bf16.mxu0 0
        %3543 = vmatpush1.bf16.msra.mxu0 %v3463
        %3544 = vmatprep.subr.bf16.mxu0 0
        %3545 = vmatpush1.bf16.msra.mxu0 %v3464
        %3546 = vmatprep.subr.bf16.mxu0 0
        %3547 = vmatpush1.bf16.msra.mxu0 %v3465
        %3548 = vmatprep.subr.bf16.mxu0 0
        %3549 = vmatpush1.bf16.msra.mxu0 %v3466
        %3550 = vmatprep.subr.bf16.mxu0 0
        %3551 = vmatpush1.bf16.msra.mxu0 %v3467
        %3552 = vmatprep.subr.bf16.mxu0 0
        %3553 = vmatpush1.bf16.msra.mxu0 %v3499
        %3554 = vmatprep.subr.bf16.mxu0 0
        %3555 = vmatpush1.bf16.msra.mxu0 0
        %3556 = vmatprep.subr.bf16.mxu0 0
        %3557 = vmatpush1.bf16.msra.mxu0 0
        %3558 = vmatprep.subr.bf16.mxu0 0
        %3559 = vmatpush1.bf16.msra.mxu0 0
        %3560 = vmatprep.subr.bf16.mxu0 0
        %3561 = vmatpush1.bf16.msra.mxu0 0
        %3562 = vmatprep.subr.bf16.mxu0 0
        %3563 = vmatpush1.bf16.msra.mxu0 0
        %3564 = vmatprep.subr.bf16.mxu0 0
        %3565 = vmatpush1.bf16.msra.mxu0 0
        %3566 = vmatprep.subr.bf16.mxu0 0
        %3567 = vmatpush1.bf16.msra.mxu0 0
        %3568 = vmatprep.subr.bf16.mxu0 0
        %3569 = vmatpush1.bf16.msra.mxu0 0
        %3570 = vmatprep.subr.bf16.mxu0 0
        %3571 = vmatpush1.bf16.msra.mxu0 0
        %3572 = vmatprep.subr.bf16.mxu0 0
        %3573 = vmatpush1.bf16.msra.mxu0 0
        %3574 = vmatprep.mubr.bf16.mxu0 0
        %3575 = vmatmul.mubr.bf16.gmra.mrb[0].mxu0 %v3492
        %v3576 = vpop.f32.mrb[0].mxu0
        %v3577 = vadd.f32 %v3536, %v3576
        %v3578 = vpop.f32.mrb[0].mxu0
        %v3579 = vpop.f32.mrb[0].mxu0
        %v3580 = vadd.f32 %v3539, %v3579
        %v3581 = vpop.f32.mrb[0].mxu0
        %3582 = vdwg.mxu0
        %v3583 = vadd.f32 %v2753, %v3577
        %v3584 = vadd.f32 %v2754, %v3580
        %3585 = vst [vmem:[%s352] sm:$0xff] %v3583
        %3586 = vst [vmem:[%s352 + $0x8] sm:$0xff] %v3584
        %s3587 = sand.u32 %s247, 1
        %s3588 = scalar_lea.sflag [#allocation3], %s3587
        %s3589 = sand.u32 %s247, 1
        %s3590 = smul.addr %s3589, 16
        %s3591 = scalar_lea.vmem [#allocation2], %s3590
        // Predicated region
        $region61: #{block_forward.1} parent=59 // pred_check
          %p3592 = pneg %p257
        $region62: #{block_forward.1} parent=59 // pred_check_branch
          %3594 = sbr.rel (%p3592) target = $region64
        $region63: #{block_forward.1} parent=59 // pred_region
          %s3596 = ssub.s32 256, 256
          %3597 = vsyncadd %s3588, %s3596
          %s3598 = smul.addr %s24, 2
          %s3599 = smul.addr %s3598, 128
          %s3600 = scalar_lea.hbm %s10, %s3599
          %s3601 = sshll.u32 %s3591, 4
          %s3602 = int_to_ptr.vmem [resolvable:$true] %s3601
          %3607 = dma.vmem_to_hbm [thread:$0]  %s3602, 256, %s3600, %s3588, 128, 128, 8
        $region64: #{block_forward.1} parent=59 // pred_fallthru
          _
      $region60: #{block_forward.1} parent=5 // pred_fallthru
        _
      %p3608 = scmp.le.s32.totalorder 2, %s19
      // Predicated region
      $region65: #{block_forward.1} parent=5 // pred_check
        %p3609 = pneg %p3608
      $region66: #{block_forward.1} parent=5 // pred_check_branch
        %3611 = sbr.rel (%p3609) target = $region68
      $region67: #{block_forward.1} parent=5 // pred_region
        %s3612 = ssub.s32 %s19, 2
        // Predicated region
        $region69: #{block_forward.1} parent=67 // pred_check
          %p3613 = pneg %p263
        $region70: #{block_forward.1} parent=67 // pred_check_branch
          %3615 = sbr.rel (%p3613) target = $region72
        $region71: #{block_forward.1} parent=67 // pred_region
          %s3616 = sand.u32 %s248, 1
          %s3617 = scalar_lea.sflag [#allocation3], %s3616
          %s3618 = sand.u32 %s248, 1
          %s3619 = smul.addr %s3618, 16
          %s3620 = scalar_lea.vmem [#allocation2], %s3619
          %3621 = dma.done %s3617, 256
        $region72: #{block_forward.1} parent=67 // pred_fallthru
          _
      $region68: #{block_forward.1} parent=5 // pred_fallthru
        _
    $region6: #{block_forward.1} parent=1 // loop_footer
      %s23 = sadd.s32 1, %s19
    $region7: #{block_forward.1} parent=1 // loop_footer_branch
      %18 = sbr.rel target = $region3
    $region8: #{block_forward.1} parent=1 // loop_exit
      _
    %3622 = vsyncpa [#allocation3], 1
    %s3623 = scalar_lea.sflag [#allocation3], 1
    %3624 = vsyncpa %s3623, 1

</llo_original>
